<compile_context>
chip_gen: v7x
topology: tpu7x:2x2x1
jax: 0.10.0
libtpu: 0.0.40
codegen_flags: <defaults>
</compile_context>

<pallas_src>
import jax
import jax.numpy as jnp
from jax import lax
from jax.experimental import pallas as pl
from jax.experimental.pallas import tpu as pltpu

EPS = 1e-5
LANE = 128


def _round_up(x, m):
    return (x + m - 1) // m * m


def _make_block_kernel(taps, Ho, Wo, Cin_p, Cout_p, has_down):
    """taps: 9 static (row_offset, col_offset) into the stacked phase image block."""

    def kernel(*refs):
        if has_down:
            x_ref, w_ref, wsc_ref, sb_ref, out_ref = refs
        else:
            x_ref, w_ref, sb_ref, out_ref = refs

        def tap_slab(t):
            r0, c0 = taps[t]
            sl = x_ref[0, r0:r0 + Ho, c0:c0 + Wo, :]          # (Ho, Wo, Cin_p) bf16
            # NOTE: Wo is a multiple of 8 for all CIFAR-ResNet layer shapes (32/16/8).
            return sl.reshape(Ho * Wo, Cin_p)

        slabs = [tap_slab(t) for t in range(9)]

        # main path: 3x3 conv as 9 accumulated bf16 matmuls, f32 accumulation on the MXU
        acc = jnp.dot(slabs[0], w_ref[0], preferred_element_type=jnp.float32)
        for t in range(1, 9):
            acc = acc + jnp.dot(slabs[t], w_ref[t],
                                preferred_element_type=jnp.float32)

        # BN + gate already folded: sb[0] = (1-p)*scale1, sb[1] = (1-p)*shift1
        main = jnp.maximum(acc * sb_ref[0:1, :] + sb_ref[1:2, :], 0.0)

        # shortcut input == center tap (dy = dx = 1) of the same block -> no extra DMA
        center = slabs[4]
        if has_down:
            sc = jnp.dot(center, wsc_ref[...], preferred_element_type=jnp.float32)
        else:
            sc = center.astype(jnp.float32)                   # identity shortcut
        # sb[2]/sb[3]: p*scale_sc / p*shift_sc   (identity case: p / 0)
        out = jnp.maximum(main + sc * sb_ref[2:3, :] + sb_ref[3:4, :], 0.0)
        out_ref[0] = out.astype(out_ref.dtype)

    return kernel


def basic_block_forward(x_nchw, params, in_planes, planes, stride):
    N, C, H, W = x_nchw.shape
    assert C == in_planes and stride in (1, 2)
    has_down = (stride != 1) or (in_planes != planes)

    Cin_p = _round_up(in_planes, LANE)
    Cout_p = _round_up(planes, LANE)

    # NCHW -> NHWC, pad channels to a lane multiple, cast to bf16 for the MXU
    x = jnp.transpose(x_nchw, (0, 2, 3, 1)).astype(jnp.float32)
    x = jnp.pad(x, ((0, 0), (0, 0), (0, 0), (0, Cin_p - in_planes)))
    x = x.astype(jnp.bfloat16)

    Ho = (H - 1) // stride + 1
    Wo = (W - 1) // stride + 1

    if stride == 1:
        # single zero-padded image; tap (dy,dx) -> rows dy:dy+Ho, cols dx:dx+Wo
        xph = jnp.pad(x, ((0, 0), (1, 1), (1, 1), (0, 0)))
        Hpp, Wpp = H + 2, W + 2
        taps = [(dy, dx) for dy in range(3) for dx in range(3)]
    else:
        # stride-2 polyphase split: 4 phases stacked along rows — total HBM bytes == one
        # padded copy of the activation (NOT 9x like im2col).
        Hpp = -(-(H + 2) // 2)
        Wpp = -(-(W + 2) // 2)
        xp = jnp.pad(x, ((0, 0), (1, 2 * Hpp - H - 1), (1, 2 * Wpp - W - 1), (0, 0)))
        phases = [xp[:, py::2, px::2, :] for py in (0, 1) for px in (0, 1)]
        xph = jnp.concatenate(phases, axis=1)                  # (N, 4*Hpp, Wpp, Cin_p)
        taps = [((2 * (dy % 2) + (dx % 2)) * Hpp + dy // 2, dx // 2)
                for dy in range(3) for dx in range(3)]
    R = xph.shape[1]

    # fold BN (running stats) and the scalar gate into per-channel scale + shift
    p = jax.nn.sigmoid(params['gate_w'].reshape(()) * 1.0 + params['gate_b'].reshape(()))
    s1 = params['g1'] / jnp.sqrt(params['v1'] + EPS)
    b1 = params['b1'] - params['m1'] * s1
    s1p = (1.0 - p) * s1
    b1p = (1.0 - p) * b1
    if has_down:
        ssc = params['gsc'] / jnp.sqrt(params['vsc'] + EPS)
        bsc = params['bsc'] - params['msc'] * ssc
        scp = p * ssc
        bcp = p * bsc
    else:
        scp = p * jnp.ones((planes,), jnp.float32)
        bcp = jnp.zeros((planes,), jnp.float32)
    sb = jnp.stack([s1p, b1p, scp, bcp], axis=0)               # (4, Cout)
    sb = jnp.pad(sb, ((0, 0), (0, Cout_p - planes))).astype(jnp.float32)

    # conv1 weight (Cout,Cin,3,3) -> 9 tap matrices (Cin_p, Cout_p), bf16
    w = jnp.transpose(params['w1'], (2, 3, 1, 0)).reshape(9, in_planes, planes)
    w = jnp.pad(w, ((0, 0), (0, Cin_p - in_planes), (0, Cout_p - planes)))
    w = w.astype(jnp.bfloat16)

    inputs = [xph, w]
    in_specs = [
        pl.BlockSpec((1, R, Wpp, Cin_p), lambda n: (n, 0, 0, 0)),
        pl.BlockSpec((9, Cin_p, Cout_p), lambda n: (0, 0, 0)),
    ]
    if has_down:
        wsc = jnp.transpose(params['wsc'], (2, 3, 1, 0)).reshape(in_planes, planes)
        wsc = jnp.pad(wsc, ((0, Cin_p - in_planes), (0, Cout_p - planes)))
        wsc = wsc.astype(jnp.bfloat16)
        inputs.append(wsc)
        in_specs.append(pl.BlockSpec((Cin_p, Cout_p), lambda n: (0, 0)))
    inputs.append(sb)
    in_specs.append(pl.BlockSpec((4, Cout_p), lambda n: (0, 0)))

    kernel = _make_block_kernel(taps, Ho, Wo, Cin_p, Cout_p, has_down)

    flops = 2 * N * Ho * Wo * Cin_p * Cout_p * (9 + (1 if has_down else 0))
    bytes_accessed = (xph.size * 2 + w.size * 2 + sb.size * 4
                      + N * Ho * Wo * Cout_p * 4
                      + (Cin_p * Cout_p * 2 if has_down else 0))

    out_flat = pl.pallas_call(
        kernel,
        out_shape=jax.ShapeDtypeStruct((N, Ho * Wo, Cout_p), jnp.float32),
        grid=(N,),
        in_specs=in_specs,
        out_specs=pl.BlockSpec((1, Ho * Wo, Cout_p), lambda n: (n, 0, 0)),
        compiler_params=pltpu.CompilerParams(
            dimension_semantics=("parallel",),
            vmem_limit_bytes=48 * 1024 * 1024,     # safe on v5e/v6e (128 MiB) and v7x (64 MiB)
        ),
        cost_estimate=pl.CostEstimate(
            flops=int(flops), transcendentals=0, bytes_accessed=int(bytes_accessed)),
    )(*inputs)

    out = out_flat[:, :, :planes].reshape(N, Ho, Wo, planes)
    return jnp.transpose(out, (0, 3, 1, 2))                    # back to NCHW


def init_params(key, in_planes, planes, stride):
    ks = jax.random.split(key, 10)
    prm = {
        'w1': 0.1 * jax.random.normal(ks[0], (planes, in_planes, 3, 3), jnp.float32),
        'g1': 1.0 + 0.1 * jax.random.normal(ks[1], (planes,), jnp.float32),
        'b1': 0.1 * jax.random.normal(ks[2], (planes,), jnp.float32),
        'm1': 0.1 * jax.random.normal(ks[3], (planes,), jnp.float32),
        'v1': jnp.abs(jax.random.normal(ks[4], (planes,), jnp.float32)) + 0.5,
        # _Gate fc init: weight (and bias) zero -> p = sigmoid(0) = 0.5
        'gate_w': jnp.zeros((1, 1), jnp.float32),
        'gate_b': jnp.zeros((1,), jnp.float32),
    }
    if stride != 1 or in_planes != planes:
        prm['wsc'] = 0.1 * jax.random.normal(ks[5], (planes, in_planes, 1, 1), jnp.float32)
        prm['gsc'] = 1.0 + 0.1 * jax.random.normal(ks[6], (planes,), jnp.float32)
        prm['bsc'] = 0.1 * jax.random.normal(ks[7], (planes,), jnp.float32)
        prm['msc'] = 0.1 * jax.random.normal(ks[8], (planes,), jnp.float32)
        prm['vsc'] = jnp.abs(jax.random.normal(ks[9], (planes,), jnp.float32)) + 0.5
    return prm


def ref_forward(x_nchw, params, in_planes, planes, stride):
    """Pure-JAX (XLA conv) reference for correctness checking."""
    def bn(y, g, b, m, v):
        return (g[None, :, None, None] * (y - m[None, :, None, None])
                / jnp.sqrt(v[None, :, None, None] + EPS) + b[None, :, None, None])

    conv = lax.conv_general_dilated(
        x_nchw, params['w1'], (stride, stride), ((1, 1), (1, 1)),
        dimension_numbers=('NCHW', 'OIHW', 'NCHW'))
    main = jax.nn.relu(bn(conv, params['g1'], params['b1'], params['m1'], params['v1']))
    p = jax.nn.sigmoid(params['gate_w'][0, 0] * 1.0 + params['gate_b'][0])
    if stride != 1 or in_planes != planes:
        sc = lax.conv_general_dilated(
            x_nchw, params['wsc'], (stride, stride), ((0, 0), (0, 0)),
            dimension_numbers=('NCHW', 'OIHW', 'NCHW'))
        sc = bn(sc, params['gsc'], params['bsc'], params['msc'], params['vsc'])
    else:
        sc = x_nchw
    return jax.nn.relu(main * (1.0 - p) + sc * p)


if __name__ == "__main__":
    key = jax.random.PRNGKey(0)
    kx, kp1, kp2 = jax.random.split(key, 3)

    # Case 1: identity shortcut (stride=1, in_planes == planes)
    x1 = jax.random.normal(kx, (2, 4, 16, 16), jnp.float32)
    prm1 = init_params(kp1, 4, 4, 1)
    out1 = jax.block_until_ready(basic_block_forward(x1, prm1, 4, 4, 1))
    ref1 = ref_forward(x1, prm1, 4, 4, 1)
    assert out1.shape == (2, 4, 16, 16)
    assert float(jnp.max(jnp.abs(out1 - ref1))) < 5e-2       # bf16-matmul tolerance

    # Case 2: conv1x1 + bn shortcut (stride=2, planes != in_planes)
    x2 = jax.random.normal(kx, (2, 4, 16, 16), jnp.float32)
    prm2 = init_params(kp2, 4, 8, 2)
    out2 = jax.block_until_ready(basic_block_forward(x2, prm2, 4, 8, 2))
    ref2 = ref_forward(x2, prm2, 4, 8, 2)
    assert out2.shape == (2, 8, 8, 8)
    assert float(jnp.max(jnp.abs(out2 - ref2))) < 5e-2

    print("KERNEL_OK")
</pallas_src>

<mosaic_0001>
module attributes {stable_mosaic.version = 11 : i64} {
  func.func @kernel(%arg0: i32, %arg1: memref<1x18x18x128xbf16, #tpu.memory_space<vmem>>, %arg2: memref<9x128x128xbf16, #tpu.memory_space<vmem>>, %arg3: memref<4x128xf32, #tpu.memory_space<vmem>>, %arg4: memref<1x256x128xf32, #tpu.memory_space<vmem>>) attributes {dimension_semantics = [#tpu.dimension_semantics<parallel>], iteration_bounds = array<i64: 2>, scalar_prefetch = 0 : i64, scratch_operands = 0 : i64, tpu.core_type = #tpu.core_type<tc>, window_params = [{transform_indices = @transform_0, window_bounds = array<i64: 1, 18, 18, 128>}, {pipeline_mode = #tpu.pipeline_mode<synchronous>, transform_indices = @transform_1, window_bounds = array<i64: 9, 128, 128>}, {pipeline_mode = #tpu.pipeline_mode<synchronous>, transform_indices = @transform_2, window_bounds = array<i64: 4, 128>}, {transform_indices = @transform_3, window_bounds = array<i64: 1, 256, 128>}]} {
    %c0 = arith.constant 0 : index
    %c0_0 = arith.constant 0 : index
    %c0_1 = arith.constant 0 : index
    %c0_2 = arith.constant 0 : index
    %0 = vector.load %arg1[%c0, %c0_0, %c0_1, %c0_2] : memref<1x18x18x128xbf16, #tpu.memory_space<vmem>>, vector<1x16x16x128xbf16>
    %1 = vector.shape_cast %0 : vector<1x16x16x128xbf16> to vector<16x16x128xbf16>
    %2 = vector.shape_cast %1 : vector<16x16x128xbf16> to vector<256x128xbf16>
    %c0_3 = arith.constant 0 : index
    %c0_4 = arith.constant 0 : index
    %c1 = arith.constant 1 : index
    %c0_5 = arith.constant 0 : index
    %3 = vector.load %arg1[%c0_3, %c0_4, %c1, %c0_5] : memref<1x18x18x128xbf16, #tpu.memory_space<vmem>>, vector<1x16x16x128xbf16>
    %4 = vector.shape_cast %3 : vector<1x16x16x128xbf16> to vector<16x16x128xbf16>
    %5 = vector.shape_cast %4 : vector<16x16x128xbf16> to vector<256x128xbf16>
    %c0_6 = arith.constant 0 : index
    %c0_7 = arith.constant 0 : index
    %c2 = arith.constant 2 : index
    %c0_8 = arith.constant 0 : index
    %6 = vector.load %arg1[%c0_6, %c0_7, %c2, %c0_8] : memref<1x18x18x128xbf16, #tpu.memory_space<vmem>>, vector<1x16x16x128xbf16>
    %7 = vector.shape_cast %6 : vector<1x16x16x128xbf16> to vector<16x16x128xbf16>
    %8 = vector.shape_cast %7 : vector<16x16x128xbf16> to vector<256x128xbf16>
    %c0_9 = arith.constant 0 : index
    %c1_10 = arith.constant 1 : index
    %c0_11 = arith.constant 0 : index
    %c0_12 = arith.constant 0 : index
    %9 = vector.load %arg1[%c0_9, %c1_10, %c0_11, %c0_12] : memref<1x18x18x128xbf16, #tpu.memory_space<vmem>>, vector<1x16x16x128xbf16>
    %10 = vector.shape_cast %9 : vector<1x16x16x128xbf16> to vector<16x16x128xbf16>
    %11 = vector.shape_cast %10 : vector<16x16x128xbf16> to vector<256x128xbf16>
    %c0_13 = arith.constant 0 : index
    %c1_14 = arith.constant 1 : index
    %c1_15 = arith.constant 1 : index
    %c0_16 = arith.constant 0 : index
    %12 = vector.load %arg1[%c0_13, %c1_14, %c1_15, %c0_16] : memref<1x18x18x128xbf16, #tpu.memory_space<vmem>>, vector<1x16x16x128xbf16>
    %13 = vector.shape_cast %12 : vector<1x16x16x128xbf16> to vector<16x16x128xbf16>
    %14 = vector.shape_cast %13 : vector<16x16x128xbf16> to vector<256x128xbf16>
    %c0_17 = arith.constant 0 : index
    %c1_18 = arith.constant 1 : index
    %c2_19 = arith.constant 2 : index
    %c0_20 = arith.constant 0 : index
    %15 = vector.load %arg1[%c0_17, %c1_18, %c2_19, %c0_20] : memref<1x18x18x128xbf16, #tpu.memory_space<vmem>>, vector<1x16x16x128xbf16>
    %16 = vector.shape_cast %15 : vector<1x16x16x128xbf16> to vector<16x16x128xbf16>
    %17 = vector.shape_cast %16 : vector<16x16x128xbf16> to vector<256x128xbf16>
    %c0_21 = arith.constant 0 : index
    %c2_22 = arith.constant 2 : index
    %c0_23 = arith.constant 0 : index
    %c0_24 = arith.constant 0 : index
    %18 = vector.load %arg1[%c0_21, %c2_22, %c0_23, %c0_24] : memref<1x18x18x128xbf16, #tpu.memory_space<vmem>>, vector<1x16x16x128xbf16>
    %19 = vector.shape_cast %18 : vector<1x16x16x128xbf16> to vector<16x16x128xbf16>
    %20 = vector.shape_cast %19 : vector<16x16x128xbf16> to vector<256x128xbf16>
    %c0_25 = arith.constant 0 : index
    %c2_26 = arith.constant 2 : index
    %c1_27 = arith.constant 1 : index
    %c0_28 = arith.constant 0 : index
    %21 = vector.load %arg1[%c0_25, %c2_26, %c1_27, %c0_28] : memref<1x18x18x128xbf16, #tpu.memory_space<vmem>>, vector<1x16x16x128xbf16>
    %22 = vector.shape_cast %21 : vector<1x16x16x128xbf16> to vector<16x16x128xbf16>
    %23 = vector.shape_cast %22 : vector<16x16x128xbf16> to vector<256x128xbf16>
    %c0_29 = arith.constant 0 : index
    %c2_30 = arith.constant 2 : index
    %c2_31 = arith.constant 2 : index
    %c0_32 = arith.constant 0 : index
    %24 = vector.load %arg1[%c0_29, %c2_30, %c2_31, %c0_32] : memref<1x18x18x128xbf16, #tpu.memory_space<vmem>>, vector<1x16x16x128xbf16>
    %25 = vector.shape_cast %24 : vector<1x16x16x128xbf16> to vector<16x16x128xbf16>
    %26 = vector.shape_cast %25 : vector<16x16x128xbf16> to vector<256x128xbf16>
    %c0_33 = arith.constant 0 : index
    %c0_34 = arith.constant 0 : index
    %c0_35 = arith.constant 0 : index
    %27 = vector.load %arg2[%c0_33, %c0_34, %c0_35] : memref<9x128x128xbf16, #tpu.memory_space<vmem>>, vector<1x128x128xbf16>
    %28 = vector.shape_cast %27 : vector<1x128x128xbf16> to vector<128x128xbf16>
    %cst = arith.constant dense<0.000000e+00> : vector<256x128xf32>
    %29 = tpu.matmul %2, %28, %cst {dimension_numbers = #tpu.dot_dimension_numbers<[1], [0], [0], [1], [0, 0, 1, 1], [], []>} : vector<256x128xbf16>, vector<128x128xbf16>, vector<256x128xf32> -> vector<256x128xf32>
    %c1_36 = arith.constant 1 : index
    %c0_37 = arith.constant 0 : index
    %c0_38 = arith.constant 0 : index
    %30 = vector.load %arg2[%c1_36, %c0_37, %c0_38] : memref<9x128x128xbf16, #tpu.memory_space<vmem>>, vector<1x128x128xbf16>
    %31 = vector.shape_cast %30 : vector<1x128x128xbf16> to vector<128x128xbf16>
    %cst_39 = arith.constant dense<0.000000e+00> : vector<256x128xf32>
    %32 = tpu.matmul %5, %31, %cst_39 {dimension_numbers = #tpu.dot_dimension_numbers<[1], [0], [0], [1], [0, 0, 1, 1], [], []>} : vector<256x128xbf16>, vector<128x128xbf16>, vector<256x128xf32> -> vector<256x128xf32>
    %33 = arith.addf %29, %32 : vector<256x128xf32>
    %c2_40 = arith.constant 2 : index
    %c0_41 = arith.constant 0 : index
    %c0_42 = arith.constant 0 : index
    %34 = vector.load %arg2[%c2_40, %c0_41, %c0_42] : memref<9x128x128xbf16, #tpu.memory_space<vmem>>, vector<1x128x128xbf16>
    %35 = vector.shape_cast %34 : vector<1x128x128xbf16> to vector<128x128xbf16>
    %cst_43 = arith.constant dense<0.000000e+00> : vector<256x128xf32>
    %36 = tpu.matmul %8, %35, %cst_43 {dimension_numbers = #tpu.dot_dimension_numbers<[1], [0], [0], [1], [0, 0, 1, 1], [], []>} : vector<256x128xbf16>, vector<128x128xbf16>, vector<256x128xf32> -> vector<256x128xf32>
    %37 = arith.addf %33, %36 : vector<256x128xf32>
    %c3 = arith.constant 3 : index
    %c0_44 = arith.constant 0 : index
    %c0_45 = arith.constant 0 : index
    %38 = vector.load %arg2[%c3, %c0_44, %c0_45] : memref<9x128x128xbf16, #tpu.memory_space<vmem>>, vector<1x128x128xbf16>
    %39 = vector.shape_cast %38 : vector<1x128x128xbf16> to vector<128x128xbf16>
    %cst_46 = arith.constant dense<0.000000e+00> : vector<256x128xf32>
    %40 = tpu.matmul %11, %39, %cst_46 {dimension_numbers = #tpu.dot_dimension_numbers<[1], [0], [0], [1], [0, 0, 1, 1], [], []>} : vector<256x128xbf16>, vector<128x128xbf16>, vector<256x128xf32> -> vector<256x128xf32>
    %41 = arith.addf %37, %40 : vector<256x128xf32>
    %c4 = arith.constant 4 : index
    %c0_47 = arith.constant 0 : index
    %c0_48 = arith.constant 0 : index
    %42 = vector.load %arg2[%c4, %c0_47, %c0_48] : memref<9x128x128xbf16, #tpu.memory_space<vmem>>, vector<1x128x128xbf16>
    %43 = vector.shape_cast %42 : vector<1x128x128xbf16> to vector<128x128xbf16>
    %cst_49 = arith.constant dense<0.000000e+00> : vector<256x128xf32>
    %44 = tpu.matmul %14, %43, %cst_49 {dimension_numbers = #tpu.dot_dimension_numbers<[1], [0], [0], [1], [0, 0, 1, 1], [], []>} : vector<256x128xbf16>, vector<128x128xbf16>, vector<256x128xf32> -> vector<256x128xf32>
    %45 = arith.addf %41, %44 : vector<256x128xf32>
    %c5 = arith.constant 5 : index
    %c0_50 = arith.constant 0 : index
    %c0_51 = arith.constant 0 : index
    %46 = vector.load %arg2[%c5, %c0_50, %c0_51] : memref<9x128x128xbf16, #tpu.memory_space<vmem>>, vector<1x128x128xbf16>
    %47 = vector.shape_cast %46 : vector<1x128x128xbf16> to vector<128x128xbf16>
    %cst_52 = arith.constant dense<0.000000e+00> : vector<256x128xf32>
    %48 = tpu.matmul %17, %47, %cst_52 {dimension_numbers = #tpu.dot_dimension_numbers<[1], [0], [0], [1], [0, 0, 1, 1], [], []>} : vector<256x128xbf16>, vector<128x128xbf16>, vector<256x128xf32> -> vector<256x128xf32>
    %49 = arith.addf %45, %48 : vector<256x128xf32>
    %c6 = arith.constant 6 : index
    %c0_53 = arith.constant 0 : index
    %c0_54 = arith.constant 0 : index
    %50 = vector.load %arg2[%c6, %c0_53, %c0_54] : memref<9x128x128xbf16, #tpu.memory_space<vmem>>, vector<1x128x128xbf16>
    %51 = vector.shape_cast %50 : vector<1x128x128xbf16> to vector<128x128xbf16>
    %cst_55 = arith.constant dense<0.000000e+00> : vector<256x128xf32>
    %52 = tpu.matmul %20, %51, %cst_55 {dimension_numbers = #tpu.dot_dimension_numbers<[1], [0], [0], [1], [0, 0, 1, 1], [], []>} : vector<256x128xbf16>, vector<128x128xbf16>, vector<256x128xf32> -> vector<256x128xf32>
    %53 = arith.addf %49, %52 : vector<256x128xf32>
    %c7 = arith.constant 7 : index
    %c0_56 = arith.constant 0 : index
    %c0_57 = arith.constant 0 : index
    %54 = vector.load %arg2[%c7, %c0_56, %c0_57] : memref<9x128x128xbf16, #tpu.memory_space<vmem>>, vector<1x128x128xbf16>
    %55 = vector.shape_cast %54 : vector<1x128x128xbf16> to vector<128x128xbf16>
    %cst_58 = arith.constant dense<0.000000e+00> : vector<256x128xf32>
    %56 = tpu.matmul %23, %55, %cst_58 {dimension_numbers = #tpu.dot_dimension_numbers<[1], [0], [0], [1], [0, 0, 1, 1], [], []>} : vector<256x128xbf16>, vector<128x128xbf16>, vector<256x128xf32> -> vector<256x128xf32>
    %57 = arith.addf %53, %56 : vector<256x128xf32>
    %c8 = arith.constant 8 : index
    %c0_59 = arith.constant 0 : index
    %c0_60 = arith.constant 0 : index
    %58 = vector.load %arg2[%c8, %c0_59, %c0_60] : memref<9x128x128xbf16, #tpu.memory_space<vmem>>, vector<1x128x128xbf16>
    %59 = vector.shape_cast %58 : vector<1x128x128xbf16> to vector<128x128xbf16>
    %cst_61 = arith.constant dense<0.000000e+00> : vector<256x128xf32>
    %60 = tpu.matmul %26, %59, %cst_61 {dimension_numbers = #tpu.dot_dimension_numbers<[1], [0], [0], [1], [0, 0, 1, 1], [], []>} : vector<256x128xbf16>, vector<128x128xbf16>, vector<256x128xf32> -> vector<256x128xf32>
    %61 = arith.addf %57, %60 : vector<256x128xf32>
    %c0_62 = arith.constant 0 : index
    %c0_63 = arith.constant 0 : index
    %62 = vector.load %arg3[%c0_62, %c0_63] : memref<4x128xf32, #tpu.memory_space<vmem>>, vector<1x128xf32>
    %63 = vector.broadcast %62 : vector<1x128xf32> to vector<256x128xf32>
    %64 = arith.mulf %61, %63 : vector<256x128xf32>
    %c1_64 = arith.constant 1 : index
    %c0_65 = arith.constant 0 : index
    %65 = vector.load %arg3[%c1_64, %c0_65] : memref<4x128xf32, #tpu.memory_space<vmem>>, vector<1x128xf32>
    %66 = vector.broadcast %65 : vector<1x128xf32> to vector<256x128xf32>
    %67 = arith.addf %64, %66 : vector<256x128xf32>
    %cst_66 = arith.constant 0.000000e+00 : f32
    %68 = vector.broadcast %cst_66 : f32 to vector<256x128xf32>
    %69 = arith.maximumf %67, %68 : vector<256x128xf32>
    %70 = arith.extf %14 : vector<256x128xbf16> to vector<256x128xf32>
    %c2_67 = arith.constant 2 : index
    %c0_68 = arith.constant 0 : index
    %71 = vector.load %arg3[%c2_67, %c0_68] : memref<4x128xf32, #tpu.memory_space<vmem>>, vector<1x128xf32>
    %72 = vector.broadcast %71 : vector<1x128xf32> to vector<256x128xf32>
    %73 = arith.mulf %70, %72 : vector<256x128xf32>
    %74 = arith.addf %69, %73 : vector<256x128xf32>
    %c3_69 = arith.constant 3 : index
    %c0_70 = arith.constant 0 : index
    %75 = vector.load %arg3[%c3_69, %c0_70] : memref<4x128xf32, #tpu.memory_space<vmem>>, vector<1x128xf32>
    %76 = vector.broadcast %75 : vector<1x128xf32> to vector<256x128xf32>
    %77 = arith.addf %74, %76 : vector<256x128xf32>
    %cst_71 = arith.constant 0.000000e+00 : f32
    %78 = vector.broadcast %cst_71 : f32 to vector<256x128xf32>
    %79 = arith.maximumf %77, %78 : vector<256x128xf32>
    %c0_72 = arith.constant 0 : index
    %c0_73 = arith.constant 0 : index
    %c0_74 = arith.constant 0 : index
    %80 = vector.load %arg4[%c0_72, %c0_73, %c0_74] : memref<1x256x128xf32, #tpu.memory_space<vmem>>, vector<1x256x128xf32>
    %81 = vector.shape_cast %80 : vector<1x256x128xf32> to vector<256x128xf32>
    %82 = vector.shape_cast %79 : vector<256x128xf32> to vector<1x256x128xf32>
    tpu.vector_store %arg4[%c0_72, %c0_73, %c0_74], %82 {strides = array<i32>} : memref<1x256x128xf32, #tpu.memory_space<vmem>>, vector<1x256x128xf32>,
    return
  }
  func.func @transform_0(%arg0: i32) -> (i32, i32, i32, i32) {
    %c0_i32 = arith.constant 0 : i32
    %c0_i32_0 = arith.constant 0 : i32
    %c0_i32_1 = arith.constant 0 : i32
    %c0_i32_2 = arith.constant 0 : i32
    return %arg0, %c0_i32, %c0_i32_0, %c0_i32_1 : i32, i32, i32, i32
  }
  func.func @transform_1(%arg0: i32) -> (i32, i32, i32) {
    %c0_i32 = arith.constant 0 : i32
    %c0_i32_0 = arith.constant 0 : i32
    %c0_i32_1 = arith.constant 0 : i32
    %c0_i32_2 = arith.constant 0 : i32
    return %c0_i32, %c0_i32_0, %c0_i32_1 : i32, i32, i32
  }
  func.func @transform_2(%arg0: i32) -> (i32, i32) {
    %c0_i32 = arith.constant 0 : i32
    %c0_i32_0 = arith.constant 0 : i32
    %c0_i32_1 = arith.constant 0 : i32
    return %c0_i32, %c0_i32_0 : i32, i32
  }
  func.func @transform_3(%arg0: i32) -> (i32, i32, i32) {
    %c0_i32 = arith.constant 0 : i32
    %c0_i32_0 = arith.constant 0 : i32
    %c0_i32_1 = arith.constant 0 : i32
    return %arg0, %c0_i32, %c0_i32_0 : i32, i32, i32
  }
}

</mosaic_0001>

<llo_original>
// kernel: tpu_custom_call.1
$region0: #{tpu_custom_call.1}
  #allocation0 [shape = 'u32[]', space=smem, size = 0x4, offset = 0x4, fixed_abs, tag = 'smem constant byte address 0x4 - core index']
  #allocation1 [shape = 'u32[144,128]{1,0:T(1,128)}', space=vmem, size = 0x12000, scoped, tag = 'internal scratch']
  %s0 = inlined_call_operand.vmem [shape: bf16[2,18,18,128], index: 0, kind: input, shape index: {}]
  %s1 = inlined_call_operand.vmem [shape: bf16[9,128,128], index: 1, kind: input, shape index: {}]
  %s2 = inlined_call_operand.vmem [shape: f32[4,128], index: 2, kind: input, shape index: {}]
  %s3 = inlined_call_operand.hbm [shape: f32[2,256,128], index: 3, kind: output, shape index: {}]
  %s4 = sld [smem:[#allocation0]]
  $region45: #{tpu_custom_call.1} parent=0
    _
  %s6 = ssub.s32 1, %s4
  %s7 = scalar_select 0, %s6, %s4
  $region1: #{tpu_custom_call.1} parent=0
    #allocation2 [shape = 'u8[262144]{0}', space=vmem, size = 0x40000, scoped, tag = 'output window, operand 0']
    #allocation3 [shape = 's32[2]{0}', space=sflag, size = 0x8, scoped, tag = 'scoped memory for tpu_custom_call.1']
    %8 = vsyncpa [#allocation3], 0
    %s9 = scalar_lea.sflag [#allocation3], 1
    %10 = vsyncpa %s9, 0
    loop: start=0, step=1, limit=4
    $region2: #{tpu_custom_call.1} parent=1 // loop_pre_header
      _
    $region3: #{tpu_custom_call.1} parent=1 // loop_header
      %s12 = sphi 0, %s16
      %p13 = scmp.ge.s32.totalorder %s12, 4
      %s22 = sphi 0, %s24
      %s25 = sphi 0, %s22
      %s26 = sphi 0, %s25
      %s42 = sphi 0, %s26
      %s46 = sphi 0, %s46
      %s48 = sphi 0, %s46
      %s49 = sphi 0, %s48
      %s63 = sphi 0, %s49
      %s67 = sphi 0, %s67
      %s69 = sphi 0, %s67
      %s70 = sphi 0, %s69
      %s84 = sphi 0, %s70
      %s90 = sphi 0, %s92
      %s93 = sphi 0, %s90
      %s94 = sphi 0, %s93
      %s110 = sphi 0, %s94
    $region4: #{tpu_custom_call.1} parent=1 // loop_header_branch
      %15 = sbr.rel (%p13) target = $region8
    $region5: #{tpu_custom_call.1} parent=1 // loop_body
      %s17 = ssub.s32 %s12, 1
      %s18 = ssub.s32 %s12, 2
      %s19 = sadd.s32 %s12, 1
      %s20 = ssub.s32 %s12, %s19
      %p21 = scmp.eq.s32.totalorder %s20, 0
      %s23 = sadd.s32 %s22, 1
      %s24 = scalar_select %p21, %s22, %s23
      %p27 = pneg %p21
      %p28 = scmp.eq.s32.totalorder %s12, 1
      %p29 = por %p27, %p28
      %p30 = scmp.ne.s32.totalorder %s22, %s25
      %p31 = scmp.eq.s32.totalorder %s12, 0
      %p32 = por %p30, %p31
      %p33 = scmp.ne.s32.totalorder %s22, %s25
      %p34 = scmp.eq.s32.totalorder %s17, 1
      %p35 = por %p33, %p34
      %p36 = scmp.ne.s32.totalorder %s25, %s26
      %p37 = scmp.eq.s32.totalorder %s17, 0
      %p38 = por %p36, %p37
      %p39 = scmp.ne.s32.totalorder %s25, %s26
      %p40 = scmp.eq.s32.totalorder %s18, 1
      %p41 = por %p39, %p40
      %p43 = scmp.ne.s32.totalorder %s26, %s42
      %p44 = scmp.eq.s32.totalorder %s18, 0
      %p45 = por %p43, %p44
      %s47 = sadd.s32 %s46, 1
      %p50 = scmp.eq.s32.totalorder %s12, 1
      %p51 = scmp.ne.s32.totalorder %s46, %s48
      %p52 = scmp.eq.s32.totalorder %s12, 0
      %p53 = por %p51, %p52
      %p54 = scmp.ne.s32.totalorder %s46, %s48
      %p55 = scmp.eq.s32.totalorder %s17, 1
      %p56 = por %p54, %p55
      %p57 = scmp.ne.s32.totalorder %s48, %s49
      %p58 = scmp.eq.s32.totalorder %s17, 0
      %p59 = por %p57, %p58
      %p60 = scmp.ne.s32.totalorder %s48, %s49
      %p61 = scmp.eq.s32.totalorder %s18, 1
      %p62 = por %p60, %p61
      %p64 = scmp.ne.s32.totalorder %s49, %s63
      %p65 = scmp.eq.s32.totalorder %s18, 0
      %p66 = por %p64, %p65
      %s68 = sadd.s32 %s67, 1
      %p71 = scmp.eq.s32.totalorder %s12, 1
      %p72 = scmp.ne.s32.totalorder %s67, %s69
      %p73 = scmp.eq.s32.totalorder %s12, 0
      %p74 = por %p72, %p73
      %p75 = scmp.ne.s32.totalorder %s67, %s69
      %p76 = scmp.eq.s32.totalorder %s17, 1
      %p77 = por %p75, %p76
      %p78 = scmp.ne.s32.totalorder %s69, %s70
      %p79 = scmp.eq.s32.totalorder %s17, 0
      %p80 = por %p78, %p79
      %p81 = scmp.ne.s32.totalorder %s69, %s70
      %p82 = scmp.eq.s32.totalorder %s18, 1
      %p83 = por %p81, %p82
      %p85 = scmp.ne.s32.totalorder %s70, %s84
      %p86 = scmp.eq.s32.totalorder %s18, 0
      %p87 = por %p85, %p86
      %s88 = ssub.s32 %s12, %s19
      %p89 = scmp.eq.s32.totalorder %s88, 0
      %s91 = sadd.s32 %s90, 1
      %s92 = scalar_select %p89, %s90, %s91
      %p95 = pneg %p89
      %p96 = scmp.eq.s32.totalorder %s12, 1
      %p97 = por %p95, %p96
      %p98 = scmp.ne.s32.totalorder %s90, %s93
      %p99 = scmp.eq.s32.totalorder %s12, 0
      %p100 = por %p98, %p99
      %p101 = scmp.ne.s32.totalorder %s90, %s93
      %p102 = scmp.eq.s32.totalorder %s17, 1
      %p103 = por %p101, %p102
      %p104 = scmp.ne.s32.totalorder %s93, %s94
      %p105 = scmp.eq.s32.totalorder %s17, 0
      %p106 = por %p104, %p105
      %p107 = scmp.ne.s32.totalorder %s93, %s94
      %p108 = scmp.eq.s32.totalorder %s18, 1
      %p109 = por %p107, %p108
      %p111 = scmp.ne.s32.totalorder %s94, %s110
      %p112 = scmp.eq.s32.totalorder %s18, 0
      %p113 = por %p111, %p112
      %p114 = scmp.le.s32.totalorder 1, %s12
      %p115 = scmp.lt.s32.totalorder %s12, 3
      %p116 = pnand %p114, %p115
      %p117 = pneg %p116
      // Predicated region
      $region9: #{tpu_custom_call.1} parent=5 // pred_check
        _
      $region10: #{tpu_custom_call.1} parent=5 // pred_check_branch
        %119 = sbr.rel (%p116) target = $region12
      $region11: #{tpu_custom_call.1} parent=5 // pred_region
        %s120 = ssub.s32 %s12, 1
        // Predicated region
        $region13: #{tpu_custom_call.1} parent=11 // pred_check
          %p121 = pneg %p59
        $region14: #{tpu_custom_call.1} parent=11 // pred_check_branch
          %123 = sbr.rel (%p121) target = $region16
        $region15: #{tpu_custom_call.1} parent=11 // pred_region
          _
        $region16: #{tpu_custom_call.1} parent=11 // pred_fallthru
          _
        // Predicated region
        $region17: #{tpu_custom_call.1} parent=11 // pred_check
          %p124 = pneg %p80
        $region18: #{tpu_custom_call.1} parent=11 // pred_check_branch
          %126 = sbr.rel (%p124) target = $region20
        $region19: #{tpu_custom_call.1} parent=11 // pred_region
          _
        $region20: #{tpu_custom_call.1} parent=11 // pred_fallthru
          _
      $region12: #{tpu_custom_call.1} parent=5 // pred_fallthru
        _
      %p127 = scmp.lt.s32.totalorder %s12, 2
      // Predicated region
      $region21: #{tpu_custom_call.1} parent=5 // pred_check
        %p128 = pneg %p127
      $region22: #{tpu_custom_call.1} parent=5 // pred_check_branch
        %130 = sbr.rel (%p128) target = $region24
      $region23: #{tpu_custom_call.1} parent=5 // pred_region
        // Predicated region
        $region25: #{tpu_custom_call.1} parent=23 // pred_check
          %p131 = pneg %p32
        $region26: #{tpu_custom_call.1} parent=23 // pred_check_branch
          %133 = sbr.rel (%p131) target = $region28
        $region27: #{tpu_custom_call.1} parent=23 // pred_region
          %p134 = scmp.lt.s32.totalorder %s12, 1
          %s135 = scalar_select %p134, %s12, 1
          %s136 = smul.addr %s135, 54
          %s137 = smul.addr %s136, 4
          %s138 = scalar_lea.vmem %s0, %s137
        $region28: #{tpu_custom_call.1} parent=23 // pred_fallthru
          _
      $region24: #{tpu_custom_call.1} parent=5 // pred_fallthru
        _
      %p139 = scmp.le.s32.totalorder 1, %s12
      %p140 = scmp.lt.s32.totalorder %s12, 3
      %p141 = pnand %p139, %p140
      %p142 = pneg %p141
      // Predicated region
      $region29: #{tpu_custom_call.1} parent=5 // pred_check
        _
      $region30: #{tpu_custom_call.1} parent=5 // pred_check_branch
        %144 = sbr.rel (%p141) target = $region32
      $region31: #{tpu_custom_call.1} parent=5 // pred_region
        %s145 = ssub.s32 %s12, 1
        %p146 = scmp.lt.s32.totalorder %s17, 1
        %s147 = scalar_select %p146, %s17, 1
        %s148 = smul.addr %s147, 54
        %s149 = smul.addr %s148, 4
        %s150 = scalar_lea.vmem %s0, %s149
        %p151 = pneg %p38
        %p152 = pneg %p35
        %p153 = pneg %p59
        %p154 = pneg %p56
        %p155 = pneg %p80
        %p156 = pneg %p77
        %p157 = pneg %p106
        %p158 = pneg %p103
        %s159 = sand.u32 %s93, 1
        %s160 = scalar_lea.sflag [#allocation3], %s159
        %s161 = sand.u32 %s93, 1
        %s162 = smul.addr %s161, 256
        %s163 = scalar_lea.vmem [#allocation2], %s162
        %p164 = scmp.lt.s32.totalorder %s17, 1
        %s165 = scalar_select %p164, %s17, 1
        %s166 = smul.addr %s165, 54
        %s167 = smul.addr %s166, 4
        %s168 = scalar_lea.vmem %s0, %s167
        %v170 = vld [vmem:[%s168] sm:$0xf]
        %v171 = vld [vmem:[%s168 + $0x4] sm:$0xf]
        %v172 = vld [vmem:[%s168 + $0xc] sm:$0xf]
        %v173 = vld [vmem:[%s168 + $0x10] sm:$0xf]
        %v174 = vld [vmem:[%s168 + $0x18] sm:$0xf]
        %v175 = vld [vmem:[%s168 + $0x1c] sm:$0xf]
        %v176 = vld [vmem:[%s168 + $0x24] sm:$0xf]
        %v177 = vld [vmem:[%s168 + $0x28] sm:$0xf]
        %v178 = vld [vmem:[%s168 + $0x30] sm:$0xf]
        %v179 = vld [vmem:[%s168 + $0x34] sm:$0xf]
        %v180 = vld [vmem:[%s168 + $0x3c] sm:$0xf]
        %v181 = vld [vmem:[%s168 + $0x40] sm:$0xf]
        %v182 = vld [vmem:[%s168 + $0x48] sm:$0xf]
        %v183 = vld [vmem:[%s168 + $0x4c] sm:$0xf]
        %v184 = vld [vmem:[%s168 + $0x54] sm:$0xf]
        %v185 = vld [vmem:[%s168 + $0x58] sm:$0xf]
        %v186 = vld [vmem:[%s168 + $0x60] sm:$0xf]
        %v187 = vld [vmem:[%s168 + $0x64] sm:$0xf]
        %v188 = vld [vmem:[%s168 + $0x6c] sm:$0xf]
        %v189 = vld [vmem:[%s168 + $0x70] sm:$0xf]
        %v190 = vld [vmem:[%s168 + $0x78] sm:$0xf]
        %v191 = vld [vmem:[%s168 + $0x7c] sm:$0xf]
        %v192 = vld [vmem:[%s168 + $0x84] sm:$0xf]
        %v193 = vld [vmem:[%s168 + $0x88] sm:$0xf]
        %v194 = vld [vmem:[%s168 + $0x90] sm:$0xf]
        %v195 = vld [vmem:[%s168 + $0x94] sm:$0xf]
        %v196 = vld [vmem:[%s168 + $0x9c] sm:$0xf]
        %v197 = vld [vmem:[%s168 + $0xa0] sm:$0xf]
        %v198 = vld [vmem:[%s168 + $0xa8] sm:$0xf]
        %v199 = vld [vmem:[%s168 + $0xac] sm:$0xf]
        %v200 = vld [vmem:[%s168 + $0xb4] sm:$0xf]
        %v201 = vld [vmem:[%s168 + $0xb8] sm:$0xf]
        %v202 = vld [vmem:[%s168 + $0x8] sm:$0x1]
        %v203 = vld [vmem:[%s168 + $0x14] sm:$0x1]
        %v204 = vld [vmem:[%s168 + $0x20] sm:$0x1]
        %v205 = vld [vmem:[%s168 + $0x2c] sm:$0x1]
        %v206 = vld [vmem:[%s168 + $0x38] sm:$0x1]
        %v207 = vld [vmem:[%s168 + $0x44] sm:$0x1]
        %v208 = vld [vmem:[%s168 + $0x50] sm:$0x1]
        %v209 = vld [vmem:[%s168 + $0x5c] sm:$0x1]
        %v210 = vld [vmem:[%s168 + $0x68] sm:$0x1]
        %v211 = vld [vmem:[%s168 + $0x74] sm:$0x1]
        %v212 = vld [vmem:[%s168 + $0x80] sm:$0x1]
        %v213 = vld [vmem:[%s168 + $0x8c] sm:$0x1]
        %v214 = vld [vmem:[%s168 + $0x98] sm:$0x1]
        %v215 = vld [vmem:[%s168 + $0xa4] sm:$0x1]
        %v216 = vld [vmem:[%s168 + $0xb0] sm:$0x1]
        %v217 = vld [vmem:[%s168 + $0xbc] sm:$0x1]
        %vm218 = vsmask.f32 3328
        %vm219 = vsmask.f32 7440
        %vm220 = vmor %vm218, %vm219
        %v222 = vshrl.u32 %v170, 16
        %v224 = vrot.slane %v222, 4
        %v225 = vshll.u32 %v170, 16
        %v227 = vrot.slane %v225, 5
        %v228 = vor.u32 %v224, %v227
        %v229 = vrot.slane %v228, 4
        %v231 = vshll.u32 %v171, 16
        %v233 = vrot.slane %v231, 5
        %v234 = vsel %vm220, %v229, %v233
        %v235 = vshrl.u32 %v171, 16
        %v237 = vrot.slane %v235, 4
        %v238 = vor.u32 %v237, %v233
        %v239 = vrot.slane %v238, 4
        %v241 = vshll.u32 %v202, 16
        %v243 = vrot.slane %v241, 5
        %v244 = vsel %vm220, %v239, %v243
        %v246 = vshrl.u32 %v172, 16
        %v248 = vrot.slane %v246, 4
        %v249 = vshll.u32 %v172, 16
        %v251 = vrot.slane %v249, 5
        %v252 = vor.u32 %v248, %v251
        %v253 = vrot.slane %v252, 4
        %v255 = vshll.u32 %v173, 16
        %v257 = vrot.slane %v255, 5
        %v258 = vsel %vm220, %v253, %v257
        %v259 = vshrl.u32 %v173, 16
        %v261 = vrot.slane %v259, 4
        %v262 = vor.u32 %v261, %v257
        %v263 = vrot.slane %v262, 4
        %v265 = vshll.u32 %v203, 16
        %v267 = vrot.slane %v265, 5
        %v268 = vsel %vm220, %v263, %v267
        %v270 = vshrl.u32 %v174, 16
        %v272 = vrot.slane %v270, 4
        %v273 = vshll.u32 %v174, 16
        %v275 = vrot.slane %v273, 5
        %v276 = vor.u32 %v272, %v275
        %v277 = vrot.slane %v276, 4
        %v279 = vshll.u32 %v175, 16
        %v281 = vrot.slane %v279, 5
        %v282 = vsel %vm220, %v277, %v281
        %v283 = vshrl.u32 %v175, 16
        %v285 = vrot.slane %v283, 4
        %v286 = vor.u32 %v285, %v281
        %v287 = vrot.slane %v286, 4
        %v289 = vshll.u32 %v204, 16
        %v291 = vrot.slane %v289, 5
        %v292 = vsel %vm220, %v287, %v291
        %v294 = vshrl.u32 %v176, 16
        %v296 = vrot.slane %v294, 4
        %v297 = vshll.u32 %v176, 16
        %v299 = vrot.slane %v297, 5
        %v300 = vor.u32 %v296, %v299
        %v301 = vrot.slane %v300, 4
        %v303 = vshll.u32 %v177, 16
        %v305 = vrot.slane %v303, 5
        %v306 = vsel %vm220, %v301, %v305
        %v307 = vshrl.u32 %v177, 16
        %v309 = vrot.slane %v307, 4
        %v310 = vor.u32 %v309, %v305
        %v311 = vrot.slane %v310, 4
        %v313 = vshll.u32 %v205, 16
        %v315 = vrot.slane %v313, 5
        %v316 = vsel %vm220, %v311, %v315
        %v318 = vshrl.u32 %v178, 16
        %v320 = vrot.slane %v318, 4
        %v321 = vshll.u32 %v178, 16
        %v323 = vrot.slane %v321, 5
        %v324 = vor.u32 %v320, %v323
        %v325 = vrot.slane %v324, 4
        %v327 = vshll.u32 %v179, 16
        %v329 = vrot.slane %v327, 5
        %v330 = vsel %vm220, %v325, %v329
        %v331 = vshrl.u32 %v179, 16
        %v333 = vrot.slane %v331, 4
        %v334 = vor.u32 %v333, %v329
        %v335 = vrot.slane %v334, 4
        %v337 = vshll.u32 %v206, 16
        %v339 = vrot.slane %v337, 5
        %v340 = vsel %vm220, %v335, %v339
        %v342 = vshrl.u32 %v180, 16
        %v344 = vrot.slane %v342, 4
        %v345 = vshll.u32 %v180, 16
        %v347 = vrot.slane %v345, 5
        %v348 = vor.u32 %v344, %v347
        %v349 = vrot.slane %v348, 4
        %v351 = vshll.u32 %v181, 16
        %v353 = vrot.slane %v351, 5
        %v354 = vsel %vm220, %v349, %v353
        %v355 = vshrl.u32 %v181, 16
        %v357 = vrot.slane %v355, 4
        %v358 = vor.u32 %v357, %v353
        %v359 = vrot.slane %v358, 4
        %v361 = vshll.u32 %v207, 16
        %v363 = vrot.slane %v361, 5
        %v364 = vsel %vm220, %v359, %v363
        %v366 = vshrl.u32 %v182, 16
        %v368 = vrot.slane %v366, 4
        %v369 = vshll.u32 %v182, 16
        %v371 = vrot.slane %v369, 5
        %v372 = vor.u32 %v368, %v371
        %v373 = vrot.slane %v372, 4
        %v375 = vshll.u32 %v183, 16
        %v377 = vrot.slane %v375, 5
        %v378 = vsel %vm220, %v373, %v377
        %v379 = vshrl.u32 %v183, 16
        %v381 = vrot.slane %v379, 4
        %v382 = vor.u32 %v381, %v377
        %v383 = vrot.slane %v382, 4
        %v385 = vshll.u32 %v208, 16
        %v387 = vrot.slane %v385, 5
        %v388 = vsel %vm220, %v383, %v387
        %v390 = vshrl.u32 %v184, 16
        %v392 = vrot.slane %v390, 4
        %v393 = vshll.u32 %v184, 16
        %v395 = vrot.slane %v393, 5
        %v396 = vor.u32 %v392, %v395
        %v397 = vrot.slane %v396, 4
        %v399 = vshll.u32 %v185, 16
        %v401 = vrot.slane %v399, 5
        %v402 = vsel %vm220, %v397, %v401
        %v403 = vshrl.u32 %v185, 16
        %v405 = vrot.slane %v403, 4
        %v406 = vor.u32 %v405, %v401
        %v407 = vrot.slane %v406, 4
        %v409 = vshll.u32 %v209, 16
        %v411 = vrot.slane %v409, 5
        %v412 = vsel %vm220, %v407, %v411
        %v414 = vshrl.u32 %v186, 16
        %v416 = vrot.slane %v414, 4
        %v417 = vshll.u32 %v186, 16
        %v419 = vrot.slane %v417, 5
        %v420 = vor.u32 %v416, %v419
        %v421 = vrot.slane %v420, 4
        %v423 = vshll.u32 %v187, 16
        %v425 = vrot.slane %v423, 5
        %v426 = vsel %vm220, %v421, %v425
        %v427 = vshrl.u32 %v187, 16
        %v429 = vrot.slane %v427, 4
        %v430 = vor.u32 %v429, %v425
        %v431 = vrot.slane %v430, 4
        %v433 = vshll.u32 %v210, 16
        %v435 = vrot.slane %v433, 5
        %v436 = vsel %vm220, %v431, %v435
        %v438 = vshrl.u32 %v188, 16
        %v440 = vrot.slane %v438, 4
        %v441 = vshll.u32 %v188, 16
        %v443 = vrot.slane %v441, 5
        %v444 = vor.u32 %v440, %v443
        %v445 = vrot.slane %v444, 4
        %v447 = vshll.u32 %v189, 16
        %v449 = vrot.slane %v447, 5
        %v450 = vsel %vm220, %v445, %v449
        %v451 = vshrl.u32 %v189, 16
        %v453 = vrot.slane %v451, 4
        %v454 = vor.u32 %v453, %v449
        %v455 = vrot.slane %v454, 4
        %v457 = vshll.u32 %v211, 16
        %v459 = vrot.slane %v457, 5
        %v460 = vsel %vm220, %v455, %v459
        %v462 = vshrl.u32 %v190, 16
        %v464 = vrot.slane %v462, 4
        %v465 = vshll.u32 %v190, 16
        %v467 = vrot.slane %v465, 5
        %v468 = vor.u32 %v464, %v467
        %v469 = vrot.slane %v468, 4
        %v471 = vshll.u32 %v191, 16
        %v473 = vrot.slane %v471, 5
        %v474 = vsel %vm220, %v469, %v473
        %v475 = vshrl.u32 %v191, 16
        %v477 = vrot.slane %v475, 4
        %v478 = vor.u32 %v477, %v473
        %v479 = vrot.slane %v478, 4
        %v481 = vshll.u32 %v212, 16
        %v483 = vrot.slane %v481, 5
        %v484 = vsel %vm220, %v479, %v483
        %v486 = vshrl.u32 %v192, 16
        %v488 = vrot.slane %v486, 4
        %v489 = vshll.u32 %v192, 16
        %v491 = vrot.slane %v489, 5
        %v492 = vor.u32 %v488, %v491
        %v493 = vrot.slane %v492, 4
        %v495 = vshll.u32 %v193, 16
        %v497 = vrot.slane %v495, 5
        %v498 = vsel %vm220, %v493, %v497
        %v499 = vshrl.u32 %v193, 16
        %v501 = vrot.slane %v499, 4
        %v502 = vor.u32 %v501, %v497
        %v503 = vrot.slane %v502, 4
        %v505 = vshll.u32 %v213, 16
        %v507 = vrot.slane %v505, 5
        %v508 = vsel %vm220, %v503, %v507
        %v510 = vshrl.u32 %v194, 16
        %v512 = vrot.slane %v510, 4
        %v513 = vshll.u32 %v194, 16
        %v515 = vrot.slane %v513, 5
        %v516 = vor.u32 %v512, %v515
        %v517 = vrot.slane %v516, 4
        %v519 = vshll.u32 %v195, 16
        %v521 = vrot.slane %v519, 5
        %v522 = vsel %vm220, %v517, %v521
        %v523 = vshrl.u32 %v195, 16
        %v525 = vrot.slane %v523, 4
        %v526 = vor.u32 %v525, %v521
        %v527 = vrot.slane %v526, 4
        %v529 = vshll.u32 %v214, 16
        %v531 = vrot.slane %v529, 5
        %v532 = vsel %vm220, %v527, %v531
        %v534 = vshrl.u32 %v196, 16
        %v536 = vrot.slane %v534, 4
        %v537 = vshll.u32 %v196, 16
        %v539 = vrot.slane %v537, 5
        %v540 = vor.u32 %v536, %v539
        %v541 = vrot.slane %v540, 4
        %v543 = vshll.u32 %v197, 16
        %v545 = vrot.slane %v543, 5
        %v546 = vsel %vm220, %v541, %v545
        %v547 = vshrl.u32 %v197, 16
        %v549 = vrot.slane %v547, 4
        %v550 = vor.u32 %v549, %v545
        %v551 = vrot.slane %v550, 4
        %v553 = vshll.u32 %v215, 16
        %v555 = vrot.slane %v553, 5
        %v556 = vsel %vm220, %v551, %v555
        %v558 = vshrl.u32 %v198, 16
        %v560 = vrot.slane %v558, 4
        %v561 = vshll.u32 %v198, 16
        %v563 = vrot.slane %v561, 5
        %v564 = vor.u32 %v560, %v563
        %v565 = vrot.slane %v564, 4
        %v567 = vshll.u32 %v199, 16
        %v569 = vrot.slane %v567, 5
        %v570 = vsel %vm220, %v565, %v569
        %v571 = vshrl.u32 %v199, 16
        %v573 = vrot.slane %v571, 4
        %v574 = vor.u32 %v573, %v569
        %v575 = vrot.slane %v574, 4
        %v577 = vshll.u32 %v216, 16
        %v579 = vrot.slane %v577, 5
        %v580 = vsel %vm220, %v575, %v579
        %v582 = vshrl.u32 %v200, 16
        %v584 = vrot.slane %v582, 4
        %v585 = vshll.u32 %v200, 16
        %v587 = vrot.slane %v585, 5
        %v588 = vor.u32 %v584, %v587
        %v589 = vrot.slane %v588, 4
        %v591 = vshll.u32 %v201, 16
        %v593 = vrot.slane %v591, 5
        %v594 = vsel %vm220, %v589, %v593
        %v595 = vshrl.u32 %v201, 16
        %v597 = vrot.slane %v595, 4
        %v598 = vor.u32 %v597, %v593
        %v599 = vrot.slane %v598, 4
        %v601 = vshll.u32 %v217, 16
        %v603 = vrot.slane %v601, 5
        %v604 = vsel %vm220, %v599, %v603
        %v605 = vld [vmem:[%s168] sm:$0xe]
        %v606 = vld [vmem:[%s168 + $0xc] sm:$0xe]
        %v607 = vld [vmem:[%s168 + $0x18] sm:$0xe]
        %v608 = vld [vmem:[%s168 + $0x24] sm:$0xe]
        %v609 = vld [vmem:[%s168 + $0x30] sm:$0xe]
        %v610 = vld [vmem:[%s168 + $0x3c] sm:$0xe]
        %v611 = vld [vmem:[%s168 + $0x48] sm:$0xe]
        %v612 = vld [vmem:[%s168 + $0x54] sm:$0xe]
        %v613 = vld [vmem:[%s168 + $0x60] sm:$0xe]
        %v614 = vld [vmem:[%s168 + $0x6c] sm:$0xe]
        %v615 = vld [vmem:[%s168 + $0x78] sm:$0xe]
        %v616 = vld [vmem:[%s168 + $0x84] sm:$0xe]
        %v617 = vld [vmem:[%s168 + $0x90] sm:$0xe]
        %v618 = vld [vmem:[%s168 + $0x9c] sm:$0xe]
        %v619 = vld [vmem:[%s168 + $0xa8] sm:$0xe]
        %v620 = vld [vmem:[%s168 + $0xb4] sm:$0xe]
        %vm669 = vcmask 1042432
        %vm670 = vcmask 1046532
        %vm671 = vmor %vm669, %vm670
        %v672 = vrot.slane %v605, 5
        %v673 = vrot.slane %v672, 4
        %v674 = vrot.slane %v171, 5
        %v675 = vsel %vm671, %v673, %v674
        %v676 = vrot.slane %v674, 4
        %v677 = vrot.slane %v202, 5
        %v678 = vsel %vm671, %v676, %v677
        %v679 = vrot.slane %v606, 5
        %v680 = vrot.slane %v679, 4
        %v681 = vrot.slane %v173, 5
        %v682 = vsel %vm671, %v680, %v681
        %v683 = vrot.slane %v681, 4
        %v684 = vrot.slane %v203, 5
        %v685 = vsel %vm671, %v683, %v684
        %v686 = vrot.slane %v607, 5
        %v687 = vrot.slane %v686, 4
        %v688 = vrot.slane %v175, 5
        %v689 = vsel %vm671, %v687, %v688
        %v690 = vrot.slane %v688, 4
        %v691 = vrot.slane %v204, 5
        %v692 = vsel %vm671, %v690, %v691
        %v693 = vrot.slane %v608, 5
        %v694 = vrot.slane %v693, 4
        %v695 = vrot.slane %v177, 5
        %v696 = vsel %vm671, %v694, %v695
        %v697 = vrot.slane %v695, 4
        %v698 = vrot.slane %v205, 5
        %v699 = vsel %vm671, %v697, %v698
        %v700 = vrot.slane %v609, 5
        %v701 = vrot.slane %v700, 4
        %v702 = vrot.slane %v179, 5
        %v703 = vsel %vm671, %v701, %v702
        %v704 = vrot.slane %v702, 4
        %v705 = vrot.slane %v206, 5
        %v706 = vsel %vm671, %v704, %v705
        %v707 = vrot.slane %v610, 5
        %v708 = vrot.slane %v707, 4
        %v709 = vrot.slane %v181, 5
        %v710 = vsel %vm671, %v708, %v709
        %v711 = vrot.slane %v709, 4
        %v712 = vrot.slane %v207, 5
        %v713 = vsel %vm671, %v711, %v712
        %v714 = vrot.slane %v611, 5
        %v715 = vrot.slane %v714, 4
        %v716 = vrot.slane %v183, 5
        %v717 = vsel %vm671, %v715, %v716
        %v718 = vrot.slane %v716, 4
        %v719 = vrot.slane %v208, 5
        %v720 = vsel %vm671, %v718, %v719
        %v721 = vrot.slane %v612, 5
        %v722 = vrot.slane %v721, 4
        %v723 = vrot.slane %v185, 5
        %v724 = vsel %vm671, %v722, %v723
        %v725 = vrot.slane %v723, 4
        %v726 = vrot.slane %v209, 5
        %v727 = vsel %vm671, %v725, %v726
        %v728 = vrot.slane %v613, 5
        %v729 = vrot.slane %v728, 4
        %v730 = vrot.slane %v187, 5
        %v731 = vsel %vm671, %v729, %v730
        %v732 = vrot.slane %v730, 4
        %v733 = vrot.slane %v210, 5
        %v734 = vsel %vm671, %v732, %v733
        %v735 = vrot.slane %v614, 5
        %v736 = vrot.slane %v735, 4
        %v737 = vrot.slane %v189, 5
        %v738 = vsel %vm671, %v736, %v737
        %v739 = vrot.slane %v737, 4
        %v740 = vrot.slane %v211, 5
        %v741 = vsel %vm671, %v739, %v740
        %v742 = vrot.slane %v615, 5
        %v743 = vrot.slane %v742, 4
        %v744 = vrot.slane %v191, 5
        %v745 = vsel %vm671, %v743, %v744
        %v746 = vrot.slane %v744, 4
        %v747 = vrot.slane %v212, 5
        %v748 = vsel %vm671, %v746, %v747
        %v749 = vrot.slane %v616, 5
        %v750 = vrot.slane %v749, 4
        %v751 = vrot.slane %v193, 5
        %v752 = vsel %vm671, %v750, %v751
        %v753 = vrot.slane %v751, 4
        %v754 = vrot.slane %v213, 5
        %v755 = vsel %vm671, %v753, %v754
        %v756 = vrot.slane %v617, 5
        %v757 = vrot.slane %v756, 4
        %v758 = vrot.slane %v195, 5
        %v759 = vsel %vm671, %v757, %v758
        %v760 = vrot.slane %v758, 4
        %v761 = vrot.slane %v214, 5
        %v762 = vsel %vm671, %v760, %v761
        %v763 = vrot.slane %v618, 5
        %v764 = vrot.slane %v763, 4
        %v765 = vrot.slane %v197, 5
        %v766 = vsel %vm671, %v764, %v765
        %v767 = vrot.slane %v765, 4
        %v768 = vrot.slane %v215, 5
        %v769 = vsel %vm671, %v767, %v768
        %v770 = vrot.slane %v619, 5
        %v771 = vrot.slane %v770, 4
        %v772 = vrot.slane %v199, 5
        %v773 = vsel %vm671, %v771, %v772
        %v774 = vrot.slane %v772, 4
        %v775 = vrot.slane %v216, 5
        %v776 = vsel %vm671, %v774, %v775
        %v777 = vrot.slane %v620, 5
        %v778 = vrot.slane %v777, 4
        %v779 = vrot.slane %v201, 5
        %v780 = vsel %vm671, %v778, %v779
        %v781 = vrot.slane %v779, 4
        %v782 = vrot.slane %v217, 5
        %v783 = vsel %vm671, %v781, %v782
        %s784 = scalar_lea.vmem %s168, 12
        %v785 = vld [vmem:[%s784] sm:$0xf]
        %v786 = vld [vmem:[%s784 + $0x4] sm:$0xf]
        %v787 = vld [vmem:[%s784 + $0xc] sm:$0xf]
        %v788 = vld [vmem:[%s784 + $0x10] sm:$0xf]
        %v789 = vld [vmem:[%s784 + $0x18] sm:$0xf]
        %v790 = vld [vmem:[%s784 + $0x1c] sm:$0xf]
        %v791 = vld [vmem:[%s784 + $0x24] sm:$0xf]
        %v792 = vld [vmem:[%s784 + $0x28] sm:$0xf]
        %v793 = vld [vmem:[%s784 + $0x30] sm:$0xf]
        %v794 = vld [vmem:[%s784 + $0x34] sm:$0xf]
        %v795 = vld [vmem:[%s784 + $0x3c] sm:$0xf]
        %v796 = vld [vmem:[%s784 + $0x40] sm:$0xf]
        %v797 = vld [vmem:[%s784 + $0x48] sm:$0xf]
        %v798 = vld [vmem:[%s784 + $0x4c] sm:$0xf]
        %v799 = vld [vmem:[%s784 + $0x54] sm:$0xf]
        %v800 = vld [vmem:[%s784 + $0x58] sm:$0xf]
        %v801 = vld [vmem:[%s784 + $0x60] sm:$0xf]
        %v802 = vld [vmem:[%s784 + $0x64] sm:$0xf]
        %v803 = vld [vmem:[%s784 + $0x6c] sm:$0xf]
        %v804 = vld [vmem:[%s784 + $0x70] sm:$0xf]
        %v805 = vld [vmem:[%s784 + $0x78] sm:$0xf]
        %v806 = vld [vmem:[%s784 + $0x7c] sm:$0xf]
        %v807 = vld [vmem:[%s784 + $0x84] sm:$0xf]
        %v808 = vld [vmem:[%s784 + $0x88] sm:$0xf]
        %v809 = vld [vmem:[%s784 + $0x90] sm:$0xf]
        %v810 = vld [vmem:[%s784 + $0x94] sm:$0xf]
        %v811 = vld [vmem:[%s784 + $0x9c] sm:$0xf]
        %v812 = vld [vmem:[%s784 + $0xa0] sm:$0xf]
        %v813 = vld [vmem:[%s784 + $0xa8] sm:$0xf]
        %v814 = vld [vmem:[%s784 + $0xac] sm:$0xf]
        %v815 = vld [vmem:[%s784 + $0xb4] sm:$0xf]
        %v816 = vld [vmem:[%s784 + $0xb8] sm:$0xf]
        %v817 = vld [vmem:[%s784 + $0x8] sm:$0x1]
        %v818 = vld [vmem:[%s784 + $0x14] sm:$0x1]
        %v819 = vld [vmem:[%s784 + $0x20] sm:$0x1]
        %v820 = vld [vmem:[%s784 + $0x2c] sm:$0x1]
        %v821 = vld [vmem:[%s784 + $0x38] sm:$0x1]
        %v822 = vld [vmem:[%s784 + $0x44] sm:$0x1]
        %v823 = vld [vmem:[%s784 + $0x50] sm:$0x1]
        %v824 = vld [vmem:[%s784 + $0x5c] sm:$0x1]
        %v825 = vld [vmem:[%s784 + $0x68] sm:$0x1]
        %v826 = vld [vmem:[%s784 + $0x74] sm:$0x1]
        %v827 = vld [vmem:[%s784 + $0x80] sm:$0x1]
        %v828 = vld [vmem:[%s784 + $0x8c] sm:$0x1]
        %v829 = vld [vmem:[%s784 + $0x98] sm:$0x1]
        %v830 = vld [vmem:[%s784 + $0xa4] sm:$0x1]
        %v831 = vld [vmem:[%s784 + $0xb0] sm:$0x1]
        %v832 = vld [vmem:[%s784 + $0xbc] sm:$0x1]
        %v834 = vshrl.u32 %v785, 16
        %v836 = vrot.slane %v834, 4
        %v837 = vshll.u32 %v785, 16
        %v839 = vrot.slane %v837, 5
        %v840 = vor.u32 %v836, %v839
        %v841 = vrot.slane %v840, 4
        %v843 = vshll.u32 %v786, 16
        %v845 = vrot.slane %v843, 5
        %v846 = vsel %vm220, %v841, %v845
        %v847 = vshrl.u32 %v786, 16
        %v849 = vrot.slane %v847, 4
        %v850 = vor.u32 %v849, %v845
        %v851 = vrot.slane %v850, 4
        %v853 = vshll.u32 %v817, 16
        %v855 = vrot.slane %v853, 5
        %v856 = vsel %vm220, %v851, %v855
        %v858 = vshrl.u32 %v787, 16
        %v860 = vrot.slane %v858, 4
        %v861 = vshll.u32 %v787, 16
        %v863 = vrot.slane %v861, 5
        %v864 = vor.u32 %v860, %v863
        %v865 = vrot.slane %v864, 4
        %v867 = vshll.u32 %v788, 16
        %v869 = vrot.slane %v867, 5
        %v870 = vsel %vm220, %v865, %v869
        %v871 = vshrl.u32 %v788, 16
        %v873 = vrot.slane %v871, 4
        %v874 = vor.u32 %v873, %v869
        %v875 = vrot.slane %v874, 4
        %v877 = vshll.u32 %v818, 16
        %v879 = vrot.slane %v877, 5
        %v880 = vsel %vm220, %v875, %v879
        %v882 = vshrl.u32 %v789, 16
        %v884 = vrot.slane %v882, 4
        %v885 = vshll.u32 %v789, 16
        %v887 = vrot.slane %v885, 5
        %v888 = vor.u32 %v884, %v887
        %v889 = vrot.slane %v888, 4
        %v891 = vshll.u32 %v790, 16
        %v893 = vrot.slane %v891, 5
        %v894 = vsel %vm220, %v889, %v893
        %v895 = vshrl.u32 %v790, 16
        %v897 = vrot.slane %v895, 4
        %v898 = vor.u32 %v897, %v893
        %v899 = vrot.slane %v898, 4
        %v901 = vshll.u32 %v819, 16
        %v903 = vrot.slane %v901, 5
        %v904 = vsel %vm220, %v899, %v903
        %v906 = vshrl.u32 %v791, 16
        %v908 = vrot.slane %v906, 4
        %v909 = vshll.u32 %v791, 16
        %v911 = vrot.slane %v909, 5
        %v912 = vor.u32 %v908, %v911
        %v913 = vrot.slane %v912, 4
        %v915 = vshll.u32 %v792, 16
        %v917 = vrot.slane %v915, 5
        %v918 = vsel %vm220, %v913, %v917
        %v919 = vshrl.u32 %v792, 16
        %v921 = vrot.slane %v919, 4
        %v922 = vor.u32 %v921, %v917
        %v923 = vrot.slane %v922, 4
        %v925 = vshll.u32 %v820, 16
        %v927 = vrot.slane %v925, 5
        %v928 = vsel %vm220, %v923, %v927
        %v930 = vshrl.u32 %v793, 16
        %v932 = vrot.slane %v930, 4
        %v933 = vshll.u32 %v793, 16
        %v935 = vrot.slane %v933, 5
        %v936 = vor.u32 %v932, %v935
        %v937 = vrot.slane %v936, 4
        %v939 = vshll.u32 %v794, 16
        %v941 = vrot.slane %v939, 5
        %v942 = vsel %vm220, %v937, %v941
        %v943 = vshrl.u32 %v794, 16
        %v945 = vrot.slane %v943, 4
        %v946 = vor.u32 %v945, %v941
        %v947 = vrot.slane %v946, 4
        %v949 = vshll.u32 %v821, 16
        %v951 = vrot.slane %v949, 5
        %v952 = vsel %vm220, %v947, %v951
        %v954 = vshrl.u32 %v795, 16
        %v956 = vrot.slane %v954, 4
        %v957 = vshll.u32 %v795, 16
        %v959 = vrot.slane %v957, 5
        %v960 = vor.u32 %v956, %v959
        %v961 = vrot.slane %v960, 4
        %v963 = vshll.u32 %v796, 16
        %v965 = vrot.slane %v963, 5
        %v966 = vsel %vm220, %v961, %v965
        %v967 = vshrl.u32 %v796, 16
        %v969 = vrot.slane %v967, 4
        %v970 = vor.u32 %v969, %v965
        %v971 = vrot.slane %v970, 4
        %v973 = vshll.u32 %v822, 16
        %v975 = vrot.slane %v973, 5
        %v976 = vsel %vm220, %v971, %v975
        %v978 = vshrl.u32 %v797, 16
        %v980 = vrot.slane %v978, 4
        %v981 = vshll.u32 %v797, 16
        %v983 = vrot.slane %v981, 5
        %v984 = vor.u32 %v980, %v983
        %v985 = vrot.slane %v984, 4
        %v987 = vshll.u32 %v798, 16
        %v989 = vrot.slane %v987, 5
        %v990 = vsel %vm220, %v985, %v989
        %v991 = vshrl.u32 %v798, 16
        %v993 = vrot.slane %v991, 4
        %v994 = vor.u32 %v993, %v989
        %v995 = vrot.slane %v994, 4
        %v997 = vshll.u32 %v823, 16
        %v999 = vrot.slane %v997, 5
        %v1000 = vsel %vm220, %v995, %v999
        %v1002 = vshrl.u32 %v799, 16
        %v1004 = vrot.slane %v1002, 4
        %v1005 = vshll.u32 %v799, 16
        %v1007 = vrot.slane %v1005, 5
        %v1008 = vor.u32 %v1004, %v1007
        %v1009 = vrot.slane %v1008, 4
        %v1011 = vshll.u32 %v800, 16
        %v1013 = vrot.slane %v1011, 5
        %v1014 = vsel %vm220, %v1009, %v1013
        %v1015 = vshrl.u32 %v800, 16
        %v1017 = vrot.slane %v1015, 4
        %v1018 = vor.u32 %v1017, %v1013
        %v1019 = vrot.slane %v1018, 4
        %v1021 = vshll.u32 %v824, 16
        %v1023 = vrot.slane %v1021, 5
        %v1024 = vsel %vm220, %v1019, %v1023
        %v1026 = vshrl.u32 %v801, 16
        %v1028 = vrot.slane %v1026, 4
        %v1029 = vshll.u32 %v801, 16
        %v1031 = vrot.slane %v1029, 5
        %v1032 = vor.u32 %v1028, %v1031
        %v1033 = vrot.slane %v1032, 4
        %v1035 = vshll.u32 %v802, 16
        %v1037 = vrot.slane %v1035, 5
        %v1038 = vsel %vm220, %v1033, %v1037
        %v1039 = vshrl.u32 %v802, 16
        %v1041 = vrot.slane %v1039, 4
        %v1042 = vor.u32 %v1041, %v1037
        %v1043 = vrot.slane %v1042, 4
        %v1045 = vshll.u32 %v825, 16
        %v1047 = vrot.slane %v1045, 5
        %v1048 = vsel %vm220, %v1043, %v1047
        %v1050 = vshrl.u32 %v803, 16
        %v1052 = vrot.slane %v1050, 4
        %v1053 = vshll.u32 %v803, 16
        %v1055 = vrot.slane %v1053, 5
        %v1056 = vor.u32 %v1052, %v1055
        %v1057 = vrot.slane %v1056, 4
        %v1059 = vshll.u32 %v804, 16
        %v1061 = vrot.slane %v1059, 5
        %v1062 = vsel %vm220, %v1057, %v1061
        %v1063 = vshrl.u32 %v804, 16
        %v1065 = vrot.slane %v1063, 4
        %v1066 = vor.u32 %v1065, %v1061
        %v1067 = vrot.slane %v1066, 4
        %v1069 = vshll.u32 %v826, 16
        %v1071 = vrot.slane %v1069, 5
        %v1072 = vsel %vm220, %v1067, %v1071
        %v1074 = vshrl.u32 %v805, 16
        %v1076 = vrot.slane %v1074, 4
        %v1077 = vshll.u32 %v805, 16
        %v1079 = vrot.slane %v1077, 5
        %v1080 = vor.u32 %v1076, %v1079
        %v1081 = vrot.slane %v1080, 4
        %v1083 = vshll.u32 %v806, 16
        %v1085 = vrot.slane %v1083, 5
        %v1086 = vsel %vm220, %v1081, %v1085
        %v1087 = vshrl.u32 %v806, 16
        %v1089 = vrot.slane %v1087, 4
        %v1090 = vor.u32 %v1089, %v1085
        %v1091 = vrot.slane %v1090, 4
        %v1093 = vshll.u32 %v827, 16
        %v1095 = vrot.slane %v1093, 5
        %v1096 = vsel %vm220, %v1091, %v1095
        %v1098 = vshrl.u32 %v807, 16
        %v1100 = vrot.slane %v1098, 4
        %v1101 = vshll.u32 %v807, 16
        %v1103 = vrot.slane %v1101, 5
        %v1104 = vor.u32 %v1100, %v1103
        %v1105 = vrot.slane %v1104, 4
        %v1107 = vshll.u32 %v808, 16
        %v1109 = vrot.slane %v1107, 5
        %v1110 = vsel %vm220, %v1105, %v1109
        %v1111 = vshrl.u32 %v808, 16
        %v1113 = vrot.slane %v1111, 4
        %v1114 = vor.u32 %v1113, %v1109
        %v1115 = vrot.slane %v1114, 4
        %v1117 = vshll.u32 %v828, 16
        %v1119 = vrot.slane %v1117, 5
        %v1120 = vsel %vm220, %v1115, %v1119
        %v1122 = vshrl.u32 %v809, 16
        %v1124 = vrot.slane %v1122, 4
        %v1125 = vshll.u32 %v809, 16
        %v1127 = vrot.slane %v1125, 5
        %v1128 = vor.u32 %v1124, %v1127
        %v1129 = vrot.slane %v1128, 4
        %v1131 = vshll.u32 %v810, 16
        %v1133 = vrot.slane %v1131, 5
        %v1134 = vsel %vm220, %v1129, %v1133
        %v1135 = vshrl.u32 %v810, 16
        %v1137 = vrot.slane %v1135, 4
        %v1138 = vor.u32 %v1137, %v1133
        %v1139 = vrot.slane %v1138, 4
        %v1141 = vshll.u32 %v829, 16
        %v1143 = vrot.slane %v1141, 5
        %v1144 = vsel %vm220, %v1139, %v1143
        %v1146 = vshrl.u32 %v811, 16
        %v1148 = vrot.slane %v1146, 4
        %v1149 = vshll.u32 %v811, 16
        %v1151 = vrot.slane %v1149, 5
        %v1152 = vor.u32 %v1148, %v1151
        %v1153 = vrot.slane %v1152, 4
        %v1155 = vshll.u32 %v812, 16
        %v1157 = vrot.slane %v1155, 5
        %v1158 = vsel %vm220, %v1153, %v1157
        %v1159 = vshrl.u32 %v812, 16
        %v1161 = vrot.slane %v1159, 4
        %v1162 = vor.u32 %v1161, %v1157
        %v1163 = vrot.slane %v1162, 4
        %v1165 = vshll.u32 %v830, 16
        %v1167 = vrot.slane %v1165, 5
        %v1168 = vsel %vm220, %v1163, %v1167
        %v1170 = vshrl.u32 %v813, 16
        %v1172 = vrot.slane %v1170, 4
        %v1173 = vshll.u32 %v813, 16
        %v1175 = vrot.slane %v1173, 5
        %v1176 = vor.u32 %v1172, %v1175
        %v1177 = vrot.slane %v1176, 4
        %v1179 = vshll.u32 %v814, 16
        %v1181 = vrot.slane %v1179, 5
        %v1182 = vsel %vm220, %v1177, %v1181
        %v1183 = vshrl.u32 %v814, 16
        %v1185 = vrot.slane %v1183, 4
        %v1186 = vor.u32 %v1185, %v1181
        %v1187 = vrot.slane %v1186, 4
        %v1189 = vshll.u32 %v831, 16
        %v1191 = vrot.slane %v1189, 5
        %v1192 = vsel %vm220, %v1187, %v1191
        %v1194 = vshrl.u32 %v815, 16
        %v1196 = vrot.slane %v1194, 4
        %v1197 = vshll.u32 %v815, 16
        %v1199 = vrot.slane %v1197, 5
        %v1200 = vor.u32 %v1196, %v1199
        %v1201 = vrot.slane %v1200, 4
        %v1203 = vshll.u32 %v816, 16
        %v1205 = vrot.slane %v1203, 5
        %v1206 = vsel %vm220, %v1201, %v1205
        %v1207 = vshrl.u32 %v816, 16
        %v1209 = vrot.slane %v1207, 4
        %v1210 = vor.u32 %v1209, %v1205
        %v1211 = vrot.slane %v1210, 4
        %v1213 = vshll.u32 %v832, 16
        %v1215 = vrot.slane %v1213, 5
        %v1216 = vsel %vm220, %v1211, %v1215
        %v1249 = vld [vmem:[%s784] sm:$0xe]
        %v1250 = vld [vmem:[%s784 + $0xc] sm:$0xe]
        %v1251 = vld [vmem:[%s784 + $0x18] sm:$0xe]
        %v1252 = vld [vmem:[%s784 + $0x24] sm:$0xe]
        %v1253 = vld [vmem:[%s784 + $0x30] sm:$0xe]
        %v1254 = vld [vmem:[%s784 + $0x3c] sm:$0xe]
        %v1255 = vld [vmem:[%s784 + $0x48] sm:$0xe]
        %v1256 = vld [vmem:[%s784 + $0x54] sm:$0xe]
        %v1257 = vld [vmem:[%s784 + $0x60] sm:$0xe]
        %v1258 = vld [vmem:[%s784 + $0x6c] sm:$0xe]
        %v1259 = vld [vmem:[%s784 + $0x78] sm:$0xe]
        %v1260 = vld [vmem:[%s784 + $0x84] sm:$0xe]
        %v1261 = vld [vmem:[%s784 + $0x90] sm:$0xe]
        %v1262 = vld [vmem:[%s784 + $0x9c] sm:$0xe]
        %v1263 = vld [vmem:[%s784 + $0xa8] sm:$0xe]
        %v1264 = vld [vmem:[%s784 + $0xb4] sm:$0xe]
        %v1313 = vrot.slane %v1249, 5
        %v1314 = vrot.slane %v1313, 4
        %v1315 = vrot.slane %v786, 5
        %v1316 = vsel %vm671, %v1314, %v1315
        %v1317 = vrot.slane %v1315, 4
        %v1318 = vrot.slane %v817, 5
        %v1319 = vsel %vm671, %v1317, %v1318
        %v1320 = vrot.slane %v1250, 5
        %v1321 = vrot.slane %v1320, 4
        %v1322 = vrot.slane %v788, 5
        %v1323 = vsel %vm671, %v1321, %v1322
        %v1324 = vrot.slane %v1322, 4
        %v1325 = vrot.slane %v818, 5
        %v1326 = vsel %vm671, %v1324, %v1325
        %v1327 = vrot.slane %v1251, 5
        %v1328 = vrot.slane %v1327, 4
        %v1329 = vrot.slane %v790, 5
        %v1330 = vsel %vm671, %v1328, %v1329
        %v1331 = vrot.slane %v1329, 4
        %v1332 = vrot.slane %v819, 5
        %v1333 = vsel %vm671, %v1331, %v1332
        %v1334 = vrot.slane %v1252, 5
        %v1335 = vrot.slane %v1334, 4
        %v1336 = vrot.slane %v792, 5
        %v1337 = vsel %vm671, %v1335, %v1336
        %v1338 = vrot.slane %v1336, 4
        %v1339 = vrot.slane %v820, 5
        %v1340 = vsel %vm671, %v1338, %v1339
        %v1341 = vrot.slane %v1253, 5
        %v1342 = vrot.slane %v1341, 4
        %v1343 = vrot.slane %v794, 5
        %v1344 = vsel %vm671, %v1342, %v1343
        %v1345 = vrot.slane %v1343, 4
        %v1346 = vrot.slane %v821, 5
        %v1347 = vsel %vm671, %v1345, %v1346
        %v1348 = vrot.slane %v1254, 5
        %v1349 = vrot.slane %v1348, 4
        %v1350 = vrot.slane %v796, 5
        %v1351 = vsel %vm671, %v1349, %v1350
        %v1352 = vrot.slane %v1350, 4
        %v1353 = vrot.slane %v822, 5
        %v1354 = vsel %vm671, %v1352, %v1353
        %v1355 = vrot.slane %v1255, 5
        %v1356 = vrot.slane %v1355, 4
        %v1357 = vrot.slane %v798, 5
        %v1358 = vsel %vm671, %v1356, %v1357
        %v1359 = vrot.slane %v1357, 4
        %v1360 = vrot.slane %v823, 5
        %v1361 = vsel %vm671, %v1359, %v1360
        %v1362 = vrot.slane %v1256, 5
        %v1363 = vrot.slane %v1362, 4
        %v1364 = vrot.slane %v800, 5
        %v1365 = vsel %vm671, %v1363, %v1364
        %v1366 = vrot.slane %v1364, 4
        %v1367 = vrot.slane %v824, 5
        %v1368 = vsel %vm671, %v1366, %v1367
        %v1369 = vrot.slane %v1257, 5
        %v1370 = vrot.slane %v1369, 4
        %v1371 = vrot.slane %v802, 5
        %v1372 = vsel %vm671, %v1370, %v1371
        %v1373 = vrot.slane %v1371, 4
        %v1374 = vrot.slane %v825, 5
        %v1375 = vsel %vm671, %v1373, %v1374
        %v1376 = vrot.slane %v1258, 5
        %v1377 = vrot.slane %v1376, 4
        %v1378 = vrot.slane %v804, 5
        %v1379 = vsel %vm671, %v1377, %v1378
        %v1380 = vrot.slane %v1378, 4
        %v1381 = vrot.slane %v826, 5
        %v1382 = vsel %vm671, %v1380, %v1381
        %v1383 = vrot.slane %v1259, 5
        %v1384 = vrot.slane %v1383, 4
        %v1385 = vrot.slane %v806, 5
        %v1386 = vsel %vm671, %v1384, %v1385
        %v1387 = vrot.slane %v1385, 4
        %v1388 = vrot.slane %v827, 5
        %v1389 = vsel %vm671, %v1387, %v1388
        %v1390 = vrot.slane %v1260, 5
        %v1391 = vrot.slane %v1390, 4
        %v1392 = vrot.slane %v808, 5
        %v1393 = vsel %vm671, %v1391, %v1392
        %v1394 = vrot.slane %v1392, 4
        %v1395 = vrot.slane %v828, 5
        %v1396 = vsel %vm671, %v1394, %v1395
        %v1397 = vrot.slane %v1261, 5
        %v1398 = vrot.slane %v1397, 4
        %v1399 = vrot.slane %v810, 5
        %v1400 = vsel %vm671, %v1398, %v1399
        %v1401 = vrot.slane %v1399, 4
        %v1402 = vrot.slane %v829, 5
        %v1403 = vsel %vm671, %v1401, %v1402
        %v1404 = vrot.slane %v1262, 5
        %v1405 = vrot.slane %v1404, 4
        %v1406 = vrot.slane %v812, 5
        %v1407 = vsel %vm671, %v1405, %v1406
        %v1408 = vrot.slane %v1406, 4
        %v1409 = vrot.slane %v830, 5
        %v1410 = vsel %vm671, %v1408, %v1409
        %v1411 = vrot.slane %v1263, 5
        %v1412 = vrot.slane %v1411, 4
        %v1413 = vrot.slane %v814, 5
        %v1414 = vsel %vm671, %v1412, %v1413
        %v1415 = vrot.slane %v1413, 4
        %v1416 = vrot.slane %v831, 5
        %v1417 = vsel %vm671, %v1415, %v1416
        %v1418 = vrot.slane %v1264, 5
        %v1419 = vrot.slane %v1418, 4
        %v1420 = vrot.slane %v816, 5
        %v1421 = vsel %vm671, %v1419, %v1420
        %v1422 = vrot.slane %v1420, 4
        %v1423 = vrot.slane %v832, 5
        %v1424 = vsel %vm671, %v1422, %v1423
        %s1425 = scalar_lea.vmem %s168, 24
        %v1426 = vld [vmem:[%s1425] sm:$0xf]
        %v1427 = vld [vmem:[%s1425 + $0x4] sm:$0xf]
        %v1428 = vld [vmem:[%s1425 + $0xc] sm:$0xf]
        %v1429 = vld [vmem:[%s1425 + $0x10] sm:$0xf]
        %v1430 = vld [vmem:[%s1425 + $0x18] sm:$0xf]
        %v1431 = vld [vmem:[%s1425 + $0x1c] sm:$0xf]
        %v1432 = vld [vmem:[%s1425 + $0x24] sm:$0xf]
        %v1433 = vld [vmem:[%s1425 + $0x28] sm:$0xf]
        %v1434 = vld [vmem:[%s1425 + $0x30] sm:$0xf]
        %v1435 = vld [vmem:[%s1425 + $0x34] sm:$0xf]
        %v1436 = vld [vmem:[%s1425 + $0x3c] sm:$0xf]
        %v1437 = vld [vmem:[%s1425 + $0x40] sm:$0xf]
        %v1438 = vld [vmem:[%s1425 + $0x48] sm:$0xf]
        %v1439 = vld [vmem:[%s1425 + $0x4c] sm:$0xf]
        %v1440 = vld [vmem:[%s1425 + $0x54] sm:$0xf]
        %v1441 = vld [vmem:[%s1425 + $0x58] sm:$0xf]
        %v1442 = vld [vmem:[%s1425 + $0x60] sm:$0xf]
        %v1443 = vld [vmem:[%s1425 + $0x64] sm:$0xf]
        %v1444 = vld [vmem:[%s1425 + $0x6c] sm:$0xf]
        %v1445 = vld [vmem:[%s1425 + $0x70] sm:$0xf]
        %v1446 = vld [vmem:[%s1425 + $0x78] sm:$0xf]
        %v1447 = vld [vmem:[%s1425 + $0x7c] sm:$0xf]
        %v1448 = vld [vmem:[%s1425 + $0x84] sm:$0xf]
        %v1449 = vld [vmem:[%s1425 + $0x88] sm:$0xf]
        %v1450 = vld [vmem:[%s1425 + $0x90] sm:$0xf]
        %v1451 = vld [vmem:[%s1425 + $0x94] sm:$0xf]
        %v1452 = vld [vmem:[%s1425 + $0x9c] sm:$0xf]
        %v1453 = vld [vmem:[%s1425 + $0xa0] sm:$0xf]
        %v1454 = vld [vmem:[%s1425 + $0xa8] sm:$0xf]
        %v1455 = vld [vmem:[%s1425 + $0xac] sm:$0xf]
        %v1456 = vld [vmem:[%s1425 + $0xb4] sm:$0xf]
        %v1457 = vld [vmem:[%s1425 + $0xb8] sm:$0xf]
        %v1458 = vld [vmem:[%s1425 + $0x8] sm:$0x1]
        %v1459 = vld [vmem:[%s1425 + $0x14] sm:$0x1]
        %v1460 = vld [vmem:[%s1425 + $0x20] sm:$0x1]
        %v1461 = vld [vmem:[%s1425 + $0x2c] sm:$0x1]
        %v1462 = vld [vmem:[%s1425 + $0x38] sm:$0x1]
        %v1463 = vld [vmem:[%s1425 + $0x44] sm:$0x1]
        %v1464 = vld [vmem:[%s1425 + $0x50] sm:$0x1]
        %v1465 = vld [vmem:[%s1425 + $0x5c] sm:$0x1]
        %v1466 = vld [vmem:[%s1425 + $0x68] sm:$0x1]
        %v1467 = vld [vmem:[%s1425 + $0x74] sm:$0x1]
        %v1468 = vld [vmem:[%s1425 + $0x80] sm:$0x1]
        %v1469 = vld [vmem:[%s1425 + $0x8c] sm:$0x1]
        %v1470 = vld [vmem:[%s1425 + $0x98] sm:$0x1]
        %v1471 = vld [vmem:[%s1425 + $0xa4] sm:$0x1]
        %v1472 = vld [vmem:[%s1425 + $0xb0] sm:$0x1]
        %v1473 = vld [vmem:[%s1425 + $0xbc] sm:$0x1]
        %v1475 = vshrl.u32 %v1426, 16
        %v1477 = vrot.slane %v1475, 4
        %v1478 = vshll.u32 %v1426, 16
        %v1480 = vrot.slane %v1478, 5
        %v1481 = vor.u32 %v1477, %v1480
        %v1482 = vrot.slane %v1481, 4
        %v1484 = vshll.u32 %v1427, 16
        %v1486 = vrot.slane %v1484, 5
        %v1487 = vsel %vm220, %v1482, %v1486
        %v1488 = vshrl.u32 %v1427, 16
        %v1490 = vrot.slane %v1488, 4
        %v1491 = vor.u32 %v1490, %v1486
        %v1492 = vrot.slane %v1491, 4
        %v1494 = vshll.u32 %v1458, 16
        %v1496 = vrot.slane %v1494, 5
        %v1497 = vsel %vm220, %v1492, %v1496
        %v1499 = vshrl.u32 %v1428, 16
        %v1501 = vrot.slane %v1499, 4
        %v1502 = vshll.u32 %v1428, 16
        %v1504 = vrot.slane %v1502, 5
        %v1505 = vor.u32 %v1501, %v1504
        %v1506 = vrot.slane %v1505, 4
        %v1508 = vshll.u32 %v1429, 16
        %v1510 = vrot.slane %v1508, 5
        %v1511 = vsel %vm220, %v1506, %v1510
        %v1512 = vshrl.u32 %v1429, 16
        %v1514 = vrot.slane %v1512, 4
        %v1515 = vor.u32 %v1514, %v1510
        %v1516 = vrot.slane %v1515, 4
        %v1518 = vshll.u32 %v1459, 16
        %v1520 = vrot.slane %v1518, 5
        %v1521 = vsel %vm220, %v1516, %v1520
        %v1523 = vshrl.u32 %v1430, 16
        %v1525 = vrot.slane %v1523, 4
        %v1526 = vshll.u32 %v1430, 16
        %v1528 = vrot.slane %v1526, 5
        %v1529 = vor.u32 %v1525, %v1528
        %v1530 = vrot.slane %v1529, 4
        %v1532 = vshll.u32 %v1431, 16
        %v1534 = vrot.slane %v1532, 5
        %v1535 = vsel %vm220, %v1530, %v1534
        %v1536 = vshrl.u32 %v1431, 16
        %v1538 = vrot.slane %v1536, 4
        %v1539 = vor.u32 %v1538, %v1534
        %v1540 = vrot.slane %v1539, 4
        %v1542 = vshll.u32 %v1460, 16
        %v1544 = vrot.slane %v1542, 5
        %v1545 = vsel %vm220, %v1540, %v1544
        %v1547 = vshrl.u32 %v1432, 16
        %v1549 = vrot.slane %v1547, 4
        %v1550 = vshll.u32 %v1432, 16
        %v1552 = vrot.slane %v1550, 5
        %v1553 = vor.u32 %v1549, %v1552
        %v1554 = vrot.slane %v1553, 4
        %v1556 = vshll.u32 %v1433, 16
        %v1558 = vrot.slane %v1556, 5
        %v1559 = vsel %vm220, %v1554, %v1558
        %v1560 = vshrl.u32 %v1433, 16
        %v1562 = vrot.slane %v1560, 4
        %v1563 = vor.u32 %v1562, %v1558
        %v1564 = vrot.slane %v1563, 4
        %v1566 = vshll.u32 %v1461, 16
        %v1568 = vrot.slane %v1566, 5
        %v1569 = vsel %vm220, %v1564, %v1568
        %v1571 = vshrl.u32 %v1434, 16
        %v1573 = vrot.slane %v1571, 4
        %v1574 = vshll.u32 %v1434, 16
        %v1576 = vrot.slane %v1574, 5
        %v1577 = vor.u32 %v1573, %v1576
        %v1578 = vrot.slane %v1577, 4
        %v1580 = vshll.u32 %v1435, 16
        %v1582 = vrot.slane %v1580, 5
        %v1583 = vsel %vm220, %v1578, %v1582
        %v1584 = vshrl.u32 %v1435, 16
        %v1586 = vrot.slane %v1584, 4
        %v1587 = vor.u32 %v1586, %v1582
        %v1588 = vrot.slane %v1587, 4
        %v1590 = vshll.u32 %v1462, 16
        %v1592 = vrot.slane %v1590, 5
        %v1593 = vsel %vm220, %v1588, %v1592
        %v1595 = vshrl.u32 %v1436, 16
        %v1597 = vrot.slane %v1595, 4
        %v1598 = vshll.u32 %v1436, 16
        %v1600 = vrot.slane %v1598, 5
        %v1601 = vor.u32 %v1597, %v1600
        %v1602 = vrot.slane %v1601, 4
        %v1604 = vshll.u32 %v1437, 16
        %v1606 = vrot.slane %v1604, 5
        %v1607 = vsel %vm220, %v1602, %v1606
        %v1608 = vshrl.u32 %v1437, 16
        %v1610 = vrot.slane %v1608, 4
        %v1611 = vor.u32 %v1610, %v1606
        %v1612 = vrot.slane %v1611, 4
        %v1614 = vshll.u32 %v1463, 16
        %v1616 = vrot.slane %v1614, 5
        %v1617 = vsel %vm220, %v1612, %v1616
        %v1619 = vshrl.u32 %v1438, 16
        %v1621 = vrot.slane %v1619, 4
        %v1622 = vshll.u32 %v1438, 16
        %v1624 = vrot.slane %v1622, 5
        %v1625 = vor.u32 %v1621, %v1624
        %v1626 = vrot.slane %v1625, 4
        %v1628 = vshll.u32 %v1439, 16
        %v1630 = vrot.slane %v1628, 5
        %v1631 = vsel %vm220, %v1626, %v1630
        %v1632 = vshrl.u32 %v1439, 16
        %v1634 = vrot.slane %v1632, 4
        %v1635 = vor.u32 %v1634, %v1630
        %v1636 = vrot.slane %v1635, 4
        %v1638 = vshll.u32 %v1464, 16
        %v1640 = vrot.slane %v1638, 5
        %v1641 = vsel %vm220, %v1636, %v1640
        %v1643 = vshrl.u32 %v1440, 16
        %v1645 = vrot.slane %v1643, 4
        %v1646 = vshll.u32 %v1440, 16
        %v1648 = vrot.slane %v1646, 5
        %v1649 = vor.u32 %v1645, %v1648
        %v1650 = vrot.slane %v1649, 4
        %v1652 = vshll.u32 %v1441, 16
        %v1654 = vrot.slane %v1652, 5
        %v1655 = vsel %vm220, %v1650, %v1654
        %v1656 = vshrl.u32 %v1441, 16
        %v1658 = vrot.slane %v1656, 4
        %v1659 = vor.u32 %v1658, %v1654
        %v1660 = vrot.slane %v1659, 4
        %v1662 = vshll.u32 %v1465, 16
        %v1664 = vrot.slane %v1662, 5
        %v1665 = vsel %vm220, %v1660, %v1664
        %v1667 = vshrl.u32 %v1442, 16
        %v1669 = vrot.slane %v1667, 4
        %v1670 = vshll.u32 %v1442, 16
        %v1672 = vrot.slane %v1670, 5
        %v1673 = vor.u32 %v1669, %v1672
        %v1674 = vrot.slane %v1673, 4
        %v1676 = vshll.u32 %v1443, 16
        %v1678 = vrot.slane %v1676, 5
        %v1679 = vsel %vm220, %v1674, %v1678
        %v1680 = vshrl.u32 %v1443, 16
        %v1682 = vrot.slane %v1680, 4
        %v1683 = vor.u32 %v1682, %v1678
        %v1684 = vrot.slane %v1683, 4
        %v1686 = vshll.u32 %v1466, 16
        %v1688 = vrot.slane %v1686, 5
        %v1689 = vsel %vm220, %v1684, %v1688
        %v1691 = vshrl.u32 %v1444, 16
        %v1693 = vrot.slane %v1691, 4
        %v1694 = vshll.u32 %v1444, 16
        %v1696 = vrot.slane %v1694, 5
        %v1697 = vor.u32 %v1693, %v1696
        %v1698 = vrot.slane %v1697, 4
        %v1700 = vshll.u32 %v1445, 16
        %v1702 = vrot.slane %v1700, 5
        %v1703 = vsel %vm220, %v1698, %v1702
        %v1704 = vshrl.u32 %v1445, 16
        %v1706 = vrot.slane %v1704, 4
        %v1707 = vor.u32 %v1706, %v1702
        %v1708 = vrot.slane %v1707, 4
        %v1710 = vshll.u32 %v1467, 16
        %v1712 = vrot.slane %v1710, 5
        %v1713 = vsel %vm220, %v1708, %v1712
        %v1715 = vshrl.u32 %v1446, 16
        %v1717 = vrot.slane %v1715, 4
        %v1718 = vshll.u32 %v1446, 16
        %v1720 = vrot.slane %v1718, 5
        %v1721 = vor.u32 %v1717, %v1720
        %v1722 = vrot.slane %v1721, 4
        %v1724 = vshll.u32 %v1447, 16
        %v1726 = vrot.slane %v1724, 5
        %v1727 = vsel %vm220, %v1722, %v1726
        %v1728 = vshrl.u32 %v1447, 16
        %v1730 = vrot.slane %v1728, 4
        %v1731 = vor.u32 %v1730, %v1726
        %v1732 = vrot.slane %v1731, 4
        %v1734 = vshll.u32 %v1468, 16
        %v1736 = vrot.slane %v1734, 5
        %v1737 = vsel %vm220, %v1732, %v1736
        %v1739 = vshrl.u32 %v1448, 16
        %v1741 = vrot.slane %v1739, 4
        %v1742 = vshll.u32 %v1448, 16
        %v1744 = vrot.slane %v1742, 5
        %v1745 = vor.u32 %v1741, %v1744
        %v1746 = vrot.slane %v1745, 4
        %v1748 = vshll.u32 %v1449, 16
        %v1750 = vrot.slane %v1748, 5
        %v1751 = vsel %vm220, %v1746, %v1750
        %v1752 = vshrl.u32 %v1449, 16
        %v1754 = vrot.slane %v1752, 4
        %v1755 = vor.u32 %v1754, %v1750
        %v1756 = vrot.slane %v1755, 4
        %v1758 = vshll.u32 %v1469, 16
        %v1760 = vrot.slane %v1758, 5
        %v1761 = vsel %vm220, %v1756, %v1760
        %v1763 = vshrl.u32 %v1450, 16
        %v1765 = vrot.slane %v1763, 4
        %v1766 = vshll.u32 %v1450, 16
        %v1768 = vrot.slane %v1766, 5
        %v1769 = vor.u32 %v1765, %v1768
        %v1770 = vrot.slane %v1769, 4
        %v1772 = vshll.u32 %v1451, 16
        %v1774 = vrot.slane %v1772, 5
        %v1775 = vsel %vm220, %v1770, %v1774
        %v1776 = vshrl.u32 %v1451, 16
        %v1778 = vrot.slane %v1776, 4
        %v1779 = vor.u32 %v1778, %v1774
        %v1780 = vrot.slane %v1779, 4
        %v1782 = vshll.u32 %v1470, 16
        %v1784 = vrot.slane %v1782, 5
        %v1785 = vsel %vm220, %v1780, %v1784
        %v1787 = vshrl.u32 %v1452, 16
        %v1789 = vrot.slane %v1787, 4
        %v1790 = vshll.u32 %v1452, 16
        %v1792 = vrot.slane %v1790, 5
        %v1793 = vor.u32 %v1789, %v1792
        %v1794 = vrot.slane %v1793, 4
        %v1796 = vshll.u32 %v1453, 16
        %v1798 = vrot.slane %v1796, 5
        %v1799 = vsel %vm220, %v1794, %v1798
        %v1800 = vshrl.u32 %v1453, 16
        %v1802 = vrot.slane %v1800, 4
        %v1803 = vor.u32 %v1802, %v1798
        %v1804 = vrot.slane %v1803, 4
        %v1806 = vshll.u32 %v1471, 16
        %v1808 = vrot.slane %v1806, 5
        %v1809 = vsel %vm220, %v1804, %v1808
        %v1811 = vshrl.u32 %v1454, 16
        %v1813 = vrot.slane %v1811, 4
        %v1814 = vshll.u32 %v1454, 16
        %v1816 = vrot.slane %v1814, 5
        %v1817 = vor.u32 %v1813, %v1816
        %v1818 = vrot.slane %v1817, 4
        %v1820 = vshll.u32 %v1455, 16
        %v1822 = vrot.slane %v1820, 5
        %v1823 = vsel %vm220, %v1818, %v1822
        %v1824 = vshrl.u32 %v1455, 16
        %v1826 = vrot.slane %v1824, 4
        %v1827 = vor.u32 %v1826, %v1822
        %v1828 = vrot.slane %v1827, 4
        %v1830 = vshll.u32 %v1472, 16
        %v1832 = vrot.slane %v1830, 5
        %v1833 = vsel %vm220, %v1828, %v1832
        %v1835 = vshrl.u32 %v1456, 16
        %v1837 = vrot.slane %v1835, 4
        %v1838 = vshll.u32 %v1456, 16
        %v1840 = vrot.slane %v1838, 5
        %v1841 = vor.u32 %v1837, %v1840
        %v1842 = vrot.slane %v1841, 4
        %v1844 = vshll.u32 %v1457, 16
        %v1846 = vrot.slane %v1844, 5
        %v1847 = vsel %vm220, %v1842, %v1846
        %v1848 = vshrl.u32 %v1457, 16
        %v1850 = vrot.slane %v1848, 4
        %v1851 = vor.u32 %v1850, %v1846
        %v1852 = vrot.slane %v1851, 4
        %v1854 = vshll.u32 %v1473, 16
        %v1856 = vrot.slane %v1854, 5
        %v1857 = vsel %vm220, %v1852, %v1856
        %v1858 = vld [vmem:[%s1425] sm:$0xe]
        %v1859 = vld [vmem:[%s1425 + $0xc] sm:$0xe]
        %v1860 = vld [vmem:[%s1425 + $0x18] sm:$0xe]
        %v1861 = vld [vmem:[%s1425 + $0x24] sm:$0xe]
        %v1862 = vld [vmem:[%s1425 + $0x30] sm:$0xe]
        %v1863 = vld [vmem:[%s1425 + $0x3c] sm:$0xe]
        %v1864 = vld [vmem:[%s1425 + $0x48] sm:$0xe]
        %v1865 = vld [vmem:[%s1425 + $0x54] sm:$0xe]
        %v1866 = vld [vmem:[%s1425 + $0x60] sm:$0xe]
        %v1867 = vld [vmem:[%s1425 + $0x6c] sm:$0xe]
        %v1868 = vld [vmem:[%s1425 + $0x78] sm:$0xe]
        %v1869 = vld [vmem:[%s1425 + $0x84] sm:$0xe]
        %v1870 = vld [vmem:[%s1425 + $0x90] sm:$0xe]
        %v1871 = vld [vmem:[%s1425 + $0x9c] sm:$0xe]
        %v1872 = vld [vmem:[%s1425 + $0xa8] sm:$0xe]
        %v1873 = vld [vmem:[%s1425 + $0xb4] sm:$0xe]
        %v1922 = vrot.slane %v1858, 5
        %v1923 = vrot.slane %v1922, 4
        %v1924 = vrot.slane %v1427, 5
        %v1925 = vsel %vm671, %v1923, %v1924
        %v1926 = vrot.slane %v1924, 4
        %v1927 = vrot.slane %v1458, 5
        %v1928 = vsel %vm671, %v1926, %v1927
        %v1929 = vrot.slane %v1859, 5
        %v1930 = vrot.slane %v1929, 4
        %v1931 = vrot.slane %v1429, 5
        %v1932 = vsel %vm671, %v1930, %v1931
        %v1933 = vrot.slane %v1931, 4
        %v1934 = vrot.slane %v1459, 5
        %v1935 = vsel %vm671, %v1933, %v1934
        %v1936 = vrot.slane %v1860, 5
        %v1937 = vrot.slane %v1936, 4
        %v1938 = vrot.slane %v1431, 5
        %v1939 = vsel %vm671, %v1937, %v1938
        %v1940 = vrot.slane %v1938, 4
        %v1941 = vrot.slane %v1460, 5
        %v1942 = vsel %vm671, %v1940, %v1941
        %v1943 = vrot.slane %v1861, 5
        %v1944 = vrot.slane %v1943, 4
        %v1945 = vrot.slane %v1433, 5
        %v1946 = vsel %vm671, %v1944, %v1945
        %v1947 = vrot.slane %v1945, 4
        %v1948 = vrot.slane %v1461, 5
        %v1949 = vsel %vm671, %v1947, %v1948
        %v1950 = vrot.slane %v1862, 5
        %v1951 = vrot.slane %v1950, 4
        %v1952 = vrot.slane %v1435, 5
        %v1953 = vsel %vm671, %v1951, %v1952
        %v1954 = vrot.slane %v1952, 4
        %v1955 = vrot.slane %v1462, 5
        %v1956 = vsel %vm671, %v1954, %v1955
        %v1957 = vrot.slane %v1863, 5
        %v1958 = vrot.slane %v1957, 4
        %v1959 = vrot.slane %v1437, 5
        %v1960 = vsel %vm671, %v1958, %v1959
        %v1961 = vrot.slane %v1959, 4
        %v1962 = vrot.slane %v1463, 5
        %v1963 = vsel %vm671, %v1961, %v1962
        %v1964 = vrot.slane %v1864, 5
        %v1965 = vrot.slane %v1964, 4
        %v1966 = vrot.slane %v1439, 5
        %v1967 = vsel %vm671, %v1965, %v1966
        %v1968 = vrot.slane %v1966, 4
        %v1969 = vrot.slane %v1464, 5
        %v1970 = vsel %vm671, %v1968, %v1969
        %v1971 = vrot.slane %v1865, 5
        %v1972 = vrot.slane %v1971, 4
        %v1973 = vrot.slane %v1441, 5
        %v1974 = vsel %vm671, %v1972, %v1973
        %v1975 = vrot.slane %v1973, 4
        %v1976 = vrot.slane %v1465, 5
        %v1977 = vsel %vm671, %v1975, %v1976
        %v1978 = vrot.slane %v1866, 5
        %v1979 = vrot.slane %v1978, 4
        %v1980 = vrot.slane %v1443, 5
        %v1981 = vsel %vm671, %v1979, %v1980
        %v1982 = vrot.slane %v1980, 4
        %v1983 = vrot.slane %v1466, 5
        %v1984 = vsel %vm671, %v1982, %v1983
        %v1985 = vrot.slane %v1867, 5
        %v1986 = vrot.slane %v1985, 4
        %v1987 = vrot.slane %v1445, 5
        %v1988 = vsel %vm671, %v1986, %v1987
        %v1989 = vrot.slane %v1987, 4
        %v1990 = vrot.slane %v1467, 5
        %v1991 = vsel %vm671, %v1989, %v1990
        %v1992 = vrot.slane %v1868, 5
        %v1993 = vrot.slane %v1992, 4
        %v1994 = vrot.slane %v1447, 5
        %v1995 = vsel %vm671, %v1993, %v1994
        %v1996 = vrot.slane %v1994, 4
        %v1997 = vrot.slane %v1468, 5
        %v1998 = vsel %vm671, %v1996, %v1997
        %v1999 = vrot.slane %v1869, 5
        %v2000 = vrot.slane %v1999, 4
        %v2001 = vrot.slane %v1449, 5
        %v2002 = vsel %vm671, %v2000, %v2001
        %v2003 = vrot.slane %v2001, 4
        %v2004 = vrot.slane %v1469, 5
        %v2005 = vsel %vm671, %v2003, %v2004
        %v2006 = vrot.slane %v1870, 5
        %v2007 = vrot.slane %v2006, 4
        %v2008 = vrot.slane %v1451, 5
        %v2009 = vsel %vm671, %v2007, %v2008
        %v2010 = vrot.slane %v2008, 4
        %v2011 = vrot.slane %v1470, 5
        %v2012 = vsel %vm671, %v2010, %v2011
        %v2013 = vrot.slane %v1871, 5
        %v2014 = vrot.slane %v2013, 4
        %v2015 = vrot.slane %v1453, 5
        %v2016 = vsel %vm671, %v2014, %v2015
        %v2017 = vrot.slane %v2015, 4
        %v2018 = vrot.slane %v1471, 5
        %v2019 = vsel %vm671, %v2017, %v2018
        %v2020 = vrot.slane %v1872, 5
        %v2021 = vrot.slane %v2020, 4
        %v2022 = vrot.slane %v1455, 5
        %v2023 = vsel %vm671, %v2021, %v2022
        %v2024 = vrot.slane %v2022, 4
        %v2025 = vrot.slane %v1472, 5
        %v2026 = vsel %vm671, %v2024, %v2025
        %v2027 = vrot.slane %v1873, 5
        %v2028 = vrot.slane %v2027, 4
        %v2029 = vrot.slane %v1457, 5
        %v2030 = vsel %vm671, %v2028, %v2029
        %v2031 = vrot.slane %v2029, 4
        %v2032 = vrot.slane %v1473, 5
        %v2033 = vsel %vm671, %v2031, %v2032
        %v2034 = vld [vmem:[%s1] sm:$0xf]
        %v2035 = vld [vmem:[%s1 + $0x4] sm:$0xf]
        %v2036 = vld [vmem:[%s1 + $0x8] sm:$0xf]
        %v2037 = vld [vmem:[%s1 + $0xc] sm:$0xf]
        %v2038 = vld [vmem:[%s1 + $0x10] sm:$0xf]
        %v2039 = vld [vmem:[%s1 + $0x14] sm:$0xf]
        %v2040 = vld [vmem:[%s1 + $0x18] sm:$0xf]
        %v2041 = vld [vmem:[%s1 + $0x1c] sm:$0xf]
        %v2042 = vld [vmem:[%s1 + $0x20] sm:$0xf]
        %v2043 = vld [vmem:[%s1 + $0x24] sm:$0xf]
        %v2044 = vld [vmem:[%s1 + $0x28] sm:$0xf]
        %v2045 = vld [vmem:[%s1 + $0x2c] sm:$0xf]
        %v2046 = vld [vmem:[%s1 + $0x30] sm:$0xf]
        %v2047 = vld [vmem:[%s1 + $0x34] sm:$0xf]
        %v2048 = vld [vmem:[%s1 + $0x38] sm:$0xf]
        %v2049 = vld [vmem:[%s1 + $0x3c] sm:$0xf]
        %s2050 = scalar_lea.vmem %s1, 64
        %v2051 = vld [vmem:[%s2050] sm:$0xf]
        %v2052 = vld [vmem:[%s2050 + $0x4] sm:$0xf]
        %v2053 = vld [vmem:[%s2050 + $0x8] sm:$0xf]
        %v2054 = vld [vmem:[%s2050 + $0xc] sm:$0xf]
        %v2055 = vld [vmem:[%s2050 + $0x10] sm:$0xf]
        %v2056 = vld [vmem:[%s2050 + $0x14] sm:$0xf]
        %v2057 = vld [vmem:[%s2050 + $0x18] sm:$0xf]
        %v2058 = vld [vmem:[%s2050 + $0x1c] sm:$0xf]
        %v2059 = vld [vmem:[%s2050 + $0x20] sm:$0xf]
        %v2060 = vld [vmem:[%s2050 + $0x24] sm:$0xf]
        %v2061 = vld [vmem:[%s2050 + $0x28] sm:$0xf]
        %v2062 = vld [vmem:[%s2050 + $0x2c] sm:$0xf]
        %v2063 = vld [vmem:[%s2050 + $0x30] sm:$0xf]
        %v2064 = vld [vmem:[%s2050 + $0x34] sm:$0xf]
        %v2065 = vld [vmem:[%s2050 + $0x38] sm:$0xf]
        %v2066 = vld [vmem:[%s2050 + $0x3c] sm:$0xf]
        %v2067 = vunpack.c.l.b16 %v234
        %v2068 = vunpack.c.l.b16 %v244
        %v2069 = vunpack.c.l.b16 %v258
        %v2070 = vunpack.c.l.b16 %v268
        %v2071 = vunpack.c.l.b16 %v282
        %v2072 = vunpack.c.l.b16 %v292
        %v2073 = vunpack.c.l.b16 %v306
        %v2074 = vunpack.c.l.b16 %v316
        %v2075 = vunpack.c.l.b16 %v330
        %v2076 = vunpack.c.l.b16 %v340
        %v2077 = vunpack.c.l.b16 %v354
        %v2078 = vunpack.c.l.b16 %v364
        %v2079 = vunpack.c.l.b16 %v378
        %v2080 = vunpack.c.l.b16 %v388
        %v2081 = vunpack.c.l.b16 %v402
        %v2082 = vunpack.c.l.b16 %v412
        %v2083 = vunpack.c.l.b16 %v426
        %v2084 = vunpack.c.l.b16 %v436
        %v2085 = vunpack.c.l.b16 %v450
        %v2086 = vunpack.c.l.b16 %v460
        %v2087 = vunpack.c.l.b16 %v474
        %v2088 = vunpack.c.l.b16 %v484
        %v2089 = vunpack.c.l.b16 %v498
        %v2090 = vunpack.c.l.b16 %v508
        %v2091 = vunpack.c.l.b16 %v522
        %v2092 = vunpack.c.l.b16 %v532
        %v2093 = vunpack.c.l.b16 %v546
        %v2094 = vunpack.c.l.b16 %v556
        %v2095 = vunpack.c.l.b16 %v570
        %v2096 = vunpack.c.l.b16 %v580
        %v2097 = vunpack.c.l.b16 %v594
        %v2098 = vunpack.c.l.b16 %v604
        %v2099 = vpack.c.b16 %v2068, %v2067
        %v2100 = vpack.c.b16 %v2070, %v2069
        %v2101 = vpack.c.b16 %v2072, %v2071
        %v2102 = vpack.c.b16 %v2074, %v2073
        %v2103 = vpack.c.b16 %v2076, %v2075
        %v2104 = vpack.c.b16 %v2078, %v2077
        %v2105 = vpack.c.b16 %v2080, %v2079
        %v2106 = vpack.c.b16 %v2082, %v2081
        %v2107 = vpack.c.b16 %v2084, %v2083
        %v2108 = vpack.c.b16 %v2086, %v2085
        %v2109 = vpack.c.b16 %v2088, %v2087
        %v2110 = vpack.c.b16 %v2090, %v2089
        %v2111 = vpack.c.b16 %v2092, %v2091
        %v2112 = vpack.c.b16 %v2094, %v2093
        %v2113 = vpack.c.b16 %v2096, %v2095
        %v2114 = vpack.c.b16 %v2098, %v2097
        %v2147 = vunpack.c.l.b16 %v2051
        %v2148 = vunpack.c.l.b16 %v2052
        %v2149 = vunpack.c.l.b16 %v2053
        %v2150 = vunpack.c.l.b16 %v2054
        %v2151 = vunpack.c.l.b16 %v2055
        %v2152 = vunpack.c.l.b16 %v2056
        %v2153 = vunpack.c.l.b16 %v2057
        %v2154 = vunpack.c.l.b16 %v2058
        %v2155 = vunpack.c.l.b16 %v2059
        %v2156 = vunpack.c.l.b16 %v2060
        %v2157 = vunpack.c.l.b16 %v2061
        %v2158 = vunpack.c.l.b16 %v2062
        %v2159 = vunpack.c.l.b16 %v2063
        %v2160 = vunpack.c.l.b16 %v2064
        %v2161 = vunpack.c.l.b16 %v2065
        %v2162 = vunpack.c.l.b16 %v2066
        %v2163 = vpack.c.b16 %v2148, %v2147
        %v2164 = vpack.c.b16 %v2150, %v2149
        %v2165 = vpack.c.b16 %v2152, %v2151
        %v2166 = vpack.c.b16 %v2154, %v2153
        %v2167 = vpack.c.b16 %v2156, %v2155
        %v2168 = vpack.c.b16 %v2158, %v2157
        %v2169 = vpack.c.b16 %v2160, %v2159
        %v2170 = vpack.c.b16 %v2162, %v2161
        %2179 = vmatprep.subr.bf16.mxu0 0
        %2180 = vmatpush1.bf16.msra.mxu0 %v2163
        %2181 = vmatprep.subr.bf16.mxu0 0
        %2182 = vmatpush1.bf16.msra.mxu0 %v2164
        %2183 = vmatprep.subr.bf16.mxu0 0
        %2184 = vmatpush1.bf16.msra.mxu0 %v2165
        %2185 = vmatprep.subr.bf16.mxu0 0
        %2186 = vmatpush1.bf16.msra.mxu0 %v2166
        %2187 = vmatprep.subr.bf16.mxu0 0
        %2188 = vmatpush1.bf16.msra.mxu0 %v2167
        %2189 = vmatprep.subr.bf16.mxu0 0
        %2190 = vmatpush1.bf16.msra.mxu0 %v2168
        %2191 = vmatprep.subr.bf16.mxu0 0
        %2192 = vmatpush1.bf16.msra.mxu0 %v2169
        %2193 = vmatprep.subr.bf16.mxu0 0
        %2194 = vmatpush1.bf16.msra.mxu0 %v2170
        %2195 = vmatprep.subr.bf16.mxu0 0
        %2196 = vmatpush1.bf16.msra.mxu0 0
        %2197 = vmatprep.subr.bf16.mxu0 0
        %2198 = vmatpush1.bf16.msra.mxu0 0
        %2199 = vmatprep.subr.bf16.mxu0 0
        %2200 = vmatpush1.bf16.msra.mxu0 0
        %2201 = vmatprep.subr.bf16.mxu0 0
        %2202 = vmatpush1.bf16.msra.mxu0 0
        %2203 = vmatprep.subr.bf16.mxu0 0
        %2204 = vmatpush1.bf16.msra.mxu0 0
        %2205 = vmatprep.subr.bf16.mxu0 0
        %2206 = vmatpush1.bf16.msra.mxu0 0
        %2207 = vmatprep.subr.bf16.mxu0 0
        %2208 = vmatpush1.bf16.msra.mxu0 0
        %2209 = vmatprep.subr.bf16.mxu0 0
        %2210 = vmatpush1.bf16.msra.mxu0 0
        %2211 = vmatprep.mubr.bf16.mxu0 0
        %2212 = vmatmul.mubr.bf16.gmra.mrb[0].mxu0 %v2099
        %v2213 = vpop.f32.mrb[0].mxu0
        %v2214 = vadd.f32 0.0, %v2213
        %v2215 = vpop.f32.mrb[0].mxu0
        %v2216 = vpop.f32.mrb[0].mxu0
        %v2217 = vadd.f32 0.0, %v2216
        %v2218 = vpop.f32.mrb[0].mxu0
        %2219 = vmatprep.mubr.bf16.mxu0 0
        %2220 = vmatmul.mubr.bf16.gmra.mrb[0].mxu0 %v2100
        %v2221 = vpop.f32.mrb[0].mxu0
        %v2222 = vadd.f32 0.0, %v2221
        %v2223 = vpop.f32.mrb[0].mxu0
        %v2224 = vpop.f32.mrb[0].mxu0
        %v2225 = vadd.f32 0.0, %v2224
        %v2226 = vpop.f32.mrb[0].mxu0
        %2227 = vmatprep.mubr.bf16.mxu0 0
        %2228 = vmatmul.mubr.bf16.gmra.mrb[0].mxu0 %v2101
        %v2229 = vpop.f32.mrb[0].mxu0
        %v2230 = vadd.f32 0.0, %v2229
        %v2231 = vpop.f32.mrb[0].mxu0
        %v2232 = vpop.f32.mrb[0].mxu0
        %v2233 = vadd.f32 0.0, %v2232
        %v2234 = vpop.f32.mrb[0].mxu0
        %2235 = vmatprep.mubr.bf16.mxu0 0
        %2236 = vmatmul.mubr.bf16.gmra.mrb[0].mxu0 %v2102
        %v2237 = vpop.f32.mrb[0].mxu0
        %v2238 = vadd.f32 0.0, %v2237
        %v2239 = vpop.f32.mrb[0].mxu0
        %v2240 = vpop.f32.mrb[0].mxu0
        %v2241 = vadd.f32 0.0, %v2240
        %v2242 = vpop.f32.mrb[0].mxu0
        %2243 = vmatprep.mubr.bf16.mxu0 0
        %2244 = vmatmul.mubr.bf16.gmra.mrb[0].mxu0 %v2103
        %v2245 = vpop.f32.mrb[0].mxu0
        %v2246 = vadd.f32 0.0, %v2245
        %v2247 = vpop.f32.mrb[0].mxu0
        %v2248 = vpop.f32.mrb[0].mxu0
        %v2249 = vadd.f32 0.0, %v2248
        %v2250 = vpop.f32.mrb[0].mxu0
        %2251 = vmatprep.mubr.bf16.mxu0 0
        %2252 = vmatmul.mubr.bf16.gmra.mrb[0].mxu0 %v2104
        %v2253 = vpop.f32.mrb[0].mxu0
        %v2254 = vadd.f32 0.0, %v2253
        %v2255 = vpop.f32.mrb[0].mxu0
        %v2256 = vpop.f32.mrb[0].mxu0
        %v2257 = vadd.f32 0.0, %v2256
        %v2258 = vpop.f32.mrb[0].mxu0
        %2259 = vmatprep.mubr.bf16.mxu0 0
        %2260 = vmatmul.mubr.bf16.gmra.mrb[0].mxu0 %v2105
        %v2261 = vpop.f32.mrb[0].mxu0
        %v2262 = vadd.f32 0.0, %v2261
        %v2263 = vpop.f32.mrb[0].mxu0
        %v2264 = vpop.f32.mrb[0].mxu0
        %v2265 = vadd.f32 0.0, %v2264
        %v2266 = vpop.f32.mrb[0].mxu0
        %2267 = vmatprep.mubr.bf16.mxu0 0
        %2268 = vmatmul.mubr.bf16.gmra.mrb[0].mxu0 %v2106
        %v2269 = vpop.f32.mrb[0].mxu0
        %v2270 = vadd.f32 0.0, %v2269
        %v2271 = vpop.f32.mrb[0].mxu0
        %v2272 = vpop.f32.mrb[0].mxu0
        %v2273 = vadd.f32 0.0, %v2272
        %v2274 = vpop.f32.mrb[0].mxu0
        %2275 = vmatprep.mubr.bf16.mxu0 0
        %2276 = vmatmul.mubr.bf16.gmra.mrb[0].mxu0 %v2107
        %v2277 = vpop.f32.mrb[0].mxu0
        %v2278 = vadd.f32 0.0, %v2277
        %v2279 = vpop.f32.mrb[0].mxu0
        %v2280 = vpop.f32.mrb[0].mxu0
        %v2281 = vadd.f32 0.0, %v2280
        %v2282 = vpop.f32.mrb[0].mxu0
        %2283 = vmatprep.mubr.bf16.mxu0 0
        %2284 = vmatmul.mubr.bf16.gmra.mrb[0].mxu0 %v2108
        %v2285 = vpop.f32.mrb[0].mxu0
        %v2286 = vadd.f32 0.0, %v2285
        %v2287 = vpop.f32.mrb[0].mxu0
        %v2288 = vpop.f32.mrb[0].mxu0
        %v2289 = vadd.f32 0.0, %v2288
        %v2290 = vpop.f32.mrb[0].mxu0
        %2291 = vmatprep.mubr.bf16.mxu0 0
        %2292 = vmatmul.mubr.bf16.gmra.mrb[0].mxu0 %v2109
        %v2293 = vpop.f32.mrb[0].mxu0
        %v2294 = vadd.f32 0.0, %v2293
        %v2295 = vpop.f32.mrb[0].mxu0
        %v2296 = vpop.f32.mrb[0].mxu0
        %v2297 = vadd.f32 0.0, %v2296
        %v2298 = vpop.f32.mrb[0].mxu0
        %2299 = vmatprep.mubr.bf16.mxu0 0
        %2300 = vmatmul.mubr.bf16.gmra.mrb[0].mxu0 %v2110
        %v2301 = vpop.f32.mrb[0].mxu0
        %v2302 = vadd.f32 0.0, %v2301
        %v2303 = vpop.f32.mrb[0].mxu0
        %v2304 = vpop.f32.mrb[0].mxu0
        %v2305 = vadd.f32 0.0, %v2304
        %v2306 = vpop.f32.mrb[0].mxu0
        %2307 = vmatprep.mubr.bf16.mxu0 0
        %2308 = vmatmul.mubr.bf16.gmra.mrb[0].mxu0 %v2111
        %v2309 = vpop.f32.mrb[0].mxu0
        %v2310 = vadd.f32 0.0, %v2309
        %v2311 = vpop.f32.mrb[0].mxu0
        %v2312 = vpop.f32.mrb[0].mxu0
        %v2313 = vadd.f32 0.0, %v2312
        %v2314 = vpop.f32.mrb[0].mxu0
        %2315 = vmatprep.mubr.bf16.mxu0 0
        %2316 = vmatmul.mubr.bf16.gmra.mrb[0].mxu0 %v2112
        %v2317 = vpop.f32.mrb[0].mxu0
        %v2318 = vadd.f32 0.0, %v2317
        %v2319 = vpop.f32.mrb[0].mxu0
        %v2320 = vpop.f32.mrb[0].mxu0
        %v2321 = vadd.f32 0.0, %v2320
        %v2322 = vpop.f32.mrb[0].mxu0
        %2323 = vmatprep.mubr.bf16.mxu0 0
        %2324 = vmatmul.mubr.bf16.gmra.mrb[0].mxu0 %v2113
        %v2325 = vpop.f32.mrb[0].mxu0
        %v2326 = vadd.f32 0.0, %v2325
        %v2327 = vpop.f32.mrb[0].mxu0
        %v2328 = vpop.f32.mrb[0].mxu0
        %v2329 = vadd.f32 0.0, %v2328
        %v2330 = vpop.f32.mrb[0].mxu0
        %2331 = vmatprep.mubr.bf16.mxu0 0
        %2332 = vmatmul.mubr.bf16.gmra.mrb[0].mxu0 %v2114
        %v2333 = vpop.f32.mrb[0].mxu0
        %v2334 = vadd.f32 0.0, %v2333
        %v2335 = vpop.f32.mrb[0].mxu0
        %v2336 = vpop.f32.mrb[0].mxu0
        %v2337 = vadd.f32 0.0, %v2336
        %v2338 = vpop.f32.mrb[0].mxu0
        %2339 = vdwg.mxu0
        %v2356 = vunpack.c.l.b16 %v170
        %v2357 = vunpack.c.l.b16 %v171
        %v2358 = vunpack.c.l.b16 %v172
        %v2359 = vunpack.c.l.b16 %v173
        %v2360 = vunpack.c.l.b16 %v174
        %v2361 = vunpack.c.l.b16 %v175
        %v2362 = vunpack.c.l.b16 %v176
        %v2363 = vunpack.c.l.b16 %v177
        %v2364 = vunpack.c.l.b16 %v178
        %v2365 = vunpack.c.l.b16 %v179
        %v2366 = vunpack.c.l.b16 %v180
        %v2367 = vunpack.c.l.b16 %v181
        %v2368 = vunpack.c.l.b16 %v182
        %v2369 = vunpack.c.l.b16 %v183
        %v2370 = vunpack.c.l.b16 %v184
        %v2371 = vunpack.c.l.b16 %v185
        %v2372 = vunpack.c.l.b16 %v186
        %v2373 = vunpack.c.l.b16 %v187
        %v2374 = vunpack.c.l.b16 %v188
        %v2375 = vunpack.c.l.b16 %v189
        %v2376 = vunpack.c.l.b16 %v190
        %v2377 = vunpack.c.l.b16 %v191
        %v2378 = vunpack.c.l.b16 %v192
        %v2379 = vunpack.c.l.b16 %v193
        %v2380 = vunpack.c.l.b16 %v194
        %v2381 = vunpack.c.l.b16 %v195
        %v2382 = vunpack.c.l.b16 %v196
        %v2383 = vunpack.c.l.b16 %v197
        %v2384 = vunpack.c.l.b16 %v198
        %v2385 = vunpack.c.l.b16 %v199
        %v2386 = vunpack.c.l.b16 %v200
        %v2387 = vunpack.c.l.b16 %v201
        %v2388 = vpack.c.b16 %v2357, %v2356
        %v2389 = vpack.c.b16 %v2359, %v2358
        %v2390 = vpack.c.b16 %v2361, %v2360
        %v2391 = vpack.c.b16 %v2363, %v2362
        %v2392 = vpack.c.b16 %v2365, %v2364
        %v2393 = vpack.c.b16 %v2367, %v2366
        %v2394 = vpack.c.b16 %v2369, %v2368
        %v2395 = vpack.c.b16 %v2371, %v2370
        %v2396 = vpack.c.b16 %v2373, %v2372
        %v2397 = vpack.c.b16 %v2375, %v2374
        %v2398 = vpack.c.b16 %v2377, %v2376
        %v2399 = vpack.c.b16 %v2379, %v2378
        %v2400 = vpack.c.b16 %v2381, %v2380
        %v2401 = vpack.c.b16 %v2383, %v2382
        %v2402 = vpack.c.b16 %v2385, %v2384
        %v2403 = vpack.c.b16 %v2387, %v2386
        %v2436 = vunpack.c.l.b16 %v2034
        %v2437 = vunpack.c.l.b16 %v2035
        %v2438 = vunpack.c.l.b16 %v2036
        %v2439 = vunpack.c.l.b16 %v2037
        %v2440 = vunpack.c.l.b16 %v2038
        %v2441 = vunpack.c.l.b16 %v2039
        %v2442 = vunpack.c.l.b16 %v2040
        %v2443 = vunpack.c.l.b16 %v2041
        %v2444 = vunpack.c.l.b16 %v2042
        %v2445 = vunpack.c.l.b16 %v2043
        %v2446 = vunpack.c.l.b16 %v2044
        %v2447 = vunpack.c.l.b16 %v2045
        %v2448 = vunpack.c.l.b16 %v2046
        %v2449 = vunpack.c.l.b16 %v2047
        %v2450 = vunpack.c.l.b16 %v2048
        %v2451 = vunpack.c.l.b16 %v2049
        %v2452 = vpack.c.b16 %v2437, %v2436
        %v2453 = vpack.c.b16 %v2439, %v2438
        %v2454 = vpack.c.b16 %v2441, %v2440
        %v2455 = vpack.c.b16 %v2443, %v2442
        %v2456 = vpack.c.b16 %v2445, %v2444
        %v2457 = vpack.c.b16 %v2447, %v2446
        %v2458 = vpack.c.b16 %v2449, %v2448
        %v2459 = vpack.c.b16 %v2451, %v2450
        %2468 = vmatprep.subr.bf16.mxu0 0
        %2469 = vmatpush1.bf16.msra.mxu0 %v2452
        %2470 = vmatprep.subr.bf16.mxu0 0
        %2471 = vmatpush1.bf16.msra.mxu0 %v2453
        %2472 = vmatprep.subr.bf16.mxu0 0
        %2473 = vmatpush1.bf16.msra.mxu0 %v2454
        %2474 = vmatprep.subr.bf16.mxu0 0
        %2475 = vmatpush1.bf16.msra.mxu0 %v2455
        %2476 = vmatprep.subr.bf16.mxu0 0
        %2477 = vmatpush1.bf16.msra.mxu0 %v2456
        %2478 = vmatprep.subr.bf16.mxu0 0
        %2479 = vmatpush1.bf16.msra.mxu0 %v2457
        %2480 = vmatprep.subr.bf16.mxu0 0
        %2481 = vmatpush1.bf16.msra.mxu0 %v2458
        %2482 = vmatprep.subr.bf16.mxu0 0
        %2483 = vmatpush1.bf16.msra.mxu0 %v2459
        %2484 = vmatprep.subr.bf16.mxu0 0
        %2485 = vmatpush1.bf16.msra.mxu0 0
        %2486 = vmatprep.subr.bf16.mxu0 0
        %2487 = vmatpush1.bf16.msra.mxu0 0
        %2488 = vmatprep.subr.bf16.mxu0 0
        %2489 = vmatpush1.bf16.msra.mxu0 0
        %2490 = vmatprep.subr.bf16.mxu0 0
        %2491 = vmatpush1.bf16.msra.mxu0 0
        %2492 = vmatprep.subr.bf16.mxu0 0
        %2493 = vmatpush1.bf16.msra.mxu0 0
        %2494 = vmatprep.subr.bf16.mxu0 0
        %2495 = vmatpush1.bf16.msra.mxu0 0
        %2496 = vmatprep.subr.bf16.mxu0 0
        %2497 = vmatpush1.bf16.msra.mxu0 0
        %2498 = vmatprep.subr.bf16.mxu0 0
        %2499 = vmatpush1.bf16.msra.mxu0 0
        %2500 = vmatprep.mubr.bf16.mxu0 0
        %2501 = vmatmul.mubr.bf16.gmra.mrb[0].mxu0 %v2388
        %v2502 = vpop.f32.mrb[0].mxu0
        %v2503 = vadd.f32 %v2214, %v2502
        %v2504 = vpop.f32.mrb[0].mxu0
        %v2505 = vpop.f32.mrb[0].mxu0
        %v2506 = vadd.f32 %v2217, %v2505
        %v2507 = vpop.f32.mrb[0].mxu0
        %2508 = vmatprep.mubr.bf16.mxu0 0
        %2509 = vmatmul.mubr.bf16.gmra.mrb[0].mxu0 %v2389
        %v2510 = vpop.f32.mrb[0].mxu0
        %v2511 = vadd.f32 %v2222, %v2510
        %v2512 = vpop.f32.mrb[0].mxu0
        %v2513 = vpop.f32.mrb[0].mxu0
        %v2514 = vadd.f32 %v2225, %v2513
        %v2515 = vpop.f32.mrb[0].mxu0
        %2516 = vmatprep.mubr.bf16.mxu0 0
        %2517 = vmatmul.mubr.bf16.gmra.mrb[0].mxu0 %v2390
        %v2518 = vpop.f32.mrb[0].mxu0
        %v2519 = vadd.f32 %v2230, %v2518
        %v2520 = vpop.f32.mrb[0].mxu0
        %v2521 = vpop.f32.mrb[0].mxu0
        %v2522 = vadd.f32 %v2233, %v2521
        %v2523 = vpop.f32.mrb[0].mxu0
        %2524 = vmatprep.mubr.bf16.mxu0 0
        %2525 = vmatmul.mubr.bf16.gmra.mrb[0].mxu0 %v2391
        %v2526 = vpop.f32.mrb[0].mxu0
        %v2527 = vadd.f32 %v2238, %v2526
        %v2528 = vpop.f32.mrb[0].mxu0
        %v2529 = vpop.f32.mrb[0].mxu0
        %v2530 = vadd.f32 %v2241, %v2529
        %v2531 = vpop.f32.mrb[0].mxu0
        %2532 = vmatprep.mubr.bf16.mxu0 0
        %2533 = vmatmul.mubr.bf16.gmra.mrb[0].mxu0 %v2392
        %v2534 = vpop.f32.mrb[0].mxu0
        %v2535 = vadd.f32 %v2246, %v2534
        %v2536 = vpop.f32.mrb[0].mxu0
        %v2537 = vpop.f32.mrb[0].mxu0
        %v2538 = vadd.f32 %v2249, %v2537
        %v2539 = vpop.f32.mrb[0].mxu0
        %2540 = vmatprep.mubr.bf16.mxu0 0
        %2541 = vmatmul.mubr.bf16.gmra.mrb[0].mxu0 %v2393
        %v2542 = vpop.f32.mrb[0].mxu0
        %v2543 = vadd.f32 %v2254, %v2542
        %v2544 = vpop.f32.mrb[0].mxu0
        %v2545 = vpop.f32.mrb[0].mxu0
        %v2546 = vadd.f32 %v2257, %v2545
        %v2547 = vpop.f32.mrb[0].mxu0
        %2548 = vmatprep.mubr.bf16.mxu0 0
        %2549 = vmatmul.mubr.bf16.gmra.mrb[0].mxu0 %v2394
        %v2550 = vpop.f32.mrb[0].mxu0
        %v2551 = vadd.f32 %v2262, %v2550
        %v2552 = vpop.f32.mrb[0].mxu0
        %v2553 = vpop.f32.mrb[0].mxu0
        %v2554 = vadd.f32 %v2265, %v2553
        %v2555 = vpop.f32.mrb[0].mxu0
        %2556 = vmatprep.mubr.bf16.mxu0 0
        %2557 = vmatmul.mubr.bf16.gmra.mrb[0].mxu0 %v2395
        %v2558 = vpop.f32.mrb[0].mxu0
        %v2559 = vadd.f32 %v2270, %v2558
        %v2560 = vpop.f32.mrb[0].mxu0
        %v2561 = vpop.f32.mrb[0].mxu0
        %v2562 = vadd.f32 %v2273, %v2561
        %v2563 = vpop.f32.mrb[0].mxu0
        %2564 = vmatprep.mubr.bf16.mxu0 0
        %2565 = vmatmul.mubr.bf16.gmra.mrb[0].mxu0 %v2396
        %v2566 = vpop.f32.mrb[0].mxu0
        %v2567 = vadd.f32 %v2278, %v2566
        %v2568 = vpop.f32.mrb[0].mxu0
        %v2569 = vpop.f32.mrb[0].mxu0
        %v2570 = vadd.f32 %v2281, %v2569
        %v2571 = vpop.f32.mrb[0].mxu0
        %2572 = vmatprep.mubr.bf16.mxu0 0
        %2573 = vmatmul.mubr.bf16.gmra.mrb[0].mxu0 %v2397
        %v2574 = vpop.f32.mrb[0].mxu0
        %v2575 = vadd.f32 %v2286, %v2574
        %v2576 = vpop.f32.mrb[0].mxu0
        %v2577 = vpop.f32.mrb[0].mxu0
        %v2578 = vadd.f32 %v2289, %v2577
        %v2579 = vpop.f32.mrb[0].mxu0
        %2580 = vmatprep.mubr.bf16.mxu0 0
        %2581 = vmatmul.mubr.bf16.gmra.mrb[0].mxu0 %v2398
        %v2582 = vpop.f32.mrb[0].mxu0
        %v2583 = vadd.f32 %v2294, %v2582
        %v2584 = vpop.f32.mrb[0].mxu0
        %v2585 = vpop.f32.mrb[0].mxu0
        %v2586 = vadd.f32 %v2297, %v2585
        %v2587 = vpop.f32.mrb[0].mxu0
        %2588 = vmatprep.mubr.bf16.mxu0 0
        %2589 = vmatmul.mubr.bf16.gmra.mrb[0].mxu0 %v2399
        %v2590 = vpop.f32.mrb[0].mxu0
        %v2591 = vadd.f32 %v2302, %v2590
        %v2592 = vpop.f32.mrb[0].mxu0
        %v2593 = vpop.f32.mrb[0].mxu0
        %v2594 = vadd.f32 %v2305, %v2593
        %v2595 = vpop.f32.mrb[0].mxu0
        %2596 = vmatprep.mubr.bf16.mxu0 0
        %2597 = vmatmul.mubr.bf16.gmra.mrb[0].mxu0 %v2400
        %v2598 = vpop.f32.mrb[0].mxu0
        %v2599 = vadd.f32 %v2310, %v2598
        %v2600 = vpop.f32.mrb[0].mxu0
        %v2601 = vpop.f32.mrb[0].mxu0
        %v2602 = vadd.f32 %v2313, %v2601
        %v2603 = vpop.f32.mrb[0].mxu0
        %2604 = vmatprep.mubr.bf16.mxu0 0
        %2605 = vmatmul.mubr.bf16.gmra.mrb[0].mxu0 %v2401
        %v2606 = vpop.f32.mrb[0].mxu0
        %v2607 = vadd.f32 %v2318, %v2606
        %v2608 = vpop.f32.mrb[0].mxu0
        %v2609 = vpop.f32.mrb[0].mxu0
        %v2610 = vadd.f32 %v2321, %v2609
        %v2611 = vpop.f32.mrb[0].mxu0
        %2612 = vmatprep.mubr.bf16.mxu0 0
        %2613 = vmatmul.mubr.bf16.gmra.mrb[0].mxu0 %v2402
        %v2614 = vpop.f32.mrb[0].mxu0
        %v2615 = vadd.f32 %v2326, %v2614
        %v2616 = vpop.f32.mrb[0].mxu0
        %v2617 = vpop.f32.mrb[0].mxu0
        %v2618 = vadd.f32 %v2329, %v2617
        %v2619 = vpop.f32.mrb[0].mxu0
        %2620 = vmatprep.mubr.bf16.mxu0 0
        %2621 = vmatmul.mubr.bf16.gmra.mrb[0].mxu0 %v2403
        %v2622 = vpop.f32.mrb[0].mxu0
        %v2623 = vadd.f32 %v2334, %v2622
        %v2624 = vpop.f32.mrb[0].mxu0
        %v2625 = vpop.f32.mrb[0].mxu0
        %v2626 = vadd.f32 %v2337, %v2625
        %v2627 = vpop.f32.mrb[0].mxu0
        %2628 = vdwg.mxu0
        %s2629 = scalar_lea.vmem %s1, 128
        %v2630 = vld [vmem:[%s2629] sm:$0xf]
        %v2631 = vld [vmem:[%s2629 + $0x4] sm:$0xf]
        %v2632 = vld [vmem:[%s2629 + $0x8] sm:$0xf]
        %v2633 = vld [vmem:[%s2629 + $0xc] sm:$0xf]
        %v2634 = vld [vmem:[%s2629 + $0x10] sm:$0xf]
        %v2635 = vld [vmem:[%s2629 + $0x14] sm:$0xf]
        %v2636 = vld [vmem:[%s2629 + $0x18] sm:$0xf]
        %v2637 = vld [vmem:[%s2629 + $0x1c] sm:$0xf]
        %v2638 = vld [vmem:[%s2629 + $0x20] sm:$0xf]
        %v2639 = vld [vmem:[%s2629 + $0x24] sm:$0xf]
        %v2640 = vld [vmem:[%s2629 + $0x28] sm:$0xf]
        %v2641 = vld [vmem:[%s2629 + $0x2c] sm:$0xf]
        %v2642 = vld [vmem:[%s2629 + $0x30] sm:$0xf]
        %v2643 = vld [vmem:[%s2629 + $0x34] sm:$0xf]
        %v2644 = vld [vmem:[%s2629 + $0x38] sm:$0xf]
        %v2645 = vld [vmem:[%s2629 + $0x3c] sm:$0xf]
        %v2646 = vunpack.c.l.b16 %v675
        %v2647 = vunpack.c.l.b16 %v678
        %v2648 = vunpack.c.l.b16 %v682
        %v2649 = vunpack.c.l.b16 %v685
        %v2650 = vunpack.c.l.b16 %v689
        %v2651 = vunpack.c.l.b16 %v692
        %v2652 = vunpack.c.l.b16 %v696
        %v2653 = vunpack.c.l.b16 %v699
        %v2654 = vunpack.c.l.b16 %v703
        %v2655 = vunpack.c.l.b16 %v706
        %v2656 = vunpack.c.l.b16 %v710
        %v2657 = vunpack.c.l.b16 %v713
        %v2658 = vunpack.c.l.b16 %v717
        %v2659 = vunpack.c.l.b16 %v720
        %v2660 = vunpack.c.l.b16 %v724
        %v2661 = vunpack.c.l.b16 %v727
        %v2662 = vunpack.c.l.b16 %v731
        %v2663 = vunpack.c.l.b16 %v734
        %v2664 = vunpack.c.l.b16 %v738
        %v2665 = vunpack.c.l.b16 %v741
        %v2666 = vunpack.c.l.b16 %v745
        %v2667 = vunpack.c.l.b16 %v748
        %v2668 = vunpack.c.l.b16 %v752
        %v2669 = vunpack.c.l.b16 %v755
        %v2670 = vunpack.c.l.b16 %v759
        %v2671 = vunpack.c.l.b16 %v762
        %v2672 = vunpack.c.l.b16 %v766
        %v2673 = vunpack.c.l.b16 %v769
        %v2674 = vunpack.c.l.b16 %v773
        %v2675 = vunpack.c.l.b16 %v776
        %v2676 = vunpack.c.l.b16 %v780
        %v2677 = vunpack.c.l.b16 %v783
        %v2678 = vpack.c.b16 %v2647, %v2646
        %v2679 = vpack.c.b16 %v2649, %v2648
        %v2680 = vpack.c.b16 %v2651, %v2650
        %v2681 = vpack.c.b16 %v2653, %v2652
        %v2682 = vpack.c.b16 %v2655, %v2654
        %v2683 = vpack.c.b16 %v2657, %v2656
        %v2684 = vpack.c.b16 %v2659, %v2658
        %v2685 = vpack.c.b16 %v2661, %v2660
        %v2686 = vpack.c.b16 %v2663, %v2662
        %v2687 = vpack.c.b16 %v2665, %v2664
        %v2688 = vpack.c.b16 %v2667, %v2666
        %v2689 = vpack.c.b16 %v2669, %v2668
        %v2690 = vpack.c.b16 %v2671, %v2670
        %v2691 = vpack.c.b16 %v2673, %v2672
        %v2692 = vpack.c.b16 %v2675, %v2674
        %v2693 = vpack.c.b16 %v2677, %v2676
        %v2726 = vunpack.c.l.b16 %v2630
        %v2727 = vunpack.c.l.b16 %v2631
        %v2728 = vunpack.c.l.b16 %v2632
        %v2729 = vunpack.c.l.b16 %v2633
        %v2730 = vunpack.c.l.b16 %v2634
        %v2731 = vunpack.c.l.b16 %v2635
        %v2732 = vunpack.c.l.b16 %v2636
        %v2733 = vunpack.c.l.b16 %v2637
        %v2734 = vunpack.c.l.b16 %v2638
        %v2735 = vunpack.c.l.b16 %v2639
        %v2736 = vunpack.c.l.b16 %v2640
        %v2737 = vunpack.c.l.b16 %v2641
        %v2738 = vunpack.c.l.b16 %v2642
        %v2739 = vunpack.c.l.b16 %v2643
        %v2740 = vunpack.c.l.b16 %v2644
        %v2741 = vunpack.c.l.b16 %v2645
        %v2742 = vpack.c.b16 %v2727, %v2726
        %v2743 = vpack.c.b16 %v2729, %v2728
        %v2744 = vpack.c.b16 %v2731, %v2730
        %v2745 = vpack.c.b16 %v2733, %v2732
        %v2746 = vpack.c.b16 %v2735, %v2734
        %v2747 = vpack.c.b16 %v2737, %v2736
        %v2748 = vpack.c.b16 %v2739, %v2738
        %v2749 = vpack.c.b16 %v2741, %v2740
        %2758 = vmatprep.subr.bf16.mxu0 0
        %2759 = vmatpush1.bf16.msra.mxu0 %v2742
        %2760 = vmatprep.subr.bf16.mxu0 0
        %2761 = vmatpush1.bf16.msra.mxu0 %v2743
        %2762 = vmatprep.subr.bf16.mxu0 0
        %2763 = vmatpush1.bf16.msra.mxu0 %v2744
        %2764 = vmatprep.subr.bf16.mxu0 0
        %2765 = vmatpush1.bf16.msra.mxu0 %v2745
        %2766 = vmatprep.subr.bf16.mxu0 0
        %2767 = vmatpush1.bf16.msra.mxu0 %v2746
        %2768 = vmatprep.subr.bf16.mxu0 0
        %2769 = vmatpush1.bf16.msra.mxu0 %v2747
        %2770 = vmatprep.subr.bf16.mxu0 0
        %2771 = vmatpush1.bf16.msra.mxu0 %v2748
        %2772 = vmatprep.subr.bf16.mxu0 0
        %2773 = vmatpush1.bf16.msra.mxu0 %v2749
        %2774 = vmatprep.subr.bf16.mxu0 0
        %2775 = vmatpush1.bf16.msra.mxu0 0
        %2776 = vmatprep.subr.bf16.mxu0 0
        %2777 = vmatpush1.bf16.msra.mxu0 0
        %2778 = vmatprep.subr.bf16.mxu0 0
        %2779 = vmatpush1.bf16.msra.mxu0 0
        %2780 = vmatprep.subr.bf16.mxu0 0
        %2781 = vmatpush1.bf16.msra.mxu0 0
        %2782 = vmatprep.subr.bf16.mxu0 0
        %2783 = vmatpush1.bf16.msra.mxu0 0
        %2784 = vmatprep.subr.bf16.mxu0 0
        %2785 = vmatpush1.bf16.msra.mxu0 0
        %2786 = vmatprep.subr.bf16.mxu0 0
        %2787 = vmatpush1.bf16.msra.mxu0 0
        %2788 = vmatprep.subr.bf16.mxu0 0
        %2789 = vmatpush1.bf16.msra.mxu0 0
        %2790 = vmatprep.mubr.bf16.mxu0 0
        %2791 = vmatmul.mubr.bf16.gmra.mrb[0].mxu0 %v2678
        %v2792 = vpop.f32.mrb[0].mxu0
        %v2793 = vadd.f32 0.0, %v2792
        %v2794 = vpop.f32.mrb[0].mxu0
        %v2795 = vpop.f32.mrb[0].mxu0
        %v2796 = vadd.f32 0.0, %v2795
        %v2797 = vpop.f32.mrb[0].mxu0
        %2798 = vmatprep.mubr.bf16.mxu0 0
        %2799 = vmatmul.mubr.bf16.gmra.mrb[0].mxu0 %v2679
        %v2800 = vpop.f32.mrb[0].mxu0
        %v2801 = vadd.f32 0.0, %v2800
        %v2802 = vpop.f32.mrb[0].mxu0
        %v2803 = vpop.f32.mrb[0].mxu0
        %v2804 = vadd.f32 0.0, %v2803
        %v2805 = vpop.f32.mrb[0].mxu0
        %2806 = vmatprep.mubr.bf16.mxu0 0
        %2807 = vmatmul.mubr.bf16.gmra.mrb[0].mxu0 %v2680
        %v2808 = vpop.f32.mrb[0].mxu0
        %v2809 = vadd.f32 0.0, %v2808
        %v2810 = vpop.f32.mrb[0].mxu0
        %v2811 = vpop.f32.mrb[0].mxu0
        %v2812 = vadd.f32 0.0, %v2811
        %v2813 = vpop.f32.mrb[0].mxu0
        %2814 = vmatprep.mubr.bf16.mxu0 0
        %2815 = vmatmul.mubr.bf16.gmra.mrb[0].mxu0 %v2681
        %v2816 = vpop.f32.mrb[0].mxu0
        %v2817 = vadd.f32 0.0, %v2816
        %v2818 = vpop.f32.mrb[0].mxu0
        %v2819 = vpop.f32.mrb[0].mxu0
        %v2820 = vadd.f32 0.0, %v2819
        %v2821 = vpop.f32.mrb[0].mxu0
        %2822 = vmatprep.mubr.bf16.mxu0 0
        %2823 = vmatmul.mubr.bf16.gmra.mrb[0].mxu0 %v2682
        %v2824 = vpop.f32.mrb[0].mxu0
        %v2825 = vadd.f32 0.0, %v2824
        %v2826 = vpop.f32.mrb[0].mxu0
        %v2827 = vpop.f32.mrb[0].mxu0
        %v2828 = vadd.f32 0.0, %v2827
        %v2829 = vpop.f32.mrb[0].mxu0
        %2830 = vmatprep.mubr.bf16.mxu0 0
        %2831 = vmatmul.mubr.bf16.gmra.mrb[0].mxu0 %v2683
        %v2832 = vpop.f32.mrb[0].mxu0
        %v2833 = vadd.f32 0.0, %v2832
        %v2834 = vpop.f32.mrb[0].mxu0
        %v2835 = vpop.f32.mrb[0].mxu0
        %v2836 = vadd.f32 0.0, %v2835
        %v2837 = vpop.f32.mrb[0].mxu0
        %2838 = vmatprep.mubr.bf16.mxu0 0
        %2839 = vmatmul.mubr.bf16.gmra.mrb[0].mxu0 %v2684
        %v2840 = vpop.f32.mrb[0].mxu0
        %v2841 = vadd.f32 0.0, %v2840
        %v2842 = vpop.f32.mrb[0].mxu0
        %v2843 = vpop.f32.mrb[0].mxu0
        %v2844 = vadd.f32 0.0, %v2843
        %v2845 = vpop.f32.mrb[0].mxu0
        %2846 = vmatprep.mubr.bf16.mxu0 0
        %2847 = vmatmul.mubr.bf16.gmra.mrb[0].mxu0 %v2685
        %v2848 = vpop.f32.mrb[0].mxu0
        %v2849 = vadd.f32 0.0, %v2848
        %v2850 = vpop.f32.mrb[0].mxu0
        %v2851 = vpop.f32.mrb[0].mxu0
        %v2852 = vadd.f32 0.0, %v2851
        %v2853 = vpop.f32.mrb[0].mxu0
        %2854 = vmatprep.mubr.bf16.mxu0 0
        %2855 = vmatmul.mubr.bf16.gmra.mrb[0].mxu0 %v2686
        %v2856 = vpop.f32.mrb[0].mxu0
        %v2857 = vadd.f32 0.0, %v2856
        %v2858 = vpop.f32.mrb[0].mxu0
        %v2859 = vpop.f32.mrb[0].mxu0
        %v2860 = vadd.f32 0.0, %v2859
        %v2861 = vpop.f32.mrb[0].mxu0
        %2862 = vmatprep.mubr.bf16.mxu0 0
        %2863 = vmatmul.mubr.bf16.gmra.mrb[0].mxu0 %v2687
        %v2864 = vpop.f32.mrb[0].mxu0
        %v2865 = vadd.f32 0.0, %v2864
        %v2866 = vpop.f32.mrb[0].mxu0
        %v2867 = vpop.f32.mrb[0].mxu0
        %v2868 = vadd.f32 0.0, %v2867
        %v2869 = vpop.f32.mrb[0].mxu0
        %2870 = vmatprep.mubr.bf16.mxu0 0
        %2871 = vmatmul.mubr.bf16.gmra.mrb[0].mxu0 %v2688
        %v2872 = vpop.f32.mrb[0].mxu0
        %v2873 = vadd.f32 0.0, %v2872
        %v2874 = vpop.f32.mrb[0].mxu0
        %v2875 = vpop.f32.mrb[0].mxu0
        %v2876 = vadd.f32 0.0, %v2875
        %v2877 = vpop.f32.mrb[0].mxu0
        %2878 = vmatprep.mubr.bf16.mxu0 0
        %2879 = vmatmul.mubr.bf16.gmra.mrb[0].mxu0 %v2689
        %v2880 = vpop.f32.mrb[0].mxu0
        %v2881 = vadd.f32 0.0, %v2880
        %v2882 = vpop.f32.mrb[0].mxu0
        %v2883 = vpop.f32.mrb[0].mxu0
        %v2884 = vadd.f32 0.0, %v2883
        %v2885 = vpop.f32.mrb[0].mxu0
        %2886 = vmatprep.mubr.bf16.mxu0 0
        %2887 = vmatmul.mubr.bf16.gmra.mrb[0].mxu0 %v2690
        %v2888 = vpop.f32.mrb[0].mxu0
        %v2889 = vadd.f32 0.0, %v2888
        %v2890 = vpop.f32.mrb[0].mxu0
        %v2891 = vpop.f32.mrb[0].mxu0
        %v2892 = vadd.f32 0.0, %v2891
        %v2893 = vpop.f32.mrb[0].mxu0
        %2894 = vmatprep.mubr.bf16.mxu0 0
        %2895 = vmatmul.mubr.bf16.gmra.mrb[0].mxu0 %v2691
        %v2896 = vpop.f32.mrb[0].mxu0
        %v2897 = vadd.f32 0.0, %v2896
        %v2898 = vpop.f32.mrb[0].mxu0
        %v2899 = vpop.f32.mrb[0].mxu0
        %v2900 = vadd.f32 0.0, %v2899
        %v2901 = vpop.f32.mrb[0].mxu0
        %2902 = vmatprep.mubr.bf16.mxu0 0
        %2903 = vmatmul.mubr.bf16.gmra.mrb[0].mxu0 %v2692
        %v2904 = vpop.f32.mrb[0].mxu0
        %v2905 = vadd.f32 0.0, %v2904
        %v2906 = vpop.f32.mrb[0].mxu0
        %v2907 = vpop.f32.mrb[0].mxu0
        %v2908 = vadd.f32 0.0, %v2907
        %v2909 = vpop.f32.mrb[0].mxu0
        %2910 = vmatprep.mubr.bf16.mxu0 0
        %2911 = vmatmul.mubr.bf16.gmra.mrb[0].mxu0 %v2693
        %v2912 = vpop.f32.mrb[0].mxu0
        %v2913 = vadd.f32 0.0, %v2912
        %v2914 = vpop.f32.mrb[0].mxu0
        %v2915 = vpop.f32.mrb[0].mxu0
        %v2916 = vadd.f32 0.0, %v2915
        %v2917 = vpop.f32.mrb[0].mxu0
        %2918 = vdwg.mxu0
        %v2919 = vadd.f32 %v2503, %v2793
        %v2920 = vadd.f32 %v2506, %v2796
        %v2921 = vadd.f32 %v2511, %v2801
        %v2922 = vadd.f32 %v2514, %v2804
        %v2923 = vadd.f32 %v2519, %v2809
        %v2924 = vadd.f32 %v2522, %v2812
        %v2925 = vadd.f32 %v2527, %v2817
        %v2926 = vadd.f32 %v2530, %v2820
        %v2927 = vadd.f32 %v2535, %v2825
        %v2928 = vadd.f32 %v2538, %v2828
        %v2929 = vadd.f32 %v2543, %v2833
        %v2930 = vadd.f32 %v2546, %v2836
        %v2931 = vadd.f32 %v2551, %v2841
        %v2932 = vadd.f32 %v2554, %v2844
        %v2933 = vadd.f32 %v2559, %v2849
        %v2934 = vadd.f32 %v2562, %v2852
        %v2935 = vadd.f32 %v2567, %v2857
        %v2936 = vadd.f32 %v2570, %v2860
        %v2937 = vadd.f32 %v2575, %v2865
        %v2938 = vadd.f32 %v2578, %v2868
        %v2939 = vadd.f32 %v2583, %v2873
        %v2940 = vadd.f32 %v2586, %v2876
        %v2941 = vadd.f32 %v2591, %v2881
        %v2942 = vadd.f32 %v2594, %v2884
        %v2943 = vadd.f32 %v2599, %v2889
        %v2944 = vadd.f32 %v2602, %v2892
        %v2945 = vadd.f32 %v2607, %v2897
        %v2946 = vadd.f32 %v2610, %v2900
        %v2947 = vadd.f32 %v2615, %v2905
        %v2948 = vadd.f32 %v2618, %v2908
        %v2949 = vadd.f32 %v2623, %v2913
        %v2950 = vadd.f32 %v2626, %v2916
        %s2951 = scalar_lea.vmem %s1, 192
        %v2952 = vld [vmem:[%s2951] sm:$0xf]
        %v2953 = vld [vmem:[%s2951 + $0x4] sm:$0xf]
        %v2954 = vld [vmem:[%s2951 + $0x8] sm:$0xf]
        %v2955 = vld [vmem:[%s2951 + $0xc] sm:$0xf]
        %v2956 = vld [vmem:[%s2951 + $0x10] sm:$0xf]
        %v2957 = vld [vmem:[%s2951 + $0x14] sm:$0xf]
        %v2958 = vld [vmem:[%s2951 + $0x18] sm:$0xf]
        %v2959 = vld [vmem:[%s2951 + $0x1c] sm:$0xf]
        %v2960 = vld [vmem:[%s2951 + $0x20] sm:$0xf]
        %v2961 = vld [vmem:[%s2951 + $0x24] sm:$0xf]
        %v2962 = vld [vmem:[%s2951 + $0x28] sm:$0xf]
        %v2963 = vld [vmem:[%s2951 + $0x2c] sm:$0xf]
        %v2964 = vld [vmem:[%s2951 + $0x30] sm:$0xf]
        %v2965 = vld [vmem:[%s2951 + $0x34] sm:$0xf]
        %v2966 = vld [vmem:[%s2951 + $0x38] sm:$0xf]
        %v2967 = vld [vmem:[%s2951 + $0x3c] sm:$0xf]
        %v2984 = vunpack.c.l.b16 %v785
        %v2985 = vunpack.c.l.b16 %v786
        %v2986 = vunpack.c.l.b16 %v787
        %v2987 = vunpack.c.l.b16 %v788
        %v2988 = vunpack.c.l.b16 %v789
        %v2989 = vunpack.c.l.b16 %v790
        %v2990 = vunpack.c.l.b16 %v791
        %v2991 = vunpack.c.l.b16 %v792
        %v2992 = vunpack.c.l.b16 %v793
        %v2993 = vunpack.c.l.b16 %v794
        %v2994 = vunpack.c.l.b16 %v795
        %v2995 = vunpack.c.l.b16 %v796
        %v2996 = vunpack.c.l.b16 %v797
        %v2997 = vunpack.c.l.b16 %v798
        %v2998 = vunpack.c.l.b16 %v799
        %v2999 = vunpack.c.l.b16 %v800
        %v3000 = vunpack.c.l.b16 %v801
        %v3001 = vunpack.c.l.b16 %v802
        %v3002 = vunpack.c.l.b16 %v803
        %v3003 = vunpack.c.l.b16 %v804
        %v3004 = vunpack.c.l.b16 %v805
        %v3005 = vunpack.c.l.b16 %v806
        %v3006 = vunpack.c.l.b16 %v807
        %v3007 = vunpack.c.l.b16 %v808
        %v3008 = vunpack.c.l.b16 %v809
        %v3009 = vunpack.c.l.b16 %v810
        %v3010 = vunpack.c.l.b16 %v811
        %v3011 = vunpack.c.l.b16 %v812
        %v3012 = vunpack.c.l.b16 %v813
        %v3013 = vunpack.c.l.b16 %v814
        %v3014 = vunpack.c.l.b16 %v815
        %v3015 = vunpack.c.l.b16 %v816
        %v3016 = vpack.c.b16 %v2985, %v2984
        %v3017 = vpack.c.b16 %v2987, %v2986
        %v3018 = vpack.c.b16 %v2989, %v2988
        %v3019 = vpack.c.b16 %v2991, %v2990
        %v3020 = vpack.c.b16 %v2993, %v2992
        %v3021 = vpack.c.b16 %v2995, %v2994
        %v3022 = vpack.c.b16 %v2997, %v2996
        %v3023 = vpack.c.b16 %v2999, %v2998
        %v3024 = vpack.c.b16 %v3001, %v3000
        %v3025 = vpack.c.b16 %v3003, %v3002
        %v3026 = vpack.c.b16 %v3005, %v3004
        %v3027 = vpack.c.b16 %v3007, %v3006
        %v3028 = vpack.c.b16 %v3009, %v3008
        %v3029 = vpack.c.b16 %v3011, %v3010
        %v3030 = vpack.c.b16 %v3013, %v3012
        %v3031 = vpack.c.b16 %v3015, %v3014
        %v3064 = vunpack.c.l.b16 %v2952
        %v3065 = vunpack.c.l.b16 %v2953
        %v3066 = vunpack.c.l.b16 %v2954
        %v3067 = vunpack.c.l.b16 %v2955
        %v3068 = vunpack.c.l.b16 %v2956
        %v3069 = vunpack.c.l.b16 %v2957
        %v3070 = vunpack.c.l.b16 %v2958
        %v3071 = vunpack.c.l.b16 %v2959
        %v3072 = vunpack.c.l.b16 %v2960
        %v3073 = vunpack.c.l.b16 %v2961
        %v3074 = vunpack.c.l.b16 %v2962
        %v3075 = vunpack.c.l.b16 %v2963
        %v3076 = vunpack.c.l.b16 %v2964
        %v3077 = vunpack.c.l.b16 %v2965
        %v3078 = vunpack.c.l.b16 %v2966
        %v3079 = vunpack.c.l.b16 %v2967
        %v3080 = vpack.c.b16 %v3065, %v3064
        %v3081 = vpack.c.b16 %v3067, %v3066
        %v3082 = vpack.c.b16 %v3069, %v3068
        %v3083 = vpack.c.b16 %v3071, %v3070
        %v3084 = vpack.c.b16 %v3073, %v3072
        %v3085 = vpack.c.b16 %v3075, %v3074
        %v3086 = vpack.c.b16 %v3077, %v3076
        %v3087 = vpack.c.b16 %v3079, %v3078
        %3096 = vmatprep.subr.bf16.mxu0 0
        %3097 = vmatpush1.bf16.msra.mxu0 %v3080
        %3098 = vmatprep.subr.bf16.mxu0 0
        %3099 = vmatpush1.bf16.msra.mxu0 %v3081
        %3100 = vmatprep.subr.bf16.mxu0 0
        %3101 = vmatpush1.bf16.msra.mxu0 %v3082
        %3102 = vmatprep.subr.bf16.mxu0 0
        %3103 = vmatpush1.bf16.msra.mxu0 %v3083
        %3104 = vmatprep.subr.bf16.mxu0 0
        %3105 = vmatpush1.bf16.msra.mxu0 %v3084
        %3106 = vmatprep.subr.bf16.mxu0 0
        %3107 = vmatpush1.bf16.msra.mxu0 %v3085
        %3108 = vmatprep.subr.bf16.mxu0 0
        %3109 = vmatpush1.bf16.msra.mxu0 %v3086
        %3110 = vmatprep.subr.bf16.mxu0 0
        %3111 = vmatpush1.bf16.msra.mxu0 %v3087
        %3112 = vmatprep.subr.bf16.mxu0 0
        %3113 = vmatpush1.bf16.msra.mxu0 0
        %3114 = vmatprep.subr.bf16.mxu0 0
        %3115 = vmatpush1.bf16.msra.mxu0 0
        %3116 = vmatprep.subr.bf16.mxu0 0
        %3117 = vmatpush1.bf16.msra.mxu0 0
        %3118 = vmatprep.subr.bf16.mxu0 0
        %3119 = vmatpush1.bf16.msra.mxu0 0
        %3120 = vmatprep.subr.bf16.mxu0 0
        %3121 = vmatpush1.bf16.msra.mxu0 0
        %3122 = vmatprep.subr.bf16.mxu0 0
        %3123 = vmatpush1.bf16.msra.mxu0 0
        %3124 = vmatprep.subr.bf16.mxu0 0
        %3125 = vmatpush1.bf16.msra.mxu0 0
        %3126 = vmatprep.subr.bf16.mxu0 0
        %3127 = vmatpush1.bf16.msra.mxu0 0
        %3128 = vmatprep.mubr.bf16.mxu0 0
        %3129 = vmatmul.mubr.bf16.gmra.mrb[0].mxu0 %v3016
        %v3130 = vpop.f32.mrb[0].mxu0
        %v3131 = vadd.f32 0.0, %v3130
        %v3132 = vpop.f32.mrb[0].mxu0
        %v3133 = vpop.f32.mrb[0].mxu0
        %v3134 = vadd.f32 0.0, %v3133
        %v3135 = vpop.f32.mrb[0].mxu0
        %3136 = vmatprep.mubr.bf16.mxu0 0
        %3137 = vmatmul.mubr.bf16.gmra.mrb[0].mxu0 %v3017
        %v3138 = vpop.f32.mrb[0].mxu0
        %v3139 = vadd.f32 0.0, %v3138
        %v3140 = vpop.f32.mrb[0].mxu0
        %v3141 = vpop.f32.mrb[0].mxu0
        %v3142 = vadd.f32 0.0, %v3141
        %v3143 = vpop.f32.mrb[0].mxu0
        %3144 = vmatprep.mubr.bf16.mxu0 0
        %3145 = vmatmul.mubr.bf16.gmra.mrb[0].mxu0 %v3018
        %v3146 = vpop.f32.mrb[0].mxu0
        %v3147 = vadd.f32 0.0, %v3146
        %v3148 = vpop.f32.mrb[0].mxu0
        %v3149 = vpop.f32.mrb[0].mxu0
        %v3150 = vadd.f32 0.0, %v3149
        %v3151 = vpop.f32.mrb[0].mxu0
        %3152 = vmatprep.mubr.bf16.mxu0 0
        %3153 = vmatmul.mubr.bf16.gmra.mrb[0].mxu0 %v3019
        %v3154 = vpop.f32.mrb[0].mxu0
        %v3155 = vadd.f32 0.0, %v3154
        %v3156 = vpop.f32.mrb[0].mxu0
        %v3157 = vpop.f32.mrb[0].mxu0
        %v3158 = vadd.f32 0.0, %v3157
        %v3159 = vpop.f32.mrb[0].mxu0
        %3160 = vmatprep.mubr.bf16.mxu0 0
        %3161 = vmatmul.mubr.bf16.gmra.mrb[0].mxu0 %v3020
        %v3162 = vpop.f32.mrb[0].mxu0
        %v3163 = vadd.f32 0.0, %v3162
        %v3164 = vpop.f32.mrb[0].mxu0
        %v3165 = vpop.f32.mrb[0].mxu0
        %v3166 = vadd.f32 0.0, %v3165
        %v3167 = vpop.f32.mrb[0].mxu0
        %3168 = vmatprep.mubr.bf16.mxu0 0
        %3169 = vmatmul.mubr.bf16.gmra.mrb[0].mxu0 %v3021
        %v3170 = vpop.f32.mrb[0].mxu0
        %v3171 = vadd.f32 0.0, %v3170
        %v3172 = vpop.f32.mrb[0].mxu0
        %v3173 = vpop.f32.mrb[0].mxu0
        %v3174 = vadd.f32 0.0, %v3173
        %v3175 = vpop.f32.mrb[0].mxu0
        %3176 = vmatprep.mubr.bf16.mxu0 0
        %3177 = vmatmul.mubr.bf16.gmra.mrb[0].mxu0 %v3022
        %v3178 = vpop.f32.mrb[0].mxu0
        %v3179 = vadd.f32 0.0, %v3178
        %v3180 = vpop.f32.mrb[0].mxu0
        %v3181 = vpop.f32.mrb[0].mxu0
        %v3182 = vadd.f32 0.0, %v3181
        %v3183 = vpop.f32.mrb[0].mxu0
        %3184 = vmatprep.mubr.bf16.mxu0 0
        %3185 = vmatmul.mubr.bf16.gmra.mrb[0].mxu0 %v3023
        %v3186 = vpop.f32.mrb[0].mxu0
        %v3187 = vadd.f32 0.0, %v3186
        %v3188 = vpop.f32.mrb[0].mxu0
        %v3189 = vpop.f32.mrb[0].mxu0
        %v3190 = vadd.f32 0.0, %v3189
        %v3191 = vpop.f32.mrb[0].mxu0
        %3192 = vmatprep.mubr.bf16.mxu0 0
        %3193 = vmatmul.mubr.bf16.gmra.mrb[0].mxu0 %v3024
        %v3194 = vpop.f32.mrb[0].mxu0
        %v3195 = vadd.f32 0.0, %v3194
        %v3196 = vpop.f32.mrb[0].mxu0
        %v3197 = vpop.f32.mrb[0].mxu0
        %v3198 = vadd.f32 0.0, %v3197
        %v3199 = vpop.f32.mrb[0].mxu0
        %3200 = vmatprep.mubr.bf16.mxu0 0
        %3201 = vmatmul.mubr.bf16.gmra.mrb[0].mxu0 %v3025
        %v3202 = vpop.f32.mrb[0].mxu0
        %v3203 = vadd.f32 0.0, %v3202
        %v3204 = vpop.f32.mrb[0].mxu0
        %v3205 = vpop.f32.mrb[0].mxu0
        %v3206 = vadd.f32 0.0, %v3205
        %v3207 = vpop.f32.mrb[0].mxu0
        %3208 = vmatprep.mubr.bf16.mxu0 0
        %3209 = vmatmul.mubr.bf16.gmra.mrb[0].mxu0 %v3026
        %v3210 = vpop.f32.mrb[0].mxu0
        %v3211 = vadd.f32 0.0, %v3210
        %v3212 = vpop.f32.mrb[0].mxu0
        %v3213 = vpop.f32.mrb[0].mxu0
        %v3214 = vadd.f32 0.0, %v3213
        %v3215 = vpop.f32.mrb[0].mxu0
        %3216 = vmatprep.mubr.bf16.mxu0 0
        %3217 = vmatmul.mubr.bf16.gmra.mrb[0].mxu0 %v3027
        %v3218 = vpop.f32.mrb[0].mxu0
        %v3219 = vadd.f32 0.0, %v3218
        %v3220 = vpop.f32.mrb[0].mxu0
        %v3221 = vpop.f32.mrb[0].mxu0
        %v3222 = vadd.f32 0.0, %v3221
        %v3223 = vpop.f32.mrb[0].mxu0
        %3224 = vmatprep.mubr.bf16.mxu0 0
        %3225 = vmatmul.mubr.bf16.gmra.mrb[0].mxu0 %v3028
        %v3226 = vpop.f32.mrb[0].mxu0
        %v3227 = vadd.f32 0.0, %v3226
        %v3228 = vpop.f32.mrb[0].mxu0
        %v3229 = vpop.f32.mrb[0].mxu0
        %v3230 = vadd.f32 0.0, %v3229
        %v3231 = vpop.f32.mrb[0].mxu0
        %3232 = vmatprep.mubr.bf16.mxu0 0
        %3233 = vmatmul.mubr.bf16.gmra.mrb[0].mxu0 %v3029
        %v3234 = vpop.f32.mrb[0].mxu0
        %v3235 = vadd.f32 0.0, %v3234
        %v3236 = vpop.f32.mrb[0].mxu0
        %v3237 = vpop.f32.mrb[0].mxu0
        %v3238 = vadd.f32 0.0, %v3237
        %v3239 = vpop.f32.mrb[0].mxu0
        %3240 = vmatprep.mubr.bf16.mxu0 0
        %3241 = vmatmul.mubr.bf16.gmra.mrb[0].mxu0 %v3030
        %v3242 = vpop.f32.mrb[0].mxu0
        %v3243 = vadd.f32 0.0, %v3242
        %v3244 = vpop.f32.mrb[0].mxu0
        %v3245 = vpop.f32.mrb[0].mxu0
        %v3246 = vadd.f32 0.0, %v3245
        %v3247 = vpop.f32.mrb[0].mxu0
        %3248 = vmatprep.mubr.bf16.mxu0 0
        %3249 = vmatmul.mubr.bf16.gmra.mrb[0].mxu0 %v3031
        %v3250 = vpop.f32.mrb[0].mxu0
        %v3251 = vadd.f32 0.0, %v3250
        %v3252 = vpop.f32.mrb[0].mxu0
        %v3253 = vpop.f32.mrb[0].mxu0
        %v3254 = vadd.f32 0.0, %v3253
        %v3255 = vpop.f32.mrb[0].mxu0
        %3256 = vdwg.mxu0
        %v3257 = vadd.f32 %v2919, %v3131
        %v3258 = vadd.f32 %v2920, %v3134
        %v3259 = vadd.f32 %v2921, %v3139
        %v3260 = vadd.f32 %v2922, %v3142
        %v3261 = vadd.f32 %v2923, %v3147
        %v3262 = vadd.f32 %v2924, %v3150
        %v3263 = vadd.f32 %v2925, %v3155
        %v3264 = vadd.f32 %v2926, %v3158
        %v3265 = vadd.f32 %v2927, %v3163
        %v3266 = vadd.f32 %v2928, %v3166
        %v3267 = vadd.f32 %v2929, %v3171
        %v3268 = vadd.f32 %v2930, %v3174
        %v3269 = vadd.f32 %v2931, %v3179
        %v3270 = vadd.f32 %v2932, %v3182
        %v3271 = vadd.f32 %v2933, %v3187
        %v3272 = vadd.f32 %v2934, %v3190
        %v3273 = vadd.f32 %v2935, %v3195
        %v3274 = vadd.f32 %v2936, %v3198
        %v3275 = vadd.f32 %v2937, %v3203
        %v3276 = vadd.f32 %v2938, %v3206
        %v3277 = vadd.f32 %v2939, %v3211
        %v3278 = vadd.f32 %v2940, %v3214
        %v3279 = vadd.f32 %v2941, %v3219
        %v3280 = vadd.f32 %v2942, %v3222
        %v3281 = vadd.f32 %v2943, %v3227
        %v3282 = vadd.f32 %v2944, %v3230
        %v3283 = vadd.f32 %v2945, %v3235
        %v3284 = vadd.f32 %v2946, %v3238
        %v3285 = vadd.f32 %v2947, %v3243
        %v3286 = vadd.f32 %v2948, %v3246
        %v3287 = vadd.f32 %v2949, %v3251
        %v3288 = vadd.f32 %v2950, %v3254
        %s3289 = scalar_lea.vmem %s1, 256
        %v3290 = vld [vmem:[%s3289] sm:$0xf]
        %v3291 = vld [vmem:[%s3289 + $0x4] sm:$0xf]
        %v3292 = vld [vmem:[%s3289 + $0x8] sm:$0xf]
        %v3293 = vld [vmem:[%s3289 + $0xc] sm:$0xf]
        %v3294 = vld [vmem:[%s3289 + $0x10] sm:$0xf]
        %v3295 = vld [vmem:[%s3289 + $0x14] sm:$0xf]
        %v3296 = vld [vmem:[%s3289 + $0x18] sm:$0xf]
        %v3297 = vld [vmem:[%s3289 + $0x1c] sm:$0xf]
        %v3298 = vld [vmem:[%s3289 + $0x20] sm:$0xf]
        %v3299 = vld [vmem:[%s3289 + $0x24] sm:$0xf]
        %v3300 = vld [vmem:[%s3289 + $0x28] sm:$0xf]
        %v3301 = vld [vmem:[%s3289 + $0x2c] sm:$0xf]
        %v3302 = vld [vmem:[%s3289 + $0x30] sm:$0xf]
        %v3303 = vld [vmem:[%s3289 + $0x34] sm:$0xf]
        %v3304 = vld [vmem:[%s3289 + $0x38] sm:$0xf]
        %v3305 = vld [vmem:[%s3289 + $0x3c] sm:$0xf]
        %v3306 = vunpack.c.l.b16 %v846
        %v3307 = vunpack.c.l.b16 %v856
        %v3308 = vunpack.c.l.b16 %v870
        %v3309 = vunpack.c.l.b16 %v880
        %v3310 = vunpack.c.l.b16 %v894
        %v3311 = vunpack.c.l.b16 %v904
        %v3312 = vunpack.c.l.b16 %v918
        %v3313 = vunpack.c.l.b16 %v928
        %v3314 = vunpack.c.l.b16 %v942
        %v3315 = vunpack.c.l.b16 %v952
        %v3316 = vunpack.c.l.b16 %v966
        %v3317 = vunpack.c.l.b16 %v976
        %v3318 = vunpack.c.l.b16 %v990
        %v3319 = vunpack.c.l.b16 %v1000
        %v3320 = vunpack.c.l.b16 %v1014
        %v3321 = vunpack.c.l.b16 %v1024
        %v3322 = vunpack.c.l.b16 %v1038
        %v3323 = vunpack.c.l.b16 %v1048
        %v3324 = vunpack.c.l.b16 %v1062
        %v3325 = vunpack.c.l.b16 %v1072
        %v3326 = vunpack.c.l.b16 %v1086
        %v3327 = vunpack.c.l.b16 %v1096
        %v3328 = vunpack.c.l.b16 %v1110
        %v3329 = vunpack.c.l.b16 %v1120
        %v3330 = vunpack.c.l.b16 %v1134
        %v3331 = vunpack.c.l.b16 %v1144
        %v3332 = vunpack.c.l.b16 %v1158
        %v3333 = vunpack.c.l.b16 %v1168
        %v3334 = vunpack.c.l.b16 %v1182
        %v3335 = vunpack.c.l.b16 %v1192
        %v3336 = vunpack.c.l.b16 %v1206
        %v3337 = vunpack.c.l.b16 %v1216
        %v3338 = vpack.c.b16 %v3307, %v3306
        %v3339 = vpack.c.b16 %v3309, %v3308
        %v3340 = vpack.c.b16 %v3311, %v3310
        %v3341 = vpack.c.b16 %v3313, %v3312
        %v3342 = vpack.c.b16 %v3315, %v3314
        %v3343 = vpack.c.b16 %v3317, %v3316
        %v3344 = vpack.c.b16 %v3319, %v3318
        %v3345 = vpack.c.b16 %v3321, %v3320
        %v3346 = vpack.c.b16 %v3323, %v3322
        %v3347 = vpack.c.b16 %v3325, %v3324
        %v3348 = vpack.c.b16 %v3327, %v3326
        %v3349 = vpack.c.b16 %v3329, %v3328
        %v3350 = vpack.c.b16 %v3331, %v3330
        %v3351 = vpack.c.b16 %v3333, %v3332
        %v3352 = vpack.c.b16 %v3335, %v3334
        %v3353 = vpack.c.b16 %v3337, %v3336
        %v3386 = vunpack.c.l.b16 %v3290
        %v3387 = vunpack.c.l.b16 %v3291
        %v3388 = vunpack.c.l.b16 %v3292
        %v3389 = vunpack.c.l.b16 %v3293
        %v3390 = vunpack.c.l.b16 %v3294
        %v3391 = vunpack.c.l.b16 %v3295
        %v3392 = vunpack.c.l.b16 %v3296
        %v3393 = vunpack.c.l.b16 %v3297
        %v3394 = vunpack.c.l.b16 %v3298
        %v3395 = vunpack.c.l.b16 %v3299
        %v3396 = vunpack.c.l.b16 %v3300
        %v3397 = vunpack.c.l.b16 %v3301
        %v3398 = vunpack.c.l.b16 %v3302
        %v3399 = vunpack.c.l.b16 %v3303
        %v3400 = vunpack.c.l.b16 %v3304
        %v3401 = vunpack.c.l.b16 %v3305
        %v3402 = vpack.c.b16 %v3387, %v3386
        %v3403 = vpack.c.b16 %v3389, %v3388
        %v3404 = vpack.c.b16 %v3391, %v3390
        %v3405 = vpack.c.b16 %v3393, %v3392
        %v3406 = vpack.c.b16 %v3395, %v3394
        %v3407 = vpack.c.b16 %v3397, %v3396
        %v3408 = vpack.c.b16 %v3399, %v3398
        %v3409 = vpack.c.b16 %v3401, %v3400
        %3418 = vmatprep.subr.bf16.mxu0 0
        %3419 = vmatpush1.bf16.msra.mxu0 %v3402
        %3420 = vmatprep.subr.bf16.mxu0 0
        %3421 = vmatpush1.bf16.msra.mxu0 %v3403
        %3422 = vmatprep.subr.bf16.mxu0 0
        %3423 = vmatpush1.bf16.msra.mxu0 %v3404
        %3424 = vmatprep.subr.bf16.mxu0 0
        %3425 = vmatpush1.bf16.msra.mxu0 %v3405
        %3426 = vmatprep.subr.bf16.mxu0 0
        %3427 = vmatpush1.bf16.msra.mxu0 %v3406
        %3428 = vmatprep.subr.bf16.mxu0 0
        %3429 = vmatpush1.bf16.msra.mxu0 %v3407
        %3430 = vmatprep.subr.bf16.mxu0 0
        %3431 = vmatpush1.bf16.msra.mxu0 %v3408
        %3432 = vmatprep.subr.bf16.mxu0 0
        %3433 = vmatpush1.bf16.msra.mxu0 %v3409
        %3434 = vmatprep.subr.bf16.mxu0 0
        %3435 = vmatpush1.bf16.msra.mxu0 0
        %3436 = vmatprep.subr.bf16.mxu0 0
        %3437 = vmatpush1.bf16.msra.mxu0 0
        %3438 = vmatprep.subr.bf16.mxu0 0
        %3439 = vmatpush1.bf16.msra.mxu0 0
        %3440 = vmatprep.subr.bf16.mxu0 0
        %3441 = vmatpush1.bf16.msra.mxu0 0
        %3442 = vmatprep.subr.bf16.mxu0 0
        %3443 = vmatpush1.bf16.msra.mxu0 0
        %3444 = vmatprep.subr.bf16.mxu0 0
        %3445 = vmatpush1.bf16.msra.mxu0 0
        %3446 = vmatprep.subr.bf16.mxu0 0
        %3447 = vmatpush1.bf16.msra.mxu0 0
        %3448 = vmatprep.subr.bf16.mxu0 0
        %3449 = vmatpush1.bf16.msra.mxu0 0
        %3450 = vmatprep.mubr.bf16.mxu0 0
        %3451 = vmatmul.mubr.bf16.gmra.mrb[0].mxu0 %v3338
        %v3452 = vpop.f32.mrb[0].mxu0
        %v3453 = vadd.f32 0.0, %v3452
        %v3454 = vpop.f32.mrb[0].mxu0
        %v3455 = vpop.f32.mrb[0].mxu0
        %v3456 = vadd.f32 0.0, %v3455
        %v3457 = vpop.f32.mrb[0].mxu0
        %3458 = vmatprep.mubr.bf16.mxu0 0
        %3459 = vmatmul.mubr.bf16.gmra.mrb[0].mxu0 %v3339
        %v3460 = vpop.f32.mrb[0].mxu0
        %v3461 = vadd.f32 0.0, %v3460
        %v3462 = vpop.f32.mrb[0].mxu0
        %v3463 = vpop.f32.mrb[0].mxu0
        %v3464 = vadd.f32 0.0, %v3463
        %v3465 = vpop.f32.mrb[0].mxu0
        %3466 = vmatprep.mubr.bf16.mxu0 0
        %3467 = vmatmul.mubr.bf16.gmra.mrb[0].mxu0 %v3340
        %v3468 = vpop.f32.mrb[0].mxu0
        %v3469 = vadd.f32 0.0, %v3468
        %v3470 = vpop.f32.mrb[0].mxu0
        %v3471 = vpop.f32.mrb[0].mxu0
        %v3472 = vadd.f32 0.0, %v3471
        %v3473 = vpop.f32.mrb[0].mxu0
        %3474 = vmatprep.mubr.bf16.mxu0 0
        %3475 = vmatmul.mubr.bf16.gmra.mrb[0].mxu0 %v3341
        %v3476 = vpop.f32.mrb[0].mxu0
        %v3477 = vadd.f32 0.0, %v3476
        %v3478 = vpop.f32.mrb[0].mxu0
        %v3479 = vpop.f32.mrb[0].mxu0
        %v3480 = vadd.f32 0.0, %v3479
        %v3481 = vpop.f32.mrb[0].mxu0
        %3482 = vmatprep.mubr.bf16.mxu0 0
        %3483 = vmatmul.mubr.bf16.gmra.mrb[0].mxu0 %v3342
        %v3484 = vpop.f32.mrb[0].mxu0
        %v3485 = vadd.f32 0.0, %v3484
        %v3486 = vpop.f32.mrb[0].mxu0
        %v3487 = vpop.f32.mrb[0].mxu0
        %v3488 = vadd.f32 0.0, %v3487
        %v3489 = vpop.f32.mrb[0].mxu0
        %3490 = vmatprep.mubr.bf16.mxu0 0
        %3491 = vmatmul.mubr.bf16.gmra.mrb[0].mxu0 %v3343
        %v3492 = vpop.f32.mrb[0].mxu0
        %v3493 = vadd.f32 0.0, %v3492
        %v3494 = vpop.f32.mrb[0].mxu0
        %v3495 = vpop.f32.mrb[0].mxu0
        %v3496 = vadd.f32 0.0, %v3495
        %v3497 = vpop.f32.mrb[0].mxu0
        %3498 = vmatprep.mubr.bf16.mxu0 0
        %3499 = vmatmul.mubr.bf16.gmra.mrb[0].mxu0 %v3344
        %v3500 = vpop.f32.mrb[0].mxu0
        %v3501 = vadd.f32 0.0, %v3500
        %v3502 = vpop.f32.mrb[0].mxu0
        %v3503 = vpop.f32.mrb[0].mxu0
        %v3504 = vadd.f32 0.0, %v3503
        %v3505 = vpop.f32.mrb[0].mxu0
        %3506 = vmatprep.mubr.bf16.mxu0 0
        %3507 = vmatmul.mubr.bf16.gmra.mrb[0].mxu0 %v3345
        %v3508 = vpop.f32.mrb[0].mxu0
        %v3509 = vadd.f32 0.0, %v3508
        %v3510 = vpop.f32.mrb[0].mxu0
        %v3511 = vpop.f32.mrb[0].mxu0
        %v3512 = vadd.f32 0.0, %v3511
        %v3513 = vpop.f32.mrb[0].mxu0
        %3514 = vmatprep.mubr.bf16.mxu0 0
        %3515 = vmatmul.mubr.bf16.gmra.mrb[0].mxu0 %v3346
        %v3516 = vpop.f32.mrb[0].mxu0
        %v3517 = vadd.f32 0.0, %v3516
        %v3518 = vpop.f32.mrb[0].mxu0
        %v3519 = vpop.f32.mrb[0].mxu0
        %v3520 = vadd.f32 0.0, %v3519
        %v3521 = vpop.f32.mrb[0].mxu0
        %3522 = vmatprep.mubr.bf16.mxu0 0
        %3523 = vmatmul.mubr.bf16.gmra.mrb[0].mxu0 %v3347
        %v3524 = vpop.f32.mrb[0].mxu0
        %v3525 = vadd.f32 0.0, %v3524
        %v3526 = vpop.f32.mrb[0].mxu0
        %v3527 = vpop.f32.mrb[0].mxu0
        %v3528 = vadd.f32 0.0, %v3527
        %v3529 = vpop.f32.mrb[0].mxu0
        %3530 = vmatprep.mubr.bf16.mxu0 0
        %3531 = vmatmul.mubr.bf16.gmra.mrb[0].mxu0 %v3348
        %v3532 = vpop.f32.mrb[0].mxu0
        %v3533 = vadd.f32 0.0, %v3532
        %v3534 = vpop.f32.mrb[0].mxu0
        %v3535 = vpop.f32.mrb[0].mxu0
        %v3536 = vadd.f32 0.0, %v3535
        %v3537 = vpop.f32.mrb[0].mxu0
        %3538 = vmatprep.mubr.bf16.mxu0 0
        %3539 = vmatmul.mubr.bf16.gmra.mrb[0].mxu0 %v3349
        %v3540 = vpop.f32.mrb[0].mxu0
        %v3541 = vadd.f32 0.0, %v3540
        %v3542 = vpop.f32.mrb[0].mxu0
        %v3543 = vpop.f32.mrb[0].mxu0
        %v3544 = vadd.f32 0.0, %v3543
        %v3545 = vpop.f32.mrb[0].mxu0
        %3546 = vmatprep.mubr.bf16.mxu0 0
        %3547 = vmatmul.mubr.bf16.gmra.mrb[0].mxu0 %v3350
        %v3548 = vpop.f32.mrb[0].mxu0
        %v3549 = vadd.f32 0.0, %v3548
        %v3550 = vpop.f32.mrb[0].mxu0
        %v3551 = vpop.f32.mrb[0].mxu0
        %v3552 = vadd.f32 0.0, %v3551
        %v3553 = vpop.f32.mrb[0].mxu0
        %3554 = vmatprep.mubr.bf16.mxu0 0
        %3555 = vmatmul.mubr.bf16.gmra.mrb[0].mxu0 %v3351
        %v3556 = vpop.f32.mrb[0].mxu0
        %v3557 = vadd.f32 0.0, %v3556
        %v3558 = vpop.f32.mrb[0].mxu0
        %v3559 = vpop.f32.mrb[0].mxu0
        %v3560 = vadd.f32 0.0, %v3559
        %v3561 = vpop.f32.mrb[0].mxu0
        %3562 = vmatprep.mubr.bf16.mxu0 0
        %3563 = vmatmul.mubr.bf16.gmra.mrb[0].mxu0 %v3352
        %v3564 = vpop.f32.mrb[0].mxu0
        %v3565 = vadd.f32 0.0, %v3564
        %v3566 = vpop.f32.mrb[0].mxu0
        %v3567 = vpop.f32.mrb[0].mxu0
        %v3568 = vadd.f32 0.0, %v3567
        %v3569 = vpop.f32.mrb[0].mxu0
        %3570 = vmatprep.mubr.bf16.mxu0 0
        %3571 = vmatmul.mubr.bf16.gmra.mrb[0].mxu0 %v3353
        %v3572 = vpop.f32.mrb[0].mxu0
        %v3573 = vadd.f32 0.0, %v3572
        %v3574 = vpop.f32.mrb[0].mxu0
        %v3575 = vpop.f32.mrb[0].mxu0
        %v3576 = vadd.f32 0.0, %v3575
        %v3577 = vpop.f32.mrb[0].mxu0
        %3578 = vdwg.mxu0
        %v3579 = vadd.f32 %v3257, %v3453
        %v3580 = vadd.f32 %v3258, %v3456
        %v3581 = vadd.f32 %v3259, %v3461
        %v3582 = vadd.f32 %v3260, %v3464
        %v3583 = vadd.f32 %v3261, %v3469
        %v3584 = vadd.f32 %v3262, %v3472
        %v3585 = vadd.f32 %v3263, %v3477
        %v3586 = vadd.f32 %v3264, %v3480
        %v3587 = vadd.f32 %v3265, %v3485
        %v3588 = vadd.f32 %v3266, %v3488
        %v3589 = vadd.f32 %v3267, %v3493
        %v3590 = vadd.f32 %v3268, %v3496
        %v3591 = vadd.f32 %v3269, %v3501
        %v3592 = vadd.f32 %v3270, %v3504
        %v3593 = vadd.f32 %v3271, %v3509
        %v3594 = vadd.f32 %v3272, %v3512
        %v3595 = vadd.f32 %v3273, %v3517
        %v3596 = vadd.f32 %v3274, %v3520
        %v3597 = vadd.f32 %v3275, %v3525
        %v3598 = vadd.f32 %v3276, %v3528
        %v3599 = vadd.f32 %v3277, %v3533
        %v3600 = vadd.f32 %v3278, %v3536
        %v3601 = vadd.f32 %v3279, %v3541
        %v3602 = vadd.f32 %v3280, %v3544
        %v3603 = vadd.f32 %v3281, %v3549
        %v3604 = vadd.f32 %v3282, %v3552
        %v3605 = vadd.f32 %v3283, %v3557
        %v3606 = vadd.f32 %v3284, %v3560
        %v3607 = vadd.f32 %v3285, %v3565
        %v3608 = vadd.f32 %v3286, %v3568
        %v3609 = vadd.f32 %v3287, %v3573
        %v3610 = vadd.f32 %v3288, %v3576
        %s3611 = scalar_lea.vmem %s1, 320
        %v3612 = vld [vmem:[%s3611] sm:$0xf]
        %v3613 = vld [vmem:[%s3611 + $0x4] sm:$0xf]
        %v3614 = vld [vmem:[%s3611 + $0x8] sm:$0xf]
        %v3615 = vld [vmem:[%s3611 + $0xc] sm:$0xf]
        %v3616 = vld [vmem:[%s3611 + $0x10] sm:$0xf]
        %v3617 = vld [vmem:[%s3611 + $0x14] sm:$0xf]
        %v3618 = vld [vmem:[%s3611 + $0x18] sm:$0xf]
        %v3619 = vld [vmem:[%s3611 + $0x1c] sm:$0xf]
        %v3620 = vld [vmem:[%s3611 + $0x20] sm:$0xf]
        %v3621 = vld [vmem:[%s3611 + $0x24] sm:$0xf]
        %v3622 = vld [vmem:[%s3611 + $0x28] sm:$0xf]
        %v3623 = vld [vmem:[%s3611 + $0x2c] sm:$0xf]
        %v3624 = vld [vmem:[%s3611 + $0x30] sm:$0xf]
        %v3625 = vld [vmem:[%s3611 + $0x34] sm:$0xf]
        %v3626 = vld [vmem:[%s3611 + $0x38] sm:$0xf]
        %v3627 = vld [vmem:[%s3611 + $0x3c] sm:$0xf]
        %v3628 = vunpack.c.l.b16 %v1316
        %v3629 = vunpack.c.l.b16 %v1319
        %v3630 = vunpack.c.l.b16 %v1323
        %v3631 = vunpack.c.l.b16 %v1326
        %v3632 = vunpack.c.l.b16 %v1330
        %v3633 = vunpack.c.l.b16 %v1333
        %v3634 = vunpack.c.l.b16 %v1337
        %v3635 = vunpack.c.l.b16 %v1340
        %v3636 = vunpack.c.l.b16 %v1344
        %v3637 = vunpack.c.l.b16 %v1347
        %v3638 = vunpack.c.l.b16 %v1351
        %v3639 = vunpack.c.l.b16 %v1354
        %v3640 = vunpack.c.l.b16 %v1358
        %v3641 = vunpack.c.l.b16 %v1361
        %v3642 = vunpack.c.l.b16 %v1365
        %v3643 = vunpack.c.l.b16 %v1368
        %v3644 = vunpack.c.l.b16 %v1372
        %v3645 = vunpack.c.l.b16 %v1375
        %v3646 = vunpack.c.l.b16 %v1379
        %v3647 = vunpack.c.l.b16 %v1382
        %v3648 = vunpack.c.l.b16 %v1386
        %v3649 = vunpack.c.l.b16 %v1389
        %v3650 = vunpack.c.l.b16 %v1393
        %v3651 = vunpack.c.l.b16 %v1396
        %v3652 = vunpack.c.l.b16 %v1400
        %v3653 = vunpack.c.l.b16 %v1403
        %v3654 = vunpack.c.l.b16 %v1407
        %v3655 = vunpack.c.l.b16 %v1410
        %v3656 = vunpack.c.l.b16 %v1414
        %v3657 = vunpack.c.l.b16 %v1417
        %v3658 = vunpack.c.l.b16 %v1421
        %v3659 = vunpack.c.l.b16 %v1424
        %v3660 = vpack.c.b16 %v3629, %v3628
        %v3661 = vpack.c.b16 %v3631, %v3630
        %v3662 = vpack.c.b16 %v3633, %v3632
        %v3663 = vpack.c.b16 %v3635, %v3634
        %v3664 = vpack.c.b16 %v3637, %v3636
        %v3665 = vpack.c.b16 %v3639, %v3638
        %v3666 = vpack.c.b16 %v3641, %v3640
        %v3667 = vpack.c.b16 %v3643, %v3642
        %v3668 = vpack.c.b16 %v3645, %v3644
        %v3669 = vpack.c.b16 %v3647, %v3646
        %v3670 = vpack.c.b16 %v3649, %v3648
        %v3671 = vpack.c.b16 %v3651, %v3650
        %v3672 = vpack.c.b16 %v3653, %v3652
        %v3673 = vpack.c.b16 %v3655, %v3654
        %v3674 = vpack.c.b16 %v3657, %v3656
        %v3675 = vpack.c.b16 %v3659, %v3658
        %v3708 = vunpack.c.l.b16 %v3612
        %v3709 = vunpack.c.l.b16 %v3613
        %v3710 = vunpack.c.l.b16 %v3614
        %v3711 = vunpack.c.l.b16 %v3615
        %v3712 = vunpack.c.l.b16 %v3616
        %v3713 = vunpack.c.l.b16 %v3617
        %v3714 = vunpack.c.l.b16 %v3618
        %v3715 = vunpack.c.l.b16 %v3619
        %v3716 = vunpack.c.l.b16 %v3620
        %v3717 = vunpack.c.l.b16 %v3621
        %v3718 = vunpack.c.l.b16 %v3622
        %v3719 = vunpack.c.l.b16 %v3623
        %v3720 = vunpack.c.l.b16 %v3624
        %v3721 = vunpack.c.l.b16 %v3625
        %v3722 = vunpack.c.l.b16 %v3626
        %v3723 = vunpack.c.l.b16 %v3627
        %v3724 = vpack.c.b16 %v3709, %v3708
        %v3725 = vpack.c.b16 %v3711, %v3710
        %v3726 = vpack.c.b16 %v3713, %v3712
        %v3727 = vpack.c.b16 %v3715, %v3714
        %v3728 = vpack.c.b16 %v3717, %v3716
        %v3729 = vpack.c.b16 %v3719, %v3718
        %v3730 = vpack.c.b16 %v3721, %v3720
        %v3731 = vpack.c.b16 %v3723, %v3722
        %3740 = vmatprep.subr.bf16.mxu0 0
        %3741 = vmatpush1.bf16.msra.mxu0 %v3724
        %3742 = vmatprep.subr.bf16.mxu0 0
        %3743 = vmatpush1.bf16.msra.mxu0 %v3725
        %3744 = vmatprep.subr.bf16.mxu0 0
        %3745 = vmatpush1.bf16.msra.mxu0 %v3726
        %3746 = vmatprep.subr.bf16.mxu0 0
        %3747 = vmatpush1.bf16.msra.mxu0 %v3727
        %3748 = vmatprep.subr.bf16.mxu0 0
        %3749 = vmatpush1.bf16.msra.mxu0 %v3728
        %3750 = vmatprep.subr.bf16.mxu0 0
        %3751 = vmatpush1.bf16.msra.mxu0 %v3729
        %3752 = vmatprep.subr.bf16.mxu0 0
        %3753 = vmatpush1.bf16.msra.mxu0 %v3730
        %3754 = vmatprep.subr.bf16.mxu0 0
        %3755 = vmatpush1.bf16.msra.mxu0 %v3731
        %3756 = vmatprep.subr.bf16.mxu0 0
        %3757 = vmatpush1.bf16.msra.mxu0 0
        %3758 = vmatprep.subr.bf16.mxu0 0
        %3759 = vmatpush1.bf16.msra.mxu0 0
        %3760 = vmatprep.subr.bf16.mxu0 0
        %3761 = vmatpush1.bf16.msra.mxu0 0
        %3762 = vmatprep.subr.bf16.mxu0 0
        %3763 = vmatpush1.bf16.msra.mxu0 0
        %3764 = vmatprep.subr.bf16.mxu0 0
        %3765 = vmatpush1.bf16.msra.mxu0 0
        %3766 = vmatprep.subr.bf16.mxu0 0
        %3767 = vmatpush1.bf16.msra.mxu0 0
        %3768 = vmatprep.subr.bf16.mxu0 0
        %3769 = vmatpush1.bf16.msra.mxu0 0
        %3770 = vmatprep.subr.bf16.mxu0 0
        %3771 = vmatpush1.bf16.msra.mxu0 0
        %3772 = vmatprep.mubr.bf16.mxu0 0
        %3773 = vmatmul.mubr.bf16.gmra.mrb[0].mxu0 %v3660
        %v3774 = vpop.f32.mrb[0].mxu0
        %v3775 = vadd.f32 0.0, %v3774
        %v3776 = vpop.f32.mrb[0].mxu0
        %v3777 = vpop.f32.mrb[0].mxu0
        %v3778 = vadd.f32 0.0, %v3777
        %v3779 = vpop.f32.mrb[0].mxu0
        %3780 = vmatprep.mubr.bf16.mxu0 0
        %3781 = vmatmul.mubr.bf16.gmra.mrb[0].mxu0 %v3661
        %v3782 = vpop.f32.mrb[0].mxu0
        %v3783 = vadd.f32 0.0, %v3782
        %v3784 = vpop.f32.mrb[0].mxu0
        %v3785 = vpop.f32.mrb[0].mxu0
        %v3786 = vadd.f32 0.0, %v3785
        %v3787 = vpop.f32.mrb[0].mxu0
        %3788 = vmatprep.mubr.bf16.mxu0 0
        %3789 = vmatmul.mubr.bf16.gmra.mrb[0].mxu0 %v3662
        %v3790 = vpop.f32.mrb[0].mxu0
        %v3791 = vadd.f32 0.0, %v3790
        %v3792 = vpop.f32.mrb[0].mxu0
        %v3793 = vpop.f32.mrb[0].mxu0
        %v3794 = vadd.f32 0.0, %v3793
        %v3795 = vpop.f32.mrb[0].mxu0
        %3796 = vmatprep.mubr.bf16.mxu0 0
        %3797 = vmatmul.mubr.bf16.gmra.mrb[0].mxu0 %v3663
        %v3798 = vpop.f32.mrb[0].mxu0
        %v3799 = vadd.f32 0.0, %v3798
        %v3800 = vpop.f32.mrb[0].mxu0
        %v3801 = vpop.f32.mrb[0].mxu0
        %v3802 = vadd.f32 0.0, %v3801
        %v3803 = vpop.f32.mrb[0].mxu0
        %3804 = vmatprep.mubr.bf16.mxu0 0
        %3805 = vmatmul.mubr.bf16.gmra.mrb[0].mxu0 %v3664
        %v3806 = vpop.f32.mrb[0].mxu0
        %v3807 = vadd.f32 0.0, %v3806
        %v3808 = vpop.f32.mrb[0].mxu0
        %v3809 = vpop.f32.mrb[0].mxu0
        %v3810 = vadd.f32 0.0, %v3809
        %v3811 = vpop.f32.mrb[0].mxu0
        %3812 = vmatprep.mubr.bf16.mxu0 0
        %3813 = vmatmul.mubr.bf16.gmra.mrb[0].mxu0 %v3665
        %v3814 = vpop.f32.mrb[0].mxu0
        %v3815 = vadd.f32 0.0, %v3814
        %v3816 = vpop.f32.mrb[0].mxu0
        %v3817 = vpop.f32.mrb[0].mxu0
        %v3818 = vadd.f32 0.0, %v3817
        %v3819 = vpop.f32.mrb[0].mxu0
        %3820 = vmatprep.mubr.bf16.mxu0 0
        %3821 = vmatmul.mubr.bf16.gmra.mrb[0].mxu0 %v3666
        %v3822 = vpop.f32.mrb[0].mxu0
        %v3823 = vadd.f32 0.0, %v3822
        %v3824 = vpop.f32.mrb[0].mxu0
        %v3825 = vpop.f32.mrb[0].mxu0
        %v3826 = vadd.f32 0.0, %v3825
        %v3827 = vpop.f32.mrb[0].mxu0
        %3828 = vmatprep.mubr.bf16.mxu0 0
        %3829 = vmatmul.mubr.bf16.gmra.mrb[0].mxu0 %v3667
        %v3830 = vpop.f32.mrb[0].mxu0
        %v3831 = vadd.f32 0.0, %v3830
        %v3832 = vpop.f32.mrb[0].mxu0
        %v3833 = vpop.f32.mrb[0].mxu0
        %v3834 = vadd.f32 0.0, %v3833
        %v3835 = vpop.f32.mrb[0].mxu0
        %3836 = vmatprep.mubr.bf16.mxu0 0
        %3837 = vmatmul.mubr.bf16.gmra.mrb[0].mxu0 %v3668
        %v3838 = vpop.f32.mrb[0].mxu0
        %v3839 = vadd.f32 0.0, %v3838
        %v3840 = vpop.f32.mrb[0].mxu0
        %v3841 = vpop.f32.mrb[0].mxu0
        %v3842 = vadd.f32 0.0, %v3841
        %v3843 = vpop.f32.mrb[0].mxu0
        %3844 = vmatprep.mubr.bf16.mxu0 0
        %3845 = vmatmul.mubr.bf16.gmra.mrb[0].mxu0 %v3669
        %v3846 = vpop.f32.mrb[0].mxu0
        %v3847 = vadd.f32 0.0, %v3846
        %v3848 = vpop.f32.mrb[0].mxu0
        %v3849 = vpop.f32.mrb[0].mxu0
        %v3850 = vadd.f32 0.0, %v3849
        %v3851 = vpop.f32.mrb[0].mxu0
        %3852 = vmatprep.mubr.bf16.mxu0 0
        %3853 = vmatmul.mubr.bf16.gmra.mrb[0].mxu0 %v3670
        %v3854 = vpop.f32.mrb[0].mxu0
        %v3855 = vadd.f32 0.0, %v3854
        %v3856 = vpop.f32.mrb[0].mxu0
        %v3857 = vpop.f32.mrb[0].mxu0
        %v3858 = vadd.f32 0.0, %v3857
        %v3859 = vpop.f32.mrb[0].mxu0
        %3860 = vmatprep.mubr.bf16.mxu0 0
        %3861 = vmatmul.mubr.bf16.gmra.mrb[0].mxu0 %v3671
        %v3862 = vpop.f32.mrb[0].mxu0
        %v3863 = vadd.f32 0.0, %v3862
        %v3864 = vpop.f32.mrb[0].mxu0
        %v3865 = vpop.f32.mrb[0].mxu0
        %v3866 = vadd.f32 0.0, %v3865
        %v3867 = vpop.f32.mrb[0].mxu0
        %3868 = vmatprep.mubr.bf16.mxu0 0
        %3869 = vmatmul.mubr.bf16.gmra.mrb[0].mxu0 %v3672
        %v3870 = vpop.f32.mrb[0].mxu0
        %v3871 = vadd.f32 0.0, %v3870
        %v3872 = vpop.f32.mrb[0].mxu0
        %v3873 = vpop.f32.mrb[0].mxu0
        %v3874 = vadd.f32 0.0, %v3873
        %v3875 = vpop.f32.mrb[0].mxu0
        %3876 = vmatprep.mubr.bf16.mxu0 0
        %3877 = vmatmul.mubr.bf16.gmra.mrb[0].mxu0 %v3673
        %v3878 = vpop.f32.mrb[0].mxu0
        %v3879 = vadd.f32 0.0, %v3878
        %v3880 = vpop.f32.mrb[0].mxu0
        %v3881 = vpop.f32.mrb[0].mxu0
        %v3882 = vadd.f32 0.0, %v3881
        %v3883 = vpop.f32.mrb[0].mxu0
        %3884 = vmatprep.mubr.bf16.mxu0 0
        %3885 = vmatmul.mubr.bf16.gmra.mrb[0].mxu0 %v3674
        %v3886 = vpop.f32.mrb[0].mxu0
        %v3887 = vadd.f32 0.0, %v3886
        %v3888 = vpop.f32.mrb[0].mxu0
        %v3889 = vpop.f32.mrb[0].mxu0
        %v3890 = vadd.f32 0.0, %v3889
        %v3891 = vpop.f32.mrb[0].mxu0
        %3892 = vmatprep.mubr.bf16.mxu0 0
        %3893 = vmatmul.mubr.bf16.gmra.mrb[0].mxu0 %v3675
        %v3894 = vpop.f32.mrb[0].mxu0
        %v3895 = vadd.f32 0.0, %v3894
        %v3896 = vpop.f32.mrb[0].mxu0
        %v3897 = vpop.f32.mrb[0].mxu0
        %v3898 = vadd.f32 0.0, %v3897
        %v3899 = vpop.f32.mrb[0].mxu0
        %3900 = vdwg.mxu0
        %v3901 = vadd.f32 %v3579, %v3775
        %v3902 = vadd.f32 %v3580, %v3778
        %v3903 = vadd.f32 %v3581, %v3783
        %v3904 = vadd.f32 %v3582, %v3786
        %v3905 = vadd.f32 %v3583, %v3791
        %v3906 = vadd.f32 %v3584, %v3794
        %v3907 = vadd.f32 %v3585, %v3799
        %v3908 = vadd.f32 %v3586, %v3802
        %v3909 = vadd.f32 %v3587, %v3807
        %v3910 = vadd.f32 %v3588, %v3810
        %v3911 = vadd.f32 %v3589, %v3815
        %v3912 = vadd.f32 %v3590, %v3818
        %v3913 = vadd.f32 %v3591, %v3823
        %v3914 = vadd.f32 %v3592, %v3826
        %v3915 = vadd.f32 %v3593, %v3831
        %v3916 = vadd.f32 %v3594, %v3834
        %v3917 = vadd.f32 %v3595, %v3839
        %v3918 = vadd.f32 %v3596, %v3842
        %v3919 = vadd.f32 %v3597, %v3847
        %v3920 = vadd.f32 %v3598, %v3850
        %v3921 = vadd.f32 %v3599, %v3855
        %v3922 = vadd.f32 %v3600, %v3858
        %v3923 = vadd.f32 %v3601, %v3863
        %v3924 = vadd.f32 %v3602, %v3866
        %v3925 = vadd.f32 %v3603, %v3871
        %v3926 = vadd.f32 %v3604, %v3874
        %v3927 = vadd.f32 %v3605, %v3879
        %v3928 = vadd.f32 %v3606, %v3882
        %v3929 = vadd.f32 %v3607, %v3887
        %v3930 = vadd.f32 %v3608, %v3890
        %v3931 = vadd.f32 %v3609, %v3895
        %v3932 = vadd.f32 %v3610, %v3898
        %s3933 = scalar_lea.vmem %s1, 384
        %v3934 = vld [vmem:[%s3933] sm:$0xf]
        %v3935 = vld [vmem:[%s3933 + $0x4] sm:$0xf]
        %v3936 = vld [vmem:[%s3933 + $0x8] sm:$0xf]
        %v3937 = vld [vmem:[%s3933 + $0xc] sm:$0xf]
        %v3938 = vld [vmem:[%s3933 + $0x10] sm:$0xf]
        %v3939 = vld [vmem:[%s3933 + $0x14] sm:$0xf]
        %v3940 = vld [vmem:[%s3933 + $0x18] sm:$0xf]
        %v3941 = vld [vmem:[%s3933 + $0x1c] sm:$0xf]
        %v3942 = vld [vmem:[%s3933 + $0x20] sm:$0xf]
        %v3943 = vld [vmem:[%s3933 + $0x24] sm:$0xf]
        %v3944 = vld [vmem:[%s3933 + $0x28] sm:$0xf]
        %v3945 = vld [vmem:[%s3933 + $0x2c] sm:$0xf]
        %v3946 = vld [vmem:[%s3933 + $0x30] sm:$0xf]
        %v3947 = vld [vmem:[%s3933 + $0x34] sm:$0xf]
        %v3948 = vld [vmem:[%s3933 + $0x38] sm:$0xf]
        %v3949 = vld [vmem:[%s3933 + $0x3c] sm:$0xf]
        %v3966 = vunpack.c.l.b16 %v1426
        %v3967 = vunpack.c.l.b16 %v1427
        %v3968 = vunpack.c.l.b16 %v1428
        %v3969 = vunpack.c.l.b16 %v1429
        %v3970 = vunpack.c.l.b16 %v1430
        %v3971 = vunpack.c.l.b16 %v1431
        %v3972 = vunpack.c.l.b16 %v1432
        %v3973 = vunpack.c.l.b16 %v1433
        %v3974 = vunpack.c.l.b16 %v1434
        %v3975 = vunpack.c.l.b16 %v1435
        %v3976 = vunpack.c.l.b16 %v1436
        %v3977 = vunpack.c.l.b16 %v1437
        %v3978 = vunpack.c.l.b16 %v1438
        %v3979 = vunpack.c.l.b16 %v1439
        %v3980 = vunpack.c.l.b16 %v1440
        %v3981 = vunpack.c.l.b16 %v1441
        %v3982 = vunpack.c.l.b16 %v1442
        %v3983 = vunpack.c.l.b16 %v1443
        %v3984 = vunpack.c.l.b16 %v1444
        %v3985 = vunpack.c.l.b16 %v1445
        %v3986 = vunpack.c.l.b16 %v1446
        %v3987 = vunpack.c.l.b16 %v1447
        %v3988 = vunpack.c.l.b16 %v1448
        %v3989 = vunpack.c.l.b16 %v1449
        %v3990 = vunpack.c.l.b16 %v1450
        %v3991 = vunpack.c.l.b16 %v1451
        %v3992 = vunpack.c.l.b16 %v1452
        %v3993 = vunpack.c.l.b16 %v1453
        %v3994 = vunpack.c.l.b16 %v1454
        %v3995 = vunpack.c.l.b16 %v1455
        %v3996 = vunpack.c.l.b16 %v1456
        %v3997 = vunpack.c.l.b16 %v1457
        %v3998 = vpack.c.b16 %v3967, %v3966
        %v3999 = vpack.c.b16 %v3969, %v3968
        %v4000 = vpack.c.b16 %v3971, %v3970
        %v4001 = vpack.c.b16 %v3973, %v3972
        %v4002 = vpack.c.b16 %v3975, %v3974
        %v4003 = vpack.c.b16 %v3977, %v3976
        %v4004 = vpack.c.b16 %v3979, %v3978
        %v4005 = vpack.c.b16 %v3981, %v3980
        %v4006 = vpack.c.b16 %v3983, %v3982
        %v4007 = vpack.c.b16 %v3985, %v3984
        %v4008 = vpack.c.b16 %v3987, %v3986
        %v4009 = vpack.c.b16 %v3989, %v3988
        %v4010 = vpack.c.b16 %v3991, %v3990
        %v4011 = vpack.c.b16 %v3993, %v3992
        %v4012 = vpack.c.b16 %v3995, %v3994
        %v4013 = vpack.c.b16 %v3997, %v3996
        %v4046 = vunpack.c.l.b16 %v3934
        %v4047 = vunpack.c.l.b16 %v3935
        %v4048 = vunpack.c.l.b16 %v3936
        %v4049 = vunpack.c.l.b16 %v3937
        %v4050 = vunpack.c.l.b16 %v3938
        %v4051 = vunpack.c.l.b16 %v3939
        %v4052 = vunpack.c.l.b16 %v3940
        %v4053 = vunpack.c.l.b16 %v3941
        %v4054 = vunpack.c.l.b16 %v3942
        %v4055 = vunpack.c.l.b16 %v3943
        %v4056 = vunpack.c.l.b16 %v3944
        %v4057 = vunpack.c.l.b16 %v3945
        %v4058 = vunpack.c.l.b16 %v3946
        %v4059 = vunpack.c.l.b16 %v3947
        %v4060 = vunpack.c.l.b16 %v3948
        %v4061 = vunpack.c.l.b16 %v3949
        %v4062 = vpack.c.b16 %v4047, %v4046
        %v4063 = vpack.c.b16 %v4049, %v4048
        %v4064 = vpack.c.b16 %v4051, %v4050
        %v4065 = vpack.c.b16 %v4053, %v4052
        %v4066 = vpack.c.b16 %v4055, %v4054
        %v4067 = vpack.c.b16 %v4057, %v4056
        %v4068 = vpack.c.b16 %v4059, %v4058
        %v4069 = vpack.c.b16 %v4061, %v4060
        %4078 = vmatprep.subr.bf16.mxu0 0
        %4079 = vmatpush1.bf16.msra.mxu0 %v4062
        %4080 = vmatprep.subr.bf16.mxu0 0
        %4081 = vmatpush1.bf16.msra.mxu0 %v4063
        %4082 = vmatprep.subr.bf16.mxu0 0
        %4083 = vmatpush1.bf16.msra.mxu0 %v4064
        %4084 = vmatprep.subr.bf16.mxu0 0
        %4085 = vmatpush1.bf16.msra.mxu0 %v4065
        %4086 = vmatprep.subr.bf16.mxu0 0
        %4087 = vmatpush1.bf16.msra.mxu0 %v4066
        %4088 = vmatprep.subr.bf16.mxu0 0
        %4089 = vmatpush1.bf16.msra.mxu0 %v4067
        %4090 = vmatprep.subr.bf16.mxu0 0
        %4091 = vmatpush1.bf16.msra.mxu0 %v4068
        %4092 = vmatprep.subr.bf16.mxu0 0
        %4093 = vmatpush1.bf16.msra.mxu0 %v4069
        %4094 = vmatprep.subr.bf16.mxu0 0
        %4095 = vmatpush1.bf16.msra.mxu0 0
        %4096 = vmatprep.subr.bf16.mxu0 0
        %4097 = vmatpush1.bf16.msra.mxu0 0
        %4098 = vmatprep.subr.bf16.mxu0 0
        %4099 = vmatpush1.bf16.msra.mxu0 0
        %4100 = vmatprep.subr.bf16.mxu0 0
        %4101 = vmatpush1.bf16.msra.mxu0 0
        %4102 = vmatprep.subr.bf16.mxu0 0
        %4103 = vmatpush1.bf16.msra.mxu0 0
        %4104 = vmatprep.subr.bf16.mxu0 0
        %4105 = vmatpush1.bf16.msra.mxu0 0
        %4106 = vmatprep.subr.bf16.mxu0 0
        %4107 = vmatpush1.bf16.msra.mxu0 0
        %4108 = vmatprep.subr.bf16.mxu0 0
        %4109 = vmatpush1.bf16.msra.mxu0 0
        %4110 = vmatprep.mubr.bf16.mxu0 0
        %4111 = vmatmul.mubr.bf16.gmra.mrb[0].mxu0 %v3998
        %v4112 = vpop.f32.mrb[0].mxu0
        %v4113 = vadd.f32 0.0, %v4112
        %v4114 = vpop.f32.mrb[0].mxu0
        %v4115 = vpop.f32.mrb[0].mxu0
        %v4116 = vadd.f32 0.0, %v4115
        %v4117 = vpop.f32.mrb[0].mxu0
        %4118 = vmatprep.mubr.bf16.mxu0 0
        %4119 = vmatmul.mubr.bf16.gmra.mrb[0].mxu0 %v3999
        %v4120 = vpop.f32.mrb[0].mxu0
        %v4121 = vadd.f32 0.0, %v4120
        %v4122 = vpop.f32.mrb[0].mxu0
        %v4123 = vpop.f32.mrb[0].mxu0
        %v4124 = vadd.f32 0.0, %v4123
        %v4125 = vpop.f32.mrb[0].mxu0
        %4126 = vmatprep.mubr.bf16.mxu0 0
        %4127 = vmatmul.mubr.bf16.gmra.mrb[0].mxu0 %v4000
        %v4128 = vpop.f32.mrb[0].mxu0
        %v4129 = vadd.f32 0.0, %v4128
        %v4130 = vpop.f32.mrb[0].mxu0
        %v4131 = vpop.f32.mrb[0].mxu0
        %v4132 = vadd.f32 0.0, %v4131
        %v4133 = vpop.f32.mrb[0].mxu0
        %4134 = vmatprep.mubr.bf16.mxu0 0
        %4135 = vmatmul.mubr.bf16.gmra.mrb[0].mxu0 %v4001
        %v4136 = vpop.f32.mrb[0].mxu0
        %v4137 = vadd.f32 0.0, %v4136
        %v4138 = vpop.f32.mrb[0].mxu0
        %v4139 = vpop.f32.mrb[0].mxu0
        %v4140 = vadd.f32 0.0, %v4139
        %v4141 = vpop.f32.mrb[0].mxu0
        %4142 = vmatprep.mubr.bf16.mxu0 0
        %4143 = vmatmul.mubr.bf16.gmra.mrb[0].mxu0 %v4002
        %v4144 = vpop.f32.mrb[0].mxu0
        %v4145 = vadd.f32 0.0, %v4144
        %v4146 = vpop.f32.mrb[0].mxu0
        %v4147 = vpop.f32.mrb[0].mxu0
        %v4148 = vadd.f32 0.0, %v4147
        %v4149 = vpop.f32.mrb[0].mxu0
        %4150 = vmatprep.mubr.bf16.mxu0 0
        %4151 = vmatmul.mubr.bf16.gmra.mrb[0].mxu0 %v4003
        %v4152 = vpop.f32.mrb[0].mxu0
        %v4153 = vadd.f32 0.0, %v4152
        %v4154 = vpop.f32.mrb[0].mxu0
        %v4155 = vpop.f32.mrb[0].mxu0
        %v4156 = vadd.f32 0.0, %v4155
        %v4157 = vpop.f32.mrb[0].mxu0
        %4158 = vmatprep.mubr.bf16.mxu0 0
        %4159 = vmatmul.mubr.bf16.gmra.mrb[0].mxu0 %v4004
        %v4160 = vpop.f32.mrb[0].mxu0
        %v4161 = vadd.f32 0.0, %v4160
        %v4162 = vpop.f32.mrb[0].mxu0
        %v4163 = vpop.f32.mrb[0].mxu0
        %v4164 = vadd.f32 0.0, %v4163
        %v4165 = vpop.f32.mrb[0].mxu0
        %4166 = vmatprep.mubr.bf16.mxu0 0
        %4167 = vmatmul.mubr.bf16.gmra.mrb[0].mxu0 %v4005
        %v4168 = vpop.f32.mrb[0].mxu0
        %v4169 = vadd.f32 0.0, %v4168
        %v4170 = vpop.f32.mrb[0].mxu0
        %v4171 = vpop.f32.mrb[0].mxu0
        %v4172 = vadd.f32 0.0, %v4171
        %v4173 = vpop.f32.mrb[0].mxu0
        %4174 = vmatprep.mubr.bf16.mxu0 0
        %4175 = vmatmul.mubr.bf16.gmra.mrb[0].mxu0 %v4006
        %v4176 = vpop.f32.mrb[0].mxu0
        %v4177 = vadd.f32 0.0, %v4176
        %v4178 = vpop.f32.mrb[0].mxu0
        %v4179 = vpop.f32.mrb[0].mxu0
        %v4180 = vadd.f32 0.0, %v4179
        %v4181 = vpop.f32.mrb[0].mxu0
        %4182 = vmatprep.mubr.bf16.mxu0 0
        %4183 = vmatmul.mubr.bf16.gmra.mrb[0].mxu0 %v4007
        %v4184 = vpop.f32.mrb[0].mxu0
        %v4185 = vadd.f32 0.0, %v4184
        %v4186 = vpop.f32.mrb[0].mxu0
        %v4187 = vpop.f32.mrb[0].mxu0
        %v4188 = vadd.f32 0.0, %v4187
        %v4189 = vpop.f32.mrb[0].mxu0
        %4190 = vmatprep.mubr.bf16.mxu0 0
        %4191 = vmatmul.mubr.bf16.gmra.mrb[0].mxu0 %v4008
        %v4192 = vpop.f32.mrb[0].mxu0
        %v4193 = vadd.f32 0.0, %v4192
        %v4194 = vpop.f32.mrb[0].mxu0
        %v4195 = vpop.f32.mrb[0].mxu0
        %v4196 = vadd.f32 0.0, %v4195
        %v4197 = vpop.f32.mrb[0].mxu0
        %4198 = vmatprep.mubr.bf16.mxu0 0
        %4199 = vmatmul.mubr.bf16.gmra.mrb[0].mxu0 %v4009
        %v4200 = vpop.f32.mrb[0].mxu0
        %v4201 = vadd.f32 0.0, %v4200
        %v4202 = vpop.f32.mrb[0].mxu0
        %v4203 = vpop.f32.mrb[0].mxu0
        %v4204 = vadd.f32 0.0, %v4203
        %v4205 = vpop.f32.mrb[0].mxu0
        %4206 = vmatprep.mubr.bf16.mxu0 0
        %4207 = vmatmul.mubr.bf16.gmra.mrb[0].mxu0 %v4010
        %v4208 = vpop.f32.mrb[0].mxu0
        %v4209 = vadd.f32 0.0, %v4208
        %v4210 = vpop.f32.mrb[0].mxu0
        %v4211 = vpop.f32.mrb[0].mxu0
        %v4212 = vadd.f32 0.0, %v4211
        %v4213 = vpop.f32.mrb[0].mxu0
        %4214 = vmatprep.mubr.bf16.mxu0 0
        %4215 = vmatmul.mubr.bf16.gmra.mrb[0].mxu0 %v4011
        %v4216 = vpop.f32.mrb[0].mxu0
        %v4217 = vadd.f32 0.0, %v4216
        %v4218 = vpop.f32.mrb[0].mxu0
        %v4219 = vpop.f32.mrb[0].mxu0
        %v4220 = vadd.f32 0.0, %v4219
        %v4221 = vpop.f32.mrb[0].mxu0
        %4222 = vmatprep.mubr.bf16.mxu0 0
        %4223 = vmatmul.mubr.bf16.gmra.mrb[0].mxu0 %v4012
        %v4224 = vpop.f32.mrb[0].mxu0
        %v4225 = vadd.f32 0.0, %v4224
        %v4226 = vpop.f32.mrb[0].mxu0
        %v4227 = vpop.f32.mrb[0].mxu0
        %v4228 = vadd.f32 0.0, %v4227
        %v4229 = vpop.f32.mrb[0].mxu0
        %4230 = vmatprep.mubr.bf16.mxu0 0
        %4231 = vmatmul.mubr.bf16.gmra.mrb[0].mxu0 %v4013
        %v4232 = vpop.f32.mrb[0].mxu0
        %v4233 = vadd.f32 0.0, %v4232
        %v4234 = vpop.f32.mrb[0].mxu0
        %v4235 = vpop.f32.mrb[0].mxu0
        %v4236 = vadd.f32 0.0, %v4235
        %v4237 = vpop.f32.mrb[0].mxu0
        %4238 = vdwg.mxu0
        %v4239 = vadd.f32 %v3901, %v4113
        %v4240 = vadd.f32 %v3902, %v4116
        %v4241 = vadd.f32 %v3903, %v4121
        %v4242 = vadd.f32 %v3904, %v4124
        %v4243 = vadd.f32 %v3905, %v4129
        %v4244 = vadd.f32 %v3906, %v4132
        %v4245 = vadd.f32 %v3907, %v4137
        %v4246 = vadd.f32 %v3908, %v4140
        %v4247 = vadd.f32 %v3909, %v4145
        %v4248 = vadd.f32 %v3910, %v4148
        %v4249 = vadd.f32 %v3911, %v4153
        %v4250 = vadd.f32 %v3912, %v4156
        %v4251 = vadd.f32 %v3913, %v4161
        %v4252 = vadd.f32 %v3914, %v4164
        %v4253 = vadd.f32 %v3915, %v4169
        %v4254 = vadd.f32 %v3916, %v4172
        %v4255 = vadd.f32 %v3917, %v4177
        %v4256 = vadd.f32 %v3918, %v4180
        %v4257 = vadd.f32 %v3919, %v4185
        %v4258 = vadd.f32 %v3920, %v4188
        %v4259 = vadd.f32 %v3921, %v4193
        %v4260 = vadd.f32 %v3922, %v4196
        %v4261 = vadd.f32 %v3923, %v4201
        %v4262 = vadd.f32 %v3924, %v4204
        %v4263 = vadd.f32 %v3925, %v4209
        %v4264 = vadd.f32 %v3926, %v4212
        %v4265 = vadd.f32 %v3927, %v4217
        %v4266 = vadd.f32 %v3928, %v4220
        %v4267 = vadd.f32 %v3929, %v4225
        %v4268 = vadd.f32 %v3930, %v4228
        %v4269 = vadd.f32 %v3931, %v4233
        %v4270 = vadd.f32 %v3932, %v4236
        %s4271 = scalar_lea.vmem %s1, 448
        %v4272 = vld [vmem:[%s4271] sm:$0xf]
        %v4273 = vld [vmem:[%s4271 + $0x4] sm:$0xf]
        %v4274 = vld [vmem:[%s4271 + $0x8] sm:$0xf]
        %v4275 = vld [vmem:[%s4271 + $0xc] sm:$0xf]
        %v4276 = vld [vmem:[%s4271 + $0x10] sm:$0xf]
        %v4277 = vld [vmem:[%s4271 + $0x14] sm:$0xf]
        %v4278 = vld [vmem:[%s4271 + $0x18] sm:$0xf]
        %v4279 = vld [vmem:[%s4271 + $0x1c] sm:$0xf]
        %v4280 = vld [vmem:[%s4271 + $0x20] sm:$0xf]
        %v4281 = vld [vmem:[%s4271 + $0x24] sm:$0xf]
        %v4282 = vld [vmem:[%s4271 + $0x28] sm:$0xf]
        %v4283 = vld [vmem:[%s4271 + $0x2c] sm:$0xf]
        %v4284 = vld [vmem:[%s4271 + $0x30] sm:$0xf]
        %v4285 = vld [vmem:[%s4271 + $0x34] sm:$0xf]
        %v4286 = vld [vmem:[%s4271 + $0x38] sm:$0xf]
        %v4287 = vld [vmem:[%s4271 + $0x3c] sm:$0xf]
        %v4288 = vunpack.c.l.b16 %v1487
        %v4289 = vunpack.c.l.b16 %v1497
        %v4290 = vunpack.c.l.b16 %v1511
        %v4291 = vunpack.c.l.b16 %v1521
        %v4292 = vunpack.c.l.b16 %v1535
        %v4293 = vunpack.c.l.b16 %v1545
        %v4294 = vunpack.c.l.b16 %v1559
        %v4295 = vunpack.c.l.b16 %v1569
        %v4296 = vunpack.c.l.b16 %v1583
        %v4297 = vunpack.c.l.b16 %v1593
        %v4298 = vunpack.c.l.b16 %v1607
        %v4299 = vunpack.c.l.b16 %v1617
        %v4300 = vunpack.c.l.b16 %v1631
        %v4301 = vunpack.c.l.b16 %v1641
        %v4302 = vunpack.c.l.b16 %v1655
        %v4303 = vunpack.c.l.b16 %v1665
        %v4304 = vunpack.c.l.b16 %v1679
        %v4305 = vunpack.c.l.b16 %v1689
        %v4306 = vunpack.c.l.b16 %v1703
        %v4307 = vunpack.c.l.b16 %v1713
        %v4308 = vunpack.c.l.b16 %v1727
        %v4309 = vunpack.c.l.b16 %v1737
        %v4310 = vunpack.c.l.b16 %v1751
        %v4311 = vunpack.c.l.b16 %v1761
        %v4312 = vunpack.c.l.b16 %v1775
        %v4313 = vunpack.c.l.b16 %v1785
        %v4314 = vunpack.c.l.b16 %v1799
        %v4315 = vunpack.c.l.b16 %v1809
        %v4316 = vunpack.c.l.b16 %v1823
        %v4317 = vunpack.c.l.b16 %v1833
        %v4318 = vunpack.c.l.b16 %v1847
        %v4319 = vunpack.c.l.b16 %v1857
        %v4320 = vpack.c.b16 %v4289, %v4288
        %v4321 = vpack.c.b16 %v4291, %v4290
        %v4322 = vpack.c.b16 %v4293, %v4292
        %v4323 = vpack.c.b16 %v4295, %v4294
        %v4324 = vpack.c.b16 %v4297, %v4296
        %v4325 = vpack.c.b16 %v4299, %v4298
        %v4326 = vpack.c.b16 %v4301, %v4300
        %v4327 = vpack.c.b16 %v4303, %v4302
        %v4328 = vpack.c.b16 %v4305, %v4304
        %v4329 = vpack.c.b16 %v4307, %v4306
        %v4330 = vpack.c.b16 %v4309, %v4308
        %v4331 = vpack.c.b16 %v4311, %v4310
        %v4332 = vpack.c.b16 %v4313, %v4312
        %v4333 = vpack.c.b16 %v4315, %v4314
        %v4334 = vpack.c.b16 %v4317, %v4316
        %v4335 = vpack.c.b16 %v4319, %v4318
        %v4368 = vunpack.c.l.b16 %v4272
        %v4369 = vunpack.c.l.b16 %v4273
        %v4370 = vunpack.c.l.b16 %v4274
        %v4371 = vunpack.c.l.b16 %v4275
        %v4372 = vunpack.c.l.b16 %v4276
        %v4373 = vunpack.c.l.b16 %v4277
        %v4374 = vunpack.c.l.b16 %v4278
        %v4375 = vunpack.c.l.b16 %v4279
        %v4376 = vunpack.c.l.b16 %v4280
        %v4377 = vunpack.c.l.b16 %v4281
        %v4378 = vunpack.c.l.b16 %v4282
        %v4379 = vunpack.c.l.b16 %v4283
        %v4380 = vunpack.c.l.b16 %v4284
        %v4381 = vunpack.c.l.b16 %v4285
        %v4382 = vunpack.c.l.b16 %v4286
        %v4383 = vunpack.c.l.b16 %v4287
        %v4384 = vpack.c.b16 %v4369, %v4368
        %v4385 = vpack.c.b16 %v4371, %v4370
        %v4386 = vpack.c.b16 %v4373, %v4372
        %v4387 = vpack.c.b16 %v4375, %v4374
        %v4388 = vpack.c.b16 %v4377, %v4376
        %v4389 = vpack.c.b16 %v4379, %v4378
        %v4390 = vpack.c.b16 %v4381, %v4380
        %v4391 = vpack.c.b16 %v4383, %v4382
        %4400 = vmatprep.subr.bf16.mxu0 0
        %4401 = vmatpush1.bf16.msra.mxu0 %v4384
        %4402 = vmatprep.subr.bf16.mxu0 0
        %4403 = vmatpush1.bf16.msra.mxu0 %v4385
        %4404 = vmatprep.subr.bf16.mxu0 0
        %4405 = vmatpush1.bf16.msra.mxu0 %v4386
        %4406 = vmatprep.subr.bf16.mxu0 0
        %4407 = vmatpush1.bf16.msra.mxu0 %v4387
        %4408 = vmatprep.subr.bf16.mxu0 0
        %4409 = vmatpush1.bf16.msra.mxu0 %v4388
        %4410 = vmatprep.subr.bf16.mxu0 0
        %4411 = vmatpush1.bf16.msra.mxu0 %v4389
        %4412 = vmatprep.subr.bf16.mxu0 0
        %4413 = vmatpush1.bf16.msra.mxu0 %v4390
        %4414 = vmatprep.subr.bf16.mxu0 0
        %4415 = vmatpush1.bf16.msra.mxu0 %v4391
        %4416 = vmatprep.subr.bf16.mxu0 0
        %4417 = vmatpush1.bf16.msra.mxu0 0
        %4418 = vmatprep.subr.bf16.mxu0 0
        %4419 = vmatpush1.bf16.msra.mxu0 0
        %4420 = vmatprep.subr.bf16.mxu0 0
        %4421 = vmatpush1.bf16.msra.mxu0 0
        %4422 = vmatprep.subr.bf16.mxu0 0
        %4423 = vmatpush1.bf16.msra.mxu0 0
        %4424 = vmatprep.subr.bf16.mxu0 0
        %4425 = vmatpush1.bf16.msra.mxu0 0
        %4426 = vmatprep.subr.bf16.mxu0 0
        %4427 = vmatpush1.bf16.msra.mxu0 0
        %4428 = vmatprep.subr.bf16.mxu0 0
        %4429 = vmatpush1.bf16.msra.mxu0 0
        %4430 = vmatprep.subr.bf16.mxu0 0
        %4431 = vmatpush1.bf16.msra.mxu0 0
        %4432 = vmatprep.mubr.bf16.mxu0 0
        %4433 = vmatmul.mubr.bf16.gmra.mrb[0].mxu0 %v4320
        %v4434 = vpop.f32.mrb[0].mxu0
        %v4435 = vadd.f32 0.0, %v4434
        %v4436 = vpop.f32.mrb[0].mxu0
        %v4437 = vpop.f32.mrb[0].mxu0
        %v4438 = vadd.f32 0.0, %v4437
        %v4439 = vpop.f32.mrb[0].mxu0
        %4440 = vmatprep.mubr.bf16.mxu0 0
        %4441 = vmatmul.mubr.bf16.gmra.mrb[0].mxu0 %v4321
        %v4442 = vpop.f32.mrb[0].mxu0
        %v4443 = vadd.f32 0.0, %v4442
        %v4444 = vpop.f32.mrb[0].mxu0
        %v4445 = vpop.f32.mrb[0].mxu0
        %v4446 = vadd.f32 0.0, %v4445
        %v4447 = vpop.f32.mrb[0].mxu0
        %4448 = vmatprep.mubr.bf16.mxu0 0
        %4449 = vmatmul.mubr.bf16.gmra.mrb[0].mxu0 %v4322
        %v4450 = vpop.f32.mrb[0].mxu0
        %v4451 = vadd.f32 0.0, %v4450
        %v4452 = vpop.f32.mrb[0].mxu0
        %v4453 = vpop.f32.mrb[0].mxu0
        %v4454 = vadd.f32 0.0, %v4453
        %v4455 = vpop.f32.mrb[0].mxu0
        %4456 = vmatprep.mubr.bf16.mxu0 0
        %4457 = vmatmul.mubr.bf16.gmra.mrb[0].mxu0 %v4323
        %v4458 = vpop.f32.mrb[0].mxu0
        %v4459 = vadd.f32 0.0, %v4458
        %v4460 = vpop.f32.mrb[0].mxu0
        %v4461 = vpop.f32.mrb[0].mxu0
        %v4462 = vadd.f32 0.0, %v4461
        %v4463 = vpop.f32.mrb[0].mxu0
        %4464 = vmatprep.mubr.bf16.mxu0 0
        %4465 = vmatmul.mubr.bf16.gmra.mrb[0].mxu0 %v4324
        %v4466 = vpop.f32.mrb[0].mxu0
        %v4467 = vadd.f32 0.0, %v4466
        %v4468 = vpop.f32.mrb[0].mxu0
        %v4469 = vpop.f32.mrb[0].mxu0
        %v4470 = vadd.f32 0.0, %v4469
        %v4471 = vpop.f32.mrb[0].mxu0
        %4472 = vmatprep.mubr.bf16.mxu0 0
        %4473 = vmatmul.mubr.bf16.gmra.mrb[0].mxu0 %v4325
        %v4474 = vpop.f32.mrb[0].mxu0
        %v4475 = vadd.f32 0.0, %v4474
        %v4476 = vpop.f32.mrb[0].mxu0
        %v4477 = vpop.f32.mrb[0].mxu0
        %v4478 = vadd.f32 0.0, %v4477
        %v4479 = vpop.f32.mrb[0].mxu0
        %4480 = vmatprep.mubr.bf16.mxu0 0
        %4481 = vmatmul.mubr.bf16.gmra.mrb[0].mxu0 %v4326
        %v4482 = vpop.f32.mrb[0].mxu0
        %v4483 = vadd.f32 0.0, %v4482
        %v4484 = vpop.f32.mrb[0].mxu0
        %v4485 = vpop.f32.mrb[0].mxu0
        %v4486 = vadd.f32 0.0, %v4485
        %v4487 = vpop.f32.mrb[0].mxu0
        %4488 = vmatprep.mubr.bf16.mxu0 0
        %4489 = vmatmul.mubr.bf16.gmra.mrb[0].mxu0 %v4327
        %v4490 = vpop.f32.mrb[0].mxu0
        %v4491 = vadd.f32 0.0, %v4490
        %v4492 = vpop.f32.mrb[0].mxu0
        %v4493 = vpop.f32.mrb[0].mxu0
        %v4494 = vadd.f32 0.0, %v4493
        %v4495 = vpop.f32.mrb[0].mxu0
        %4496 = vmatprep.mubr.bf16.mxu0 0
        %4497 = vmatmul.mubr.bf16.gmra.mrb[0].mxu0 %v4328
        %v4498 = vpop.f32.mrb[0].mxu0
        %v4499 = vadd.f32 0.0, %v4498
        %v4500 = vpop.f32.mrb[0].mxu0
        %v4501 = vpop.f32.mrb[0].mxu0
        %v4502 = vadd.f32 0.0, %v4501
        %v4503 = vpop.f32.mrb[0].mxu0
        %4504 = vmatprep.mubr.bf16.mxu0 0
        %4505 = vmatmul.mubr.bf16.gmra.mrb[0].mxu0 %v4329
        %v4506 = vpop.f32.mrb[0].mxu0
        %v4507 = vadd.f32 0.0, %v4506
        %v4508 = vpop.f32.mrb[0].mxu0
        %v4509 = vpop.f32.mrb[0].mxu0
        %v4510 = vadd.f32 0.0, %v4509
        %v4511 = vpop.f32.mrb[0].mxu0
        %4512 = vmatprep.mubr.bf16.mxu0 0
        %4513 = vmatmul.mubr.bf16.gmra.mrb[0].mxu0 %v4330
        %v4514 = vpop.f32.mrb[0].mxu0
        %v4515 = vadd.f32 0.0, %v4514
        %v4516 = vpop.f32.mrb[0].mxu0
        %v4517 = vpop.f32.mrb[0].mxu0
        %v4518 = vadd.f32 0.0, %v4517
        %v4519 = vpop.f32.mrb[0].mxu0
        %4520 = vmatprep.mubr.bf16.mxu0 0
        %4521 = vmatmul.mubr.bf16.gmra.mrb[0].mxu0 %v4331
        %v4522 = vpop.f32.mrb[0].mxu0
        %v4523 = vadd.f32 0.0, %v4522
        %v4524 = vpop.f32.mrb[0].mxu0
        %v4525 = vpop.f32.mrb[0].mxu0
        %v4526 = vadd.f32 0.0, %v4525
        %v4527 = vpop.f32.mrb[0].mxu0
        %4528 = vmatprep.mubr.bf16.mxu0 0
        %4529 = vmatmul.mubr.bf16.gmra.mrb[0].mxu0 %v4332
        %v4530 = vpop.f32.mrb[0].mxu0
        %v4531 = vadd.f32 0.0, %v4530
        %v4532 = vpop.f32.mrb[0].mxu0
        %v4533 = vpop.f32.mrb[0].mxu0
        %v4534 = vadd.f32 0.0, %v4533
        %v4535 = vpop.f32.mrb[0].mxu0
        %4536 = vmatprep.mubr.bf16.mxu0 0
        %4537 = vmatmul.mubr.bf16.gmra.mrb[0].mxu0 %v4333
        %v4538 = vpop.f32.mrb[0].mxu0
        %v4539 = vadd.f32 0.0, %v4538
        %v4540 = vpop.f32.mrb[0].mxu0
        %v4541 = vpop.f32.mrb[0].mxu0
        %v4542 = vadd.f32 0.0, %v4541
        %v4543 = vpop.f32.mrb[0].mxu0
        %4544 = vmatprep.mubr.bf16.mxu0 0
        %4545 = vmatmul.mubr.bf16.gmra.mrb[0].mxu0 %v4334
        %v4546 = vpop.f32.mrb[0].mxu0
        %v4547 = vadd.f32 0.0, %v4546
        %v4548 = vpop.f32.mrb[0].mxu0
        %v4549 = vpop.f32.mrb[0].mxu0
        %v4550 = vadd.f32 0.0, %v4549
        %v4551 = vpop.f32.mrb[0].mxu0
        %4552 = vmatprep.mubr.bf16.mxu0 0
        %4553 = vmatmul.mubr.bf16.gmra.mrb[0].mxu0 %v4335
        %v4554 = vpop.f32.mrb[0].mxu0
        %v4555 = vadd.f32 0.0, %v4554
        %v4556 = vpop.f32.mrb[0].mxu0
        %v4557 = vpop.f32.mrb[0].mxu0
        %v4558 = vadd.f32 0.0, %v4557
        %v4559 = vpop.f32.mrb[0].mxu0
        %4560 = vdwg.mxu0
        %v4561 = vadd.f32 %v4239, %v4435
        %v4562 = vadd.f32 %v4240, %v4438
        %v4563 = vadd.f32 %v4241, %v4443
        %v4564 = vadd.f32 %v4242, %v4446
        %v4565 = vadd.f32 %v4243, %v4451
        %v4566 = vadd.f32 %v4244, %v4454
        %v4567 = vadd.f32 %v4245, %v4459
        %v4568 = vadd.f32 %v4246, %v4462
        %v4569 = vadd.f32 %v4247, %v4467
        %v4570 = vadd.f32 %v4248, %v4470
        %v4571 = vadd.f32 %v4249, %v4475
        %v4572 = vadd.f32 %v4250, %v4478
        %v4573 = vadd.f32 %v4251, %v4483
        %v4574 = vadd.f32 %v4252, %v4486
        %v4575 = vadd.f32 %v4253, %v4491
        %v4576 = vadd.f32 %v4254, %v4494
        %v4577 = vadd.f32 %v4255, %v4499
        %v4578 = vadd.f32 %v4256, %v4502
        %v4579 = vadd.f32 %v4257, %v4507
        %v4580 = vadd.f32 %v4258, %v4510
        %v4581 = vadd.f32 %v4259, %v4515
        %v4582 = vadd.f32 %v4260, %v4518
        %v4583 = vadd.f32 %v4261, %v4523
        %v4584 = vadd.f32 %v4262, %v4526
        %v4585 = vadd.f32 %v4263, %v4531
        %v4586 = vadd.f32 %v4264, %v4534
        %v4587 = vadd.f32 %v4265, %v4539
        %v4588 = vadd.f32 %v4266, %v4542
        %v4589 = vadd.f32 %v4267, %v4547
        %v4590 = vadd.f32 %v4268, %v4550
        %v4591 = vadd.f32 %v4269, %v4555
        %v4592 = vadd.f32 %v4270, %v4558
        %s4593 = scalar_lea.vmem %s1, 512
        %v4594 = vld [vmem:[%s4593] sm:$0xf]
        %v4595 = vld [vmem:[%s4593 + $0x4] sm:$0xf]
        %v4596 = vld [vmem:[%s4593 + $0x8] sm:$0xf]
        %v4597 = vld [vmem:[%s4593 + $0xc] sm:$0xf]
        %v4598 = vld [vmem:[%s4593 + $0x10] sm:$0xf]
        %v4599 = vld [vmem:[%s4593 + $0x14] sm:$0xf]
        %v4600 = vld [vmem:[%s4593 + $0x18] sm:$0xf]
        %v4601 = vld [vmem:[%s4593 + $0x1c] sm:$0xf]
        %v4602 = vld [vmem:[%s4593 + $0x20] sm:$0xf]
        %v4603 = vld [vmem:[%s4593 + $0x24] sm:$0xf]
        %v4604 = vld [vmem:[%s4593 + $0x28] sm:$0xf]
        %v4605 = vld [vmem:[%s4593 + $0x2c] sm:$0xf]
        %v4606 = vld [vmem:[%s4593 + $0x30] sm:$0xf]
        %v4607 = vld [vmem:[%s4593 + $0x34] sm:$0xf]
        %v4608 = vld [vmem:[%s4593 + $0x38] sm:$0xf]
        %v4609 = vld [vmem:[%s4593 + $0x3c] sm:$0xf]
        %v4610 = vunpack.c.l.b16 %v1925
        %v4611 = vunpack.c.l.b16 %v1928
        %v4612 = vunpack.c.l.b16 %v1932
        %v4613 = vunpack.c.l.b16 %v1935
        %v4614 = vunpack.c.l.b16 %v1939
        %v4615 = vunpack.c.l.b16 %v1942
        %v4616 = vunpack.c.l.b16 %v1946
        %v4617 = vunpack.c.l.b16 %v1949
        %v4618 = vunpack.c.l.b16 %v1953
        %v4619 = vunpack.c.l.b16 %v1956
        %v4620 = vunpack.c.l.b16 %v1960
        %v4621 = vunpack.c.l.b16 %v1963
        %v4622 = vunpack.c.l.b16 %v1967
        %v4623 = vunpack.c.l.b16 %v1970
        %v4624 = vunpack.c.l.b16 %v1974
        %v4625 = vunpack.c.l.b16 %v1977
        %v4626 = vunpack.c.l.b16 %v1981
        %v4627 = vunpack.c.l.b16 %v1984
        %v4628 = vunpack.c.l.b16 %v1988
        %v4629 = vunpack.c.l.b16 %v1991
        %v4630 = vunpack.c.l.b16 %v1995
        %v4631 = vunpack.c.l.b16 %v1998
        %v4632 = vunpack.c.l.b16 %v2002
        %v4633 = vunpack.c.l.b16 %v2005
        %v4634 = vunpack.c.l.b16 %v2009
        %v4635 = vunpack.c.l.b16 %v2012
        %v4636 = vunpack.c.l.b16 %v2016
        %v4637 = vunpack.c.l.b16 %v2019
        %v4638 = vunpack.c.l.b16 %v2023
        %v4639 = vunpack.c.l.b16 %v2026
        %v4640 = vunpack.c.l.b16 %v2030
        %v4641 = vunpack.c.l.b16 %v2033
        %v4642 = vpack.c.b16 %v4611, %v4610
        %v4643 = vpack.c.b16 %v4613, %v4612
        %v4644 = vpack.c.b16 %v4615, %v4614
        %v4645 = vpack.c.b16 %v4617, %v4616
        %v4646 = vpack.c.b16 %v4619, %v4618
        %v4647 = vpack.c.b16 %v4621, %v4620
        %v4648 = vpack.c.b16 %v4623, %v4622
        %v4649 = vpack.c.b16 %v4625, %v4624
        %v4650 = vpack.c.b16 %v4627, %v4626
        %v4651 = vpack.c.b16 %v4629, %v4628
        %v4652 = vpack.c.b16 %v4631, %v4630
        %v4653 = vpack.c.b16 %v4633, %v4632
        %v4654 = vpack.c.b16 %v4635, %v4634
        %v4655 = vpack.c.b16 %v4637, %v4636
        %v4656 = vpack.c.b16 %v4639, %v4638
        %v4657 = vpack.c.b16 %v4641, %v4640
        %v4690 = vunpack.c.l.b16 %v4594
        %v4691 = vunpack.c.l.b16 %v4595
        %v4692 = vunpack.c.l.b16 %v4596
        %v4693 = vunpack.c.l.b16 %v4597
        %v4694 = vunpack.c.l.b16 %v4598
        %v4695 = vunpack.c.l.b16 %v4599
        %v4696 = vunpack.c.l.b16 %v4600
        %v4697 = vunpack.c.l.b16 %v4601
        %v4698 = vunpack.c.l.b16 %v4602
        %v4699 = vunpack.c.l.b16 %v4603
        %v4700 = vunpack.c.l.b16 %v4604
        %v4701 = vunpack.c.l.b16 %v4605
        %v4702 = vunpack.c.l.b16 %v4606
        %v4703 = vunpack.c.l.b16 %v4607
        %v4704 = vunpack.c.l.b16 %v4608
        %v4705 = vunpack.c.l.b16 %v4609
        %v4706 = vpack.c.b16 %v4691, %v4690
        %v4707 = vpack.c.b16 %v4693, %v4692
        %v4708 = vpack.c.b16 %v4695, %v4694
        %v4709 = vpack.c.b16 %v4697, %v4696
        %v4710 = vpack.c.b16 %v4699, %v4698
        %v4711 = vpack.c.b16 %v4701, %v4700
        %v4712 = vpack.c.b16 %v4703, %v4702
        %v4713 = vpack.c.b16 %v4705, %v4704
        %4722 = vmatprep.subr.bf16.mxu0 0
        %4723 = vmatpush1.bf16.msra.mxu0 %v4706
        %4724 = vmatprep.subr.bf16.mxu0 0
        %4725 = vmatpush1.bf16.msra.mxu0 %v4707
        %4726 = vmatprep.subr.bf16.mxu0 0
        %4727 = vmatpush1.bf16.msra.mxu0 %v4708
        %4728 = vmatprep.subr.bf16.mxu0 0
        %4729 = vmatpush1.bf16.msra.mxu0 %v4709
        %4730 = vmatprep.subr.bf16.mxu0 0
        %4731 = vmatpush1.bf16.msra.mxu0 %v4710
        %4732 = vmatprep.subr.bf16.mxu0 0
        %4733 = vmatpush1.bf16.msra.mxu0 %v4711
        %4734 = vmatprep.subr.bf16.mxu0 0
        %4735 = vmatpush1.bf16.msra.mxu0 %v4712
        %4736 = vmatprep.subr.bf16.mxu0 0
        %4737 = vmatpush1.bf16.msra.mxu0 %v4713
        %4738 = vmatprep.subr.bf16.mxu0 0
        %4739 = vmatpush1.bf16.msra.mxu0 0
        %4740 = vmatprep.subr.bf16.mxu0 0
        %4741 = vmatpush1.bf16.msra.mxu0 0
        %4742 = vmatprep.subr.bf16.mxu0 0
        %4743 = vmatpush1.bf16.msra.mxu0 0
        %4744 = vmatprep.subr.bf16.mxu0 0
        %4745 = vmatpush1.bf16.msra.mxu0 0
        %4746 = vmatprep.subr.bf16.mxu0 0
        %4747 = vmatpush1.bf16.msra.mxu0 0
        %4748 = vmatprep.subr.bf16.mxu0 0
        %4749 = vmatpush1.bf16.msra.mxu0 0
        %4750 = vmatprep.subr.bf16.mxu0 0
        %4751 = vmatpush1.bf16.msra.mxu0 0
        %4752 = vmatprep.subr.bf16.mxu0 0
        %4753 = vmatpush1.bf16.msra.mxu0 0
        %4754 = vmatprep.mubr.bf16.mxu0 0
        %4755 = vmatmul.mubr.bf16.gmra.mrb[0].mxu0 %v4642
        %v4756 = vpop.f32.mrb[0].mxu0
        %v4757 = vadd.f32 0.0, %v4756
        %v4758 = vpop.f32.mrb[0].mxu0
        %v4759 = vpop.f32.mrb[0].mxu0
        %v4760 = vadd.f32 0.0, %v4759
        %v4761 = vpop.f32.mrb[0].mxu0
        %4762 = vmatprep.mubr.bf16.mxu0 0
        %4763 = vmatmul.mubr.bf16.gmra.mrb[0].mxu0 %v4643
        %v4764 = vpop.f32.mrb[0].mxu0
        %v4765 = vadd.f32 0.0, %v4764
        %v4766 = vpop.f32.mrb[0].mxu0
        %v4767 = vpop.f32.mrb[0].mxu0
        %v4768 = vadd.f32 0.0, %v4767
        %v4769 = vpop.f32.mrb[0].mxu0
        %4770 = vmatprep.mubr.bf16.mxu0 0
        %4771 = vmatmul.mubr.bf16.gmra.mrb[0].mxu0 %v4644
        %v4772 = vpop.f32.mrb[0].mxu0
        %v4773 = vadd.f32 0.0, %v4772
        %v4774 = vpop.f32.mrb[0].mxu0
        %v4775 = vpop.f32.mrb[0].mxu0
        %v4776 = vadd.f32 0.0, %v4775
        %v4777 = vpop.f32.mrb[0].mxu0
        %4778 = vmatprep.mubr.bf16.mxu0 0
        %4779 = vmatmul.mubr.bf16.gmra.mrb[0].mxu0 %v4645
        %v4780 = vpop.f32.mrb[0].mxu0
        %v4781 = vadd.f32 0.0, %v4780
        %v4782 = vpop.f32.mrb[0].mxu0
        %v4783 = vpop.f32.mrb[0].mxu0
        %v4784 = vadd.f32 0.0, %v4783
        %v4785 = vpop.f32.mrb[0].mxu0
        %4786 = vmatprep.mubr.bf16.mxu0 0
        %4787 = vmatmul.mubr.bf16.gmra.mrb[0].mxu0 %v4646
        %v4788 = vpop.f32.mrb[0].mxu0
        %v4789 = vadd.f32 0.0, %v4788
        %v4790 = vpop.f32.mrb[0].mxu0
        %v4791 = vpop.f32.mrb[0].mxu0
        %v4792 = vadd.f32 0.0, %v4791
        %v4793 = vpop.f32.mrb[0].mxu0
        %4794 = vmatprep.mubr.bf16.mxu0 0
        %4795 = vmatmul.mubr.bf16.gmra.mrb[0].mxu0 %v4647
        %v4796 = vpop.f32.mrb[0].mxu0
        %v4797 = vadd.f32 0.0, %v4796
        %v4798 = vpop.f32.mrb[0].mxu0
        %v4799 = vpop.f32.mrb[0].mxu0
        %v4800 = vadd.f32 0.0, %v4799
        %v4801 = vpop.f32.mrb[0].mxu0
        %4802 = vmatprep.mubr.bf16.mxu0 0
        %4803 = vmatmul.mubr.bf16.gmra.mrb[0].mxu0 %v4648
        %v4804 = vpop.f32.mrb[0].mxu0
        %v4805 = vadd.f32 0.0, %v4804
        %v4806 = vpop.f32.mrb[0].mxu0
        %v4807 = vpop.f32.mrb[0].mxu0
        %v4808 = vadd.f32 0.0, %v4807
        %v4809 = vpop.f32.mrb[0].mxu0
        %4810 = vmatprep.mubr.bf16.mxu0 0
        %4811 = vmatmul.mubr.bf16.gmra.mrb[0].mxu0 %v4649
        %v4812 = vpop.f32.mrb[0].mxu0
        %v4813 = vadd.f32 0.0, %v4812
        %v4814 = vpop.f32.mrb[0].mxu0
        %v4815 = vpop.f32.mrb[0].mxu0
        %v4816 = vadd.f32 0.0, %v4815
        %v4817 = vpop.f32.mrb[0].mxu0
        %4818 = vmatprep.mubr.bf16.mxu0 0
        %4819 = vmatmul.mubr.bf16.gmra.mrb[0].mxu0 %v4650
        %v4820 = vpop.f32.mrb[0].mxu0
        %v4821 = vadd.f32 0.0, %v4820
        %v4822 = vpop.f32.mrb[0].mxu0
        %v4823 = vpop.f32.mrb[0].mxu0
        %v4824 = vadd.f32 0.0, %v4823
        %v4825 = vpop.f32.mrb[0].mxu0
        %4826 = vmatprep.mubr.bf16.mxu0 0
        %4827 = vmatmul.mubr.bf16.gmra.mrb[0].mxu0 %v4651
        %v4828 = vpop.f32.mrb[0].mxu0
        %v4829 = vadd.f32 0.0, %v4828
        %v4830 = vpop.f32.mrb[0].mxu0
        %v4831 = vpop.f32.mrb[0].mxu0
        %v4832 = vadd.f32 0.0, %v4831
        %v4833 = vpop.f32.mrb[0].mxu0
        %4834 = vmatprep.mubr.bf16.mxu0 0
        %4835 = vmatmul.mubr.bf16.gmra.mrb[0].mxu0 %v4652
        %v4836 = vpop.f32.mrb[0].mxu0
        %v4837 = vadd.f32 0.0, %v4836
        %v4838 = vpop.f32.mrb[0].mxu0
        %v4839 = vpop.f32.mrb[0].mxu0
        %v4840 = vadd.f32 0.0, %v4839
        %v4841 = vpop.f32.mrb[0].mxu0
        %4842 = vmatprep.mubr.bf16.mxu0 0
        %4843 = vmatmul.mubr.bf16.gmra.mrb[0].mxu0 %v4653
        %v4844 = vpop.f32.mrb[0].mxu0
        %v4845 = vadd.f32 0.0, %v4844
        %v4846 = vpop.f32.mrb[0].mxu0
        %v4847 = vpop.f32.mrb[0].mxu0
        %v4848 = vadd.f32 0.0, %v4847
        %v4849 = vpop.f32.mrb[0].mxu0
        %4850 = vmatprep.mubr.bf16.mxu0 0
        %4851 = vmatmul.mubr.bf16.gmra.mrb[0].mxu0 %v4654
        %v4852 = vpop.f32.mrb[0].mxu0
        %v4853 = vadd.f32 0.0, %v4852
        %v4854 = vpop.f32.mrb[0].mxu0
        %v4855 = vpop.f32.mrb[0].mxu0
        %v4856 = vadd.f32 0.0, %v4855
        %v4857 = vpop.f32.mrb[0].mxu0
        %4858 = vmatprep.mubr.bf16.mxu0 0
        %4859 = vmatmul.mubr.bf16.gmra.mrb[0].mxu0 %v4655
        %v4860 = vpop.f32.mrb[0].mxu0
        %v4861 = vadd.f32 0.0, %v4860
        %v4862 = vpop.f32.mrb[0].mxu0
        %v4863 = vpop.f32.mrb[0].mxu0
        %v4864 = vadd.f32 0.0, %v4863
        %v4865 = vpop.f32.mrb[0].mxu0
        %4866 = vmatprep.mubr.bf16.mxu0 0
        %4867 = vmatmul.mubr.bf16.gmra.mrb[0].mxu0 %v4656
        %v4868 = vpop.f32.mrb[0].mxu0
        %v4869 = vadd.f32 0.0, %v4868
        %v4870 = vpop.f32.mrb[0].mxu0
        %v4871 = vpop.f32.mrb[0].mxu0
        %v4872 = vadd.f32 0.0, %v4871
        %v4873 = vpop.f32.mrb[0].mxu0
        %4874 = vmatprep.mubr.bf16.mxu0 0
        %4875 = vmatmul.mubr.bf16.gmra.mrb[0].mxu0 %v4657
        %v4876 = vpop.f32.mrb[0].mxu0
        %v4877 = vadd.f32 0.0, %v4876
        %v4878 = vpop.f32.mrb[0].mxu0
        %v4879 = vpop.f32.mrb[0].mxu0
        %v4880 = vadd.f32 0.0, %v4879
        %v4881 = vpop.f32.mrb[0].mxu0
        %4882 = vdwg.mxu0
        %v4883 = vadd.f32 %v4561, %v4757
        %v4884 = vadd.f32 %v4562, %v4760
        %v4885 = vadd.f32 %v4563, %v4765
        %v4886 = vadd.f32 %v4564, %v4768
        %v4887 = vadd.f32 %v4565, %v4773
        %v4888 = vadd.f32 %v4566, %v4776
        %v4889 = vadd.f32 %v4567, %v4781
        %v4890 = vadd.f32 %v4568, %v4784
        %v4891 = vadd.f32 %v4569, %v4789
        %v4892 = vadd.f32 %v4570, %v4792
        %v4893 = vadd.f32 %v4571, %v4797
        %v4894 = vadd.f32 %v4572, %v4800
        %v4895 = vadd.f32 %v4573, %v4805
        %v4896 = vadd.f32 %v4574, %v4808
        %v4897 = vadd.f32 %v4575, %v4813
        %v4898 = vadd.f32 %v4576, %v4816
        %v4899 = vadd.f32 %v4577, %v4821
        %v4900 = vadd.f32 %v4578, %v4824
        %v4901 = vadd.f32 %v4579, %v4829
        %v4902 = vadd.f32 %v4580, %v4832
        %v4903 = vadd.f32 %v4581, %v4837
        %v4904 = vadd.f32 %v4582, %v4840
        %v4905 = vadd.f32 %v4583, %v4845
        %v4906 = vadd.f32 %v4584, %v4848
        %v4907 = vadd.f32 %v4585, %v4853
        %v4908 = vadd.f32 %v4586, %v4856
        %v4909 = vadd.f32 %v4587, %v4861
        %v4910 = vadd.f32 %v4588, %v4864
        %v4911 = vadd.f32 %v4589, %v4869
        %v4912 = vadd.f32 %v4590, %v4872
        %v4913 = vadd.f32 %v4591, %v4877
        %v4914 = vadd.f32 %v4592, %v4880
        %v4915 = vld [vmem:[%s2] sm:$0x1]
        %v4916 = vlaneseq
        %v4917 = vshrl.u32 %v4916, 7
        %v4918 = vsub.s32 0, %v4917
        %v4919 = vrot.slane %v4915, %v4918
        %v4920 = vmul.f32 %v4883, %v4919
        %v4921 = vmul.f32 %v4884, %v4919
        %v4922 = vmul.f32 %v4885, %v4919
        %v4923 = vmul.f32 %v4886, %v4919
        %v4924 = vmul.f32 %v4887, %v4919
        %v4925 = vmul.f32 %v4888, %v4919
        %v4926 = vmul.f32 %v4889, %v4919
        %v4927 = vmul.f32 %v4890, %v4919
        %v4928 = vmul.f32 %v4891, %v4919
        %v4929 = vmul.f32 %v4892, %v4919
        %v4930 = vmul.f32 %v4893, %v4919
        %v4931 = vmul.f32 %v4894, %v4919
        %v4932 = vmul.f32 %v4895, %v4919
        %v4933 = vmul.f32 %v4896, %v4919
        %v4934 = vmul.f32 %v4897, %v4919
        %v4935 = vmul.f32 %v4898, %v4919
        %v4936 = vmul.f32 %v4899, %v4919
        %v4937 = vmul.f32 %v4900, %v4919
        %v4938 = vmul.f32 %v4901, %v4919
        %v4939 = vmul.f32 %v4902, %v4919
        %v4940 = vmul.f32 %v4903, %v4919
        %v4941 = vmul.f32 %v4904, %v4919
        %v4942 = vmul.f32 %v4905, %v4919
        %v4943 = vmul.f32 %v4906, %v4919
        %v4944 = vmul.f32 %v4907, %v4919
        %v4945 = vmul.f32 %v4908, %v4919
        %v4946 = vmul.f32 %v4909, %v4919
        %v4947 = vmul.f32 %v4910, %v4919
        %v4948 = vmul.f32 %v4911, %v4919
        %v4949 = vmul.f32 %v4912, %v4919
        %v4950 = vmul.f32 %v4913, %v4919
        %v4951 = vmul.f32 %v4914, %v4919
        %v4952 = vld [vmem:[%s2 + $0x1] sm:$0x1]
        %v4953 = vlaneseq
        %v4954 = vshrl.u32 %v4953, 7
        %v4955 = vsub.s32 0, %v4954
        %v4956 = vrot.slane %v4952, %v4955
        %v4957 = vadd.f32 %v4920, %v4956
        %v4958 = vadd.f32 %v4921, %v4956
        %v4959 = vadd.f32 %v4922, %v4956
        %v4960 = vadd.f32 %v4923, %v4956
        %v4961 = vadd.f32 %v4924, %v4956
        %v4962 = vadd.f32 %v4925, %v4956
        %v4963 = vadd.f32 %v4926, %v4956
        %v4964 = vadd.f32 %v4927, %v4956
        %v4965 = vadd.f32 %v4928, %v4956
        %v4966 = vadd.f32 %v4929, %v4956
        %v4967 = vadd.f32 %v4930, %v4956
        %v4968 = vadd.f32 %v4931, %v4956
        %v4969 = vadd.f32 %v4932, %v4956
        %v4970 = vadd.f32 %v4933, %v4956
        %v4971 = vadd.f32 %v4934, %v4956
        %v4972 = vadd.f32 %v4935, %v4956
        %v4973 = vadd.f32 %v4936, %v4956
        %v4974 = vadd.f32 %v4937, %v4956
        %v4975 = vadd.f32 %v4938, %v4956
        %v4976 = vadd.f32 %v4939, %v4956
        %v4977 = vadd.f32 %v4940, %v4956
        %v4978 = vadd.f32 %v4941, %v4956
        %v4979 = vadd.f32 %v4942, %v4956
        %v4980 = vadd.f32 %v4943, %v4956
        %v4981 = vadd.f32 %v4944, %v4956
        %v4982 = vadd.f32 %v4945, %v4956
        %v4983 = vadd.f32 %v4946, %v4956
        %v4984 = vadd.f32 %v4947, %v4956
        %v4985 = vadd.f32 %v4948, %v4956
        %v4986 = vadd.f32 %v4949, %v4956
        %v4987 = vadd.f32 %v4950, %v4956
        %v4988 = vadd.f32 %v4951, %v4956
        %v4989 = vmax.f32 %v4957, 0.0
        %v4990 = vmax.f32 %v4958, 0.0
        %v4991 = vmax.f32 %v4959, 0.0
        %v4992 = vmax.f32 %v4960, 0.0
        %v4993 = vmax.f32 %v4961, 0.0
        %v4994 = vmax.f32 %v4962, 0.0
        %v4995 = vmax.f32 %v4963, 0.0
        %v4996 = vmax.f32 %v4964, 0.0
        %v4997 = vmax.f32 %v4965, 0.0
        %v4998 = vmax.f32 %v4966, 0.0
        %v4999 = vmax.f32 %v4967, 0.0
        %v5000 = vmax.f32 %v4968, 0.0
        %v5001 = vmax.f32 %v4969, 0.0
        %v5002 = vmax.f32 %v4970, 0.0
        %v5003 = vmax.f32 %v4971, 0.0
        %v5004 = vmax.f32 %v4972, 0.0
        %v5005 = vmax.f32 %v4973, 0.0
        %v5006 = vmax.f32 %v4974, 0.0
        %v5007 = vmax.f32 %v4975, 0.0
        %v5008 = vmax.f32 %v4976, 0.0
        %v5009 = vmax.f32 %v4977, 0.0
        %v5010 = vmax.f32 %v4978, 0.0
        %v5011 = vmax.f32 %v4979, 0.0
        %v5012 = vmax.f32 %v4980, 0.0
        %v5013 = vmax.f32 %v4981, 0.0
        %v5014 = vmax.f32 %v4982, 0.0
        %v5015 = vmax.f32 %v4983, 0.0
        %v5016 = vmax.f32 %v4984, 0.0
        %v5017 = vmax.f32 %v4985, 0.0
        %v5018 = vmax.f32 %v4986, 0.0
        %v5019 = vmax.f32 %v4987, 0.0
        %v5020 = vmax.f32 %v4988, 0.0
        %v5021 = vunpack.c.l.bf16 %v846
        %v5022 = vunpack.c.l.bf16 %v856
        %v5023 = vunpack.c.l.bf16 %v870
        %v5024 = vunpack.c.l.bf16 %v880
        %v5025 = vunpack.c.l.bf16 %v894
        %v5026 = vunpack.c.l.bf16 %v904
        %v5027 = vunpack.c.l.bf16 %v918
        %v5028 = vunpack.c.l.bf16 %v928
        %v5029 = vunpack.c.l.bf16 %v942
        %v5030 = vunpack.c.l.bf16 %v952
        %v5031 = vunpack.c.l.bf16 %v966
        %v5032 = vunpack.c.l.bf16 %v976
        %v5033 = vunpack.c.l.bf16 %v990
        %v5034 = vunpack.c.l.bf16 %v1000
        %v5035 = vunpack.c.l.bf16 %v1014
        %v5036 = vunpack.c.l.bf16 %v1024
        %v5037 = vunpack.c.l.bf16 %v1038
        %v5038 = vunpack.c.l.bf16 %v1048
        %v5039 = vunpack.c.l.bf16 %v1062
        %v5040 = vunpack.c.l.bf16 %v1072
        %v5041 = vunpack.c.l.bf16 %v1086
        %v5042 = vunpack.c.l.bf16 %v1096
        %v5043 = vunpack.c.l.bf16 %v1110
        %v5044 = vunpack.c.l.bf16 %v1120
        %v5045 = vunpack.c.l.bf16 %v1134
        %v5046 = vunpack.c.l.bf16 %v1144
        %v5047 = vunpack.c.l.bf16 %v1158
        %v5048 = vunpack.c.l.bf16 %v1168
        %v5049 = vunpack.c.l.bf16 %v1182
        %v5050 = vunpack.c.l.bf16 %v1192
        %v5051 = vunpack.c.l.bf16 %v1206
        %v5052 = vunpack.c.l.bf16 %v1216
        %v5053 = vld [vmem:[%s2 + $0x2] sm:$0x1]
        %v5054 = vlaneseq
        %v5055 = vshrl.u32 %v5054, 7
        %v5056 = vsub.s32 0, %v5055
        %v5057 = vrot.slane %v5053, %v5056
        %v5058 = vmul.f32 %v5021, %v5057
        %v5059 = vmul.f32 %v5022, %v5057
        %v5060 = vmul.f32 %v5023, %v5057
        %v5061 = vmul.f32 %v5024, %v5057
        %v5062 = vmul.f32 %v5025, %v5057
        %v5063 = vmul.f32 %v5026, %v5057
        %v5064 = vmul.f32 %v5027, %v5057
        %v5065 = vmul.f32 %v5028, %v5057
        %v5066 = vmul.f32 %v5029, %v5057
        %v5067 = vmul.f32 %v5030, %v5057
        %v5068 = vmul.f32 %v5031, %v5057
        %v5069 = vmul.f32 %v5032, %v5057
        %v5070 = vmul.f32 %v5033, %v5057
        %v5071 = vmul.f32 %v5034, %v5057
        %v5072 = vmul.f32 %v5035, %v5057
        %v5073 = vmul.f32 %v5036, %v5057
        %v5074 = vmul.f32 %v5037, %v5057
        %v5075 = vmul.f32 %v5038, %v5057
        %v5076 = vmul.f32 %v5039, %v5057
        %v5077 = vmul.f32 %v5040, %v5057
        %v5078 = vmul.f32 %v5041, %v5057
        %v5079 = vmul.f32 %v5042, %v5057
        %v5080 = vmul.f32 %v5043, %v5057
        %v5081 = vmul.f32 %v5044, %v5057
        %v5082 = vmul.f32 %v5045, %v5057
        %v5083 = vmul.f32 %v5046, %v5057
        %v5084 = vmul.f32 %v5047, %v5057
        %v5085 = vmul.f32 %v5048, %v5057
        %v5086 = vmul.f32 %v5049, %v5057
        %v5087 = vmul.f32 %v5050, %v5057
        %v5088 = vmul.f32 %v5051, %v5057
        %v5089 = vmul.f32 %v5052, %v5057
        %v5090 = vadd.f32 %v4989, %v5058
        %v5091 = vadd.f32 %v4990, %v5059
        %v5092 = vadd.f32 %v4991, %v5060
        %v5093 = vadd.f32 %v4992, %v5061
        %v5094 = vadd.f32 %v4993, %v5062
        %v5095 = vadd.f32 %v4994, %v5063
        %v5096 = vadd.f32 %v4995, %v5064
        %v5097 = vadd.f32 %v4996, %v5065
        %v5098 = vadd.f32 %v4997, %v5066
        %v5099 = vadd.f32 %v4998, %v5067
        %v5100 = vadd.f32 %v4999, %v5068
        %v5101 = vadd.f32 %v5000, %v5069
        %v5102 = vadd.f32 %v5001, %v5070
        %v5103 = vadd.f32 %v5002, %v5071
        %v5104 = vadd.f32 %v5003, %v5072
        %v5105 = vadd.f32 %v5004, %v5073
        %v5106 = vadd.f32 %v5005, %v5074
        %v5107 = vadd.f32 %v5006, %v5075
        %v5108 = vadd.f32 %v5007, %v5076
        %v5109 = vadd.f32 %v5008, %v5077
        %v5110 = vadd.f32 %v5009, %v5078
        %v5111 = vadd.f32 %v5010, %v5079
        %v5112 = vadd.f32 %v5011, %v5080
        %v5113 = vadd.f32 %v5012, %v5081
        %v5114 = vadd.f32 %v5013, %v5082
        %v5115 = vadd.f32 %v5014, %v5083
        %v5116 = vadd.f32 %v5015, %v5084
        %v5117 = vadd.f32 %v5016, %v5085
        %v5118 = vadd.f32 %v5017, %v5086
        %v5119 = vadd.f32 %v5018, %v5087
        %v5120 = vadd.f32 %v5019, %v5088
        %v5121 = vadd.f32 %v5020, %v5089
        %v5122 = vld [vmem:[%s2 + $0x3] sm:$0x1]
        %v5123 = vlaneseq
        %v5124 = vshrl.u32 %v5123, 7
        %v5125 = vsub.s32 0, %v5124
        %v5126 = vrot.slane %v5122, %v5125
        %v5127 = vadd.f32 %v5090, %v5126
        %v5128 = vadd.f32 %v5091, %v5126
        %v5129 = vadd.f32 %v5092, %v5126
        %v5130 = vadd.f32 %v5093, %v5126
        %v5131 = vadd.f32 %v5094, %v5126
        %v5132 = vadd.f32 %v5095, %v5126
        %v5133 = vadd.f32 %v5096, %v5126
        %v5134 = vadd.f32 %v5097, %v5126
        %v5135 = vadd.f32 %v5098, %v5126
        %v5136 = vadd.f32 %v5099, %v5126
        %v5137 = vadd.f32 %v5100, %v5126
        %v5138 = vadd.f32 %v5101, %v5126
        %v5139 = vadd.f32 %v5102, %v5126
        %v5140 = vadd.f32 %v5103, %v5126
        %v5141 = vadd.f32 %v5104, %v5126
        %v5142 = vadd.f32 %v5105, %v5126
        %v5143 = vadd.f32 %v5106, %v5126
        %v5144 = vadd.f32 %v5107, %v5126
        %v5145 = vadd.f32 %v5108, %v5126
        %v5146 = vadd.f32 %v5109, %v5126
        %v5147 = vadd.f32 %v5110, %v5126
        %v5148 = vadd.f32 %v5111, %v5126
        %v5149 = vadd.f32 %v5112, %v5126
        %v5150 = vadd.f32 %v5113, %v5126
        %v5151 = vadd.f32 %v5114, %v5126
        %v5152 = vadd.f32 %v5115, %v5126
        %v5153 = vadd.f32 %v5116, %v5126
        %v5154 = vadd.f32 %v5117, %v5126
        %v5155 = vadd.f32 %v5118, %v5126
        %v5156 = vadd.f32 %v5119, %v5126
        %v5157 = vadd.f32 %v5120, %v5126
        %v5158 = vadd.f32 %v5121, %v5126
        %v5159 = vmax.f32 %v5127, 0.0
        %v5160 = vmax.f32 %v5128, 0.0
        %v5161 = vmax.f32 %v5129, 0.0
        %v5162 = vmax.f32 %v5130, 0.0
        %v5163 = vmax.f32 %v5131, 0.0
        %v5164 = vmax.f32 %v5132, 0.0
        %v5165 = vmax.f32 %v5133, 0.0
        %v5166 = vmax.f32 %v5134, 0.0
        %v5167 = vmax.f32 %v5135, 0.0
        %v5168 = vmax.f32 %v5136, 0.0
        %v5169 = vmax.f32 %v5137, 0.0
        %v5170 = vmax.f32 %v5138, 0.0
        %v5171 = vmax.f32 %v5139, 0.0
        %v5172 = vmax.f32 %v5140, 0.0
        %v5173 = vmax.f32 %v5141, 0.0
        %v5174 = vmax.f32 %v5142, 0.0
        %v5175 = vmax.f32 %v5143, 0.0
        %v5176 = vmax.f32 %v5144, 0.0
        %v5177 = vmax.f32 %v5145, 0.0
        %v5178 = vmax.f32 %v5146, 0.0
        %v5179 = vmax.f32 %v5147, 0.0
        %v5180 = vmax.f32 %v5148, 0.0
        %v5181 = vmax.f32 %v5149, 0.0
        %v5182 = vmax.f32 %v5150, 0.0
        %v5183 = vmax.f32 %v5151, 0.0
        %v5184 = vmax.f32 %v5152, 0.0
        %v5185 = vmax.f32 %v5153, 0.0
        %v5186 = vmax.f32 %v5154, 0.0
        %v5187 = vmax.f32 %v5155, 0.0
        %v5188 = vmax.f32 %v5156, 0.0
        %v5189 = vmax.f32 %v5157, 0.0
        %v5190 = vmax.f32 %v5158, 0.0
        %5191 = vst [vmem:[%s163] sm:$0xff] %v5159
        %5192 = vst [vmem:[%s163 + $0x8] sm:$0xff] %v5160
        %5193 = vst [vmem:[%s163 + $0x10] sm:$0xff] %v5161
        %5194 = vst [vmem:[%s163 + $0x18] sm:$0xff] %v5162
        %5195 = vst [vmem:[%s163 + $0x20] sm:$0xff] %v5163
        %5196 = vst [vmem:[%s163 + $0x28] sm:$0xff] %v5164
        %5197 = vst [vmem:[%s163 + $0x30] sm:$0xff] %v5165
        %5198 = vst [vmem:[%s163 + $0x38] sm:$0xff] %v5166
        %5199 = vst [vmem:[%s163 + $0x40] sm:$0xff] %v5167
        %5200 = vst [vmem:[%s163 + $0x48] sm:$0xff] %v5168
        %5201 = vst [vmem:[%s163 + $0x50] sm:$0xff] %v5169
        %5202 = vst [vmem:[%s163 + $0x58] sm:$0xff] %v5170
        %5203 = vst [vmem:[%s163 + $0x60] sm:$0xff] %v5171
        %5204 = vst [vmem:[%s163 + $0x68] sm:$0xff] %v5172
        %5205 = vst [vmem:[%s163 + $0x70] sm:$0xff] %v5173
        %5206 = vst [vmem:[%s163 + $0x78] sm:$0xff] %v5174
        %5207 = vst [vmem:[%s163 + $0x80] sm:$0xff] %v5175
        %5208 = vst [vmem:[%s163 + $0x88] sm:$0xff] %v5176
        %5209 = vst [vmem:[%s163 + $0x90] sm:$0xff] %v5177
        %5210 = vst [vmem:[%s163 + $0x98] sm:$0xff] %v5178
        %5211 = vst [vmem:[%s163 + $0xa0] sm:$0xff] %v5179
        %5212 = vst [vmem:[%s163 + $0xa8] sm:$0xff] %v5180
        %5213 = vst [vmem:[%s163 + $0xb0] sm:$0xff] %v5181
        %5214 = vst [vmem:[%s163 + $0xb8] sm:$0xff] %v5182
        %5215 = vst [vmem:[%s163 + $0xc0] sm:$0xff] %v5183
        %5216 = vst [vmem:[%s163 + $0xc8] sm:$0xff] %v5184
        %5217 = vst [vmem:[%s163 + $0xd0] sm:$0xff] %v5185
        %5218 = vst [vmem:[%s163 + $0xd8] sm:$0xff] %v5186
        %5219 = vst [vmem:[%s163 + $0xe0] sm:$0xff] %v5187
        %5220 = vst [vmem:[%s163 + $0xe8] sm:$0xff] %v5188
        %5221 = vst [vmem:[%s163 + $0xf0] sm:$0xff] %v5189
        %5222 = vst [vmem:[%s163 + $0xf8] sm:$0xff] %v5190
        %s5223 = sand.u32 %s93, 1
        %s5224 = scalar_lea.sflag [#allocation3], %s5223
        %s5225 = sand.u32 %s93, 1
        %s5226 = smul.addr %s5225, 256
        %s5227 = scalar_lea.vmem [#allocation2], %s5226
        // Predicated region
        $region33: #{tpu_custom_call.1} parent=31 // pred_check
          %p5228 = pneg %p103
        $region34: #{tpu_custom_call.1} parent=31 // pred_check_branch
          %5230 = sbr.rel (%p5228) target = $region36
        $region35: #{tpu_custom_call.1} parent=31 // pred_region
          %s5232 = ssub.s32 4096, 4096
          %5233 = vsyncadd %s5224, %s5232
          %s5234 = smul.addr %s17, 32
          %s5235 = smul.addr %s5234, 128
          %s5236 = scalar_lea.hbm %s3, %s5235
          %s5237 = sshll.u32 %s5227, 4
          %s5238 = int_to_ptr.vmem [resolvable:$true] %s5237
          %5243 = dma.vmem_to_hbm [thread:$0]  %s5238, 4096, %s5236, %s5224, 128, 128, 8
        $region36: #{tpu_custom_call.1} parent=31 // pred_fallthru
          _
      $region32: #{tpu_custom_call.1} parent=5 // pred_fallthru
        _
      %p5244 = scmp.le.s32.totalorder 2, %s12
      // Predicated region
      $region37: #{tpu_custom_call.1} parent=5 // pred_check
        %p5245 = pneg %p5244
      $region38: #{tpu_custom_call.1} parent=5 // pred_check_branch
        %5247 = sbr.rel (%p5245) target = $region40
      $region39: #{tpu_custom_call.1} parent=5 // pred_region
        %s5248 = ssub.s32 %s12, 2
        // Predicated region
        $region41: #{tpu_custom_call.1} parent=39 // pred_check
          %p5249 = pneg %p109
        $region42: #{tpu_custom_call.1} parent=39 // pred_check_branch
          %5251 = sbr.rel (%p5249) target = $region44
        $region43: #{tpu_custom_call.1} parent=39 // pred_region
          %s5252 = sand.u32 %s94, 1
          %s5253 = scalar_lea.sflag [#allocation3], %s5252
          %s5254 = sand.u32 %s94, 1
          %s5255 = smul.addr %s5254, 256
          %s5256 = scalar_lea.vmem [#allocation2], %s5255
          %5257 = dma.done %s5253, 4096
        $region44: #{tpu_custom_call.1} parent=39 // pred_fallthru
          _
      $region40: #{tpu_custom_call.1} parent=5 // pred_fallthru
        _
    $region6: #{tpu_custom_call.1} parent=1 // loop_footer
      %s16 = sadd.s32 1, %s12
    $region7: #{tpu_custom_call.1} parent=1 // loop_footer_branch
      %11 = sbr.rel target = $region3
    $region8: #{tpu_custom_call.1} parent=1 // loop_exit
      _
    %5258 = vsyncpa [#allocation3], 1
    %s5259 = scalar_lea.sflag [#allocation3], 1
    %5260 = vsyncpa %s5259, 1

</llo_original>
